<compile_context>
chip_gen: v5e
topology: v5e:2x2
jax: 0.10.0
libtpu: 0.0.40
codegen_flags: <defaults>
</compile_context>

<pallas_src>
import functools

import jax
import jax.numpy as jnp
from jax.experimental import pallas as pl
from jax.experimental.pallas import tpu as pltpu

# ------------------------- config (small synthetic Hubert) -------------------------
C = 16                      # conv feature dim
H = 32                      # hidden size
NH = 2                      # attention heads
HD = H // NH                # head dim
FFN = 64                    # feed-forward dim
NLAYERS = 2                 # transformer layers
CONV_SPECS = [(10, 5, 1, C), (3, 2, C, C), (2, 2, C, C)]   # (kernel, stride, cin, cout)
POS_K = 4                   # positional conv kernel (even -> SamePad drops last frame)
POS_GROUPS = 2              # positional conv groups
BATCH = 2
T_WAVE = 320                # raw waveform samples -> 15 output frames

LN_EPS = 1e-5
WAVE_EPS = 1e-7
_POS_BASE = 8               # sublane-aligned row where h is written in the pos-conv pad scratch


# ------------------------------ elementwise helpers -------------------------------
def _gelu(x):
    # tanh-approximate GELU (see TODO above)
    c = 0.7978845608028654  # sqrt(2/pi)
    return 0.5 * x * (1.0 + jnp.tanh(c * (x + 0.044715 * x * x * x)))


def _layernorm(x, g, b):
    mu = jnp.mean(x, axis=-1, keepdims=True)
    var = jnp.mean((x - mu) ** 2, axis=-1, keepdims=True)
    return (x - mu) * jax.lax.rsqrt(var + LN_EPS) * g + b


def _frame_lengths(T):
    """Conv feature-encoder output lengths for each conv layer."""
    lens = []
    L = T
    for (k, s, _, _) in CONV_SPECS:
        L = (L - k) // s + 1
        lens.append(L)
    return lens


# --------------------------- the single fused forward kernel -----------------------
def _cnhubert_kernel(xb_ref, c1w_ref, c2w_ref, c3w_ref, gng_ref, gnb_ref,
                     fplg_ref, fplb_ref, fpw_ref, fpb_ref,
                     posw_ref, posb_ref, encg_ref, encb_ref,
                     wqkv_ref, bqkv_ref, wo_ref, bo_ref,
                     ln1g_ref, ln1b_ref, w1_ref, b1_ref, w2_ref, b2_ref,
                     ln2g_ref, ln2b_ref,
                     o_ref,
                     c1_scr, c2_scr, pos_scr,
                     *, l1, l2, l3):
    # ---------------- conv layer 1: wave-norm + conv + GroupNorm + GELU ----------------
    x = xb_ref[0]                                           # (T//s0, s0) stride-blocked wave
    # Wav2Vec2FeatureExtractor: per-utterance zero-mean / unit-variance over all T samples
    mu = jnp.mean(x)
    var = jnp.mean((x - mu) ** 2)
    x = (x - mu) * jax.lax.rsqrt(var + WAVE_EPS)

    acc = jnp.zeros((l1, C), jnp.float32)
    for q in range(c1w_ref.shape[0]):                       # K/stride shifted matmuls
        acc = acc + jnp.dot(x[q:q + l1, :], c1w_ref[q],
                            preferred_element_type=jnp.float32)
    # GroupNorm(num_groups == channels): per-channel normalization over time
    mu = jnp.mean(acc, axis=0, keepdims=True)
    var = jnp.mean((acc - mu) ** 2, axis=0, keepdims=True)
    h1 = (acc - mu) * jax.lax.rsqrt(var + LN_EPS) * gng_ref[...] + gnb_ref[...]
    c1_scr[...] = _gelu(h1)                                 # (l1, C) stays in VMEM

    # ---------------- conv layer 2 (stride 2): strided-tap reads + GELU ----------------
    acc = jnp.zeros((l2, C), jnp.float32)
    for j in range(c2w_ref.shape[0]):
        acc = acc + jnp.dot(c1_scr[pl.ds(j, l2, stride=2), :], c2w_ref[j],
                            preferred_element_type=jnp.float32)
    c2_scr[...] = _gelu(acc)                                # (l2, C) stays in VMEM

    # ---------------- conv layer 3 (stride 2): strided-tap reads + GELU ----------------
    acc = jnp.zeros((l3, C), jnp.float32)
    for j in range(c3w_ref.shape[0]):
        acc = acc + jnp.dot(c2_scr[pl.ds(j, l3, stride=2), :], c3w_ref[j],
                            preferred_element_type=jnp.float32)
    h = _gelu(acc)                                          # (l3, C)

    # ---------------- feature projection: LayerNorm + Linear ---------------------------
    hn = _layernorm(h, fplg_ref[...], fplb_ref[...])
    h = jnp.dot(hn, fpw_ref[...], preferred_element_type=jnp.float32) + fpb_ref[...]  # (l3, H)

    # -------- positional conv (SamePad) + GELU + residual + encoder LayerNorm ----------
    pad = POS_K // 2
    pos_scr[...] = jnp.zeros(pos_scr.shape, jnp.float32)    # zero pad rows (tiny buffer)
    pos_scr[_POS_BASE:_POS_BASE + l3, :] = h                # sublane-aligned store of h
    acc = jnp.zeros((l3, H), jnp.float32)
    base = _POS_BASE - pad
    for k in range(POS_K):                                  # first l3 frames == SamePad output
        acc = acc + jnp.dot(pos_scr[base + k:base + k + l3, :], posw_ref[k],
                            preferred_element_type=jnp.float32)
    h = h + _gelu(acc + posb_ref[...])
    h = _layernorm(h, encg_ref[...], encb_ref[...])

    # ---------------- transformer encoder layers (post-LN) -----------------------------
    scale = 1.0 / (HD ** 0.5)
    for li in range(NLAYERS):
        # fused QKV projection; columns are head-major [q0|k0|v0|q1|k1|v1]
        qkv = jnp.dot(h, wqkv_ref[li], preferred_element_type=jnp.float32) + bqkv_ref[li]
        ctxs = []
        for hh in range(NH):
            off = hh * 3 * HD
            q = qkv[:, off:off + HD] * scale
            k = qkv[:, off + HD:off + 2 * HD]
            v = qkv[:, off + 2 * HD:off + 3 * HD]
            s = jax.lax.dot_general(q, k, (((1,), (1,)), ((), ())),
                                    preferred_element_type=jnp.float32)   # (l3, l3)
            s = s - jnp.max(s, axis=-1, keepdims=True)
            e = jnp.exp(s)
            p = e / jnp.sum(e, axis=-1, keepdims=True)      # exact softmax (parity)
            ctxs.append(jnp.dot(p, v, preferred_element_type=jnp.float32))
        ctx = jnp.concatenate(ctxs, axis=-1)                # lane-contiguous (l3, H)
        attn = jnp.dot(ctx, wo_ref[li], preferred_element_type=jnp.float32) + bo_ref[li]

        y = _layernorm(h + attn, ln1g_ref[li], ln1b_ref[li])
        ff = _gelu(jnp.dot(y, w1_ref[li], preferred_element_type=jnp.float32) + b1_ref[li])
        ff = jnp.dot(ff, w2_ref[li], preferred_element_type=jnp.float32) + b2_ref[li]
        h = _layernorm(y + ff, ln2g_ref[li], ln2b_ref[li])

    o_ref[0] = h                                            # last_hidden_state (l3, H)


# --------------------------------- wrapper (plain JAX) -----------------------------
_WEIGHT_KEYS = ["conv1_w", "conv2_w", "conv3_w", "gn_g", "gn_b",
                "fp_ln_g", "fp_ln_b", "fp_w", "fp_b",
                "pos_w", "pos_b", "enc_ln_g", "enc_ln_b",
                "wqkv", "bqkv", "wo", "bo",
                "ln1_g", "ln1_b", "w1", "b1", "w2", "b2", "ln2_g", "ln2_b"]


def _const_spec(a):
    zeros = (0,) * a.ndim
    return pl.BlockSpec(a.shape, lambda i: zeros)           # weights: constant index_map


def cnhubert_forward(x, p):
    """x: (B, T) raw 16 kHz waveform -> last_hidden_state (B, L_frames, H)."""
    B, T = x.shape
    k0, s0, _, _ = CONV_SPECS[0]
    assert T % s0 == 0, "fused wave-norm assumes T divisible by the first conv stride"
    nb0 = T // s0
    l1, l2, l3 = _frame_lengths(T)

    # Only wrapper-side data movement: stride-block the raw wave (input-side, one reshape).
    xb = x.reshape(B, nb0, s0).astype(jnp.float32)

    weights = [p[k] for k in _WEIGHT_KEYS]
    pos_rows = _POS_BASE + l3 + POS_K                       # small padded pos-conv buffer

    kernel = functools.partial(_cnhubert_kernel, l1=l1, l2=l2, l3=l3)
    return pl.pallas_call(
        kernel,
        out_shape=jax.ShapeDtypeStruct((B, l3, H), jnp.float32),
        grid=(B,),
        in_specs=[pl.BlockSpec((1, nb0, s0), lambda i: (i, 0, 0))]
                 + [_const_spec(w) for w in weights],
        out_specs=pl.BlockSpec((1, l3, H), lambda i: (i, 0, 0)),
        scratch_shapes=[
            pltpu.VMEM((l1, C), jnp.float32),               # conv1 output
            pltpu.VMEM((l2, C), jnp.float32),               # conv2 output
            pltpu.VMEM((pos_rows, H), jnp.float32),         # zero-padded pos-conv input
        ],
        compiler_params=pltpu.CompilerParams(dimension_semantics=("parallel",)),
    )(xb, *weights)


# ------------------------------- deterministic params ------------------------------
def init_params(key, scale=0.02):
    ks = iter(jax.random.split(key, 64))
    rnd = lambda shape: jax.random.normal(next(ks), shape, jnp.float32) * scale
    ones = lambda n: jnp.ones((1, n), jnp.float32)
    zeros = lambda n: jnp.zeros((1, n), jnp.float32)

    p = {}
    # conv1 (K=10, stride=5, Cin=1): pre-folded into Q=K/stride taps of (stride*Cin, Cout)
    k0, s0, ci0, co0 = CONV_SPECS[0]
    assert k0 % s0 == 0
    p["conv1_w"] = rnd((k0, ci0, co0)).reshape(k0 // s0, s0 * ci0, co0)
    # conv2 / conv3: per-tap (K, Cin, Cout) — taps read with strided VMEM loads in-kernel
    p["conv2_w"] = rnd((CONV_SPECS[1][0], CONV_SPECS[1][2], CONV_SPECS[1][3]))
    p["conv3_w"] = rnd((CONV_SPECS[2][0], CONV_SPECS[2][2], CONV_SPECS[2][3]))
    p["gn_g"], p["gn_b"] = ones(C), zeros(C)
    p["fp_ln_g"], p["fp_ln_b"] = ones(C), zeros(C)
    p["fp_w"], p["fp_b"] = rnd((C, H)), zeros(H)

    # grouped positional conv stored block-diagonal as (K, H, H); weight-norm folded in
    cin_g = H // POS_GROUPS
    wg = rnd((POS_K, POS_GROUPS, cin_g, cin_g))
    pos_w = jnp.zeros((POS_K, H, H), jnp.float32)
    for g in range(POS_GROUPS):
        pos_w = pos_w.at[:, g * cin_g:(g + 1) * cin_g, g * cin_g:(g + 1) * cin_g].set(wg[:, g])
    p["pos_w"], p["pos_b"] = pos_w, zeros(H)
    p["enc_ln_g"], p["enc_ln_b"] = ones(H), zeros(H)

    # transformer layer weights stacked along a leading NLAYERS axis; QKV columns head-major
    acc = {k: [] for k in ["wqkv", "bqkv", "wo", "bo", "ln1_g", "ln1_b",
                           "w1", "b1", "w2", "b2", "ln2_g", "ln2_b"]}
    for _ in range(NLAYERS):
        wq, wk, wv = rnd((H, H)), rnd((H, H)), rnd((H, H))
        cols = []
        for hh in range(NH):                                # head-major [q_h|k_h|v_h] blocks
            sl = slice(hh * HD, (hh + 1) * HD)
            cols += [wq[:, sl], wk[:, sl], wv[:, sl]]
        acc["wqkv"].append(jnp.concatenate(cols, axis=1))   # (H, 3H)
        acc["bqkv"].append(zeros(3 * H))
        acc["wo"].append(rnd((H, H)));   acc["bo"].append(zeros(H))
        acc["ln1_g"].append(ones(H));    acc["ln1_b"].append(zeros(H))
        acc["w1"].append(rnd((H, FFN))); acc["b1"].append(zeros(FFN))
        acc["w2"].append(rnd((FFN, H))); acc["b2"].append(zeros(H))
        acc["ln2_g"].append(ones(H));    acc["ln2_b"].append(zeros(H))
    for k, v in acc.items():
        p[k] = jnp.stack(v, axis=0)
    return p


# --------------------------------------- main --------------------------------------
if __name__ == "__main__":
    key = jax.random.PRNGKey(0)
    pkey, xkey = jax.random.split(key)
    params = init_params(pkey)
    x = jax.random.normal(xkey, (BATCH, T_WAVE), jnp.float32)   # raw waveform batch

    fwd = jax.jit(cnhubert_forward)
    feats = jax.block_until_ready(fwd(x, params))

    # (T=320) -> conv frames: ((320-10)//5+1=63) -> 31 -> 15
    assert feats.shape == (BATCH, 15, H), feats.shape
    assert feats.dtype == jnp.float32
    assert bool(jnp.all(jnp.isfinite(feats)))
    print("KERNEL_OK")
</pallas_src>

<mosaic_0001>
module attributes {stable_mosaic.version = 11 : i64} {
  func.func @_cnhubert_kernel(%arg0: i32, %arg1: memref<1x64x5xf32, #tpu.memory_space<vmem>>, %arg2: memref<2x5x16xf32, #tpu.memory_space<vmem>>, %arg3: memref<3x16x16xf32, #tpu.memory_space<vmem>>, %arg4: memref<2x16x16xf32, #tpu.memory_space<vmem>>, %arg5: memref<1x16xf32, #tpu.memory_space<vmem>>, %arg6: memref<1x16xf32, #tpu.memory_space<vmem>>, %arg7: memref<1x16xf32, #tpu.memory_space<vmem>>, %arg8: memref<1x16xf32, #tpu.memory_space<vmem>>, %arg9: memref<16x32xf32, #tpu.memory_space<vmem>>, %arg10: memref<1x32xf32, #tpu.memory_space<vmem>>, %arg11: memref<4x32x32xf32, #tpu.memory_space<vmem>>, %arg12: memref<1x32xf32, #tpu.memory_space<vmem>>, %arg13: memref<1x32xf32, #tpu.memory_space<vmem>>, %arg14: memref<1x32xf32, #tpu.memory_space<vmem>>, %arg15: memref<2x32x96xf32, #tpu.memory_space<vmem>>, %arg16: memref<2x1x96xf32, #tpu.memory_space<vmem>>, %arg17: memref<2x32x32xf32, #tpu.memory_space<vmem>>, %arg18: memref<2x1x32xf32, #tpu.memory_space<vmem>>, %arg19: memref<2x1x32xf32, #tpu.memory_space<vmem>>, %arg20: memref<2x1x32xf32, #tpu.memory_space<vmem>>, %arg21: memref<2x32x64xf32, #tpu.memory_space<vmem>>, %arg22: memref<2x1x64xf32, #tpu.memory_space<vmem>>, %arg23: memref<2x64x32xf32, #tpu.memory_space<vmem>>, %arg24: memref<2x1x32xf32, #tpu.memory_space<vmem>>, %arg25: memref<2x1x32xf32, #tpu.memory_space<vmem>>, %arg26: memref<2x1x32xf32, #tpu.memory_space<vmem>>, %arg27: memref<1x15x32xf32, #tpu.memory_space<vmem>>, %arg28: memref<63x16xf32, #tpu.memory_space<vmem>>, %arg29: memref<31x16xf32, #tpu.memory_space<vmem>>, %arg30: memref<27x32xf32, #tpu.memory_space<vmem>>) attributes {dimension_semantics = [#tpu.dimension_semantics<parallel>], iteration_bounds = array<i64: 2>, scalar_prefetch = 0 : i64, scratch_operands = 3 : i64, tpu.core_type = #tpu.core_type<tc>, window_params = [{transform_indices = @transform_0, window_bounds = array<i64: 1, 64, 5>}, {pipeline_mode = #tpu.pipeline_mode<synchronous>, transform_indices = @transform_1, window_bounds = array<i64: 2, 5, 16>}, {pipeline_mode = #tpu.pipeline_mode<synchronous>, transform_indices = @transform_2, window_bounds = array<i64: 3, 16, 16>}, {pipeline_mode = #tpu.pipeline_mode<synchronous>, transform_indices = @transform_3, window_bounds = array<i64: 2, 16, 16>}, {pipeline_mode = #tpu.pipeline_mode<synchronous>, transform_indices = @transform_4, window_bounds = array<i64: 1, 16>}, {pipeline_mode = #tpu.pipeline_mode<synchronous>, transform_indices = @transform_5, window_bounds = array<i64: 1, 16>}, {pipeline_mode = #tpu.pipeline_mode<synchronous>, transform_indices = @transform_6, window_bounds = array<i64: 1, 16>}, {pipeline_mode = #tpu.pipeline_mode<synchronous>, transform_indices = @transform_7, window_bounds = array<i64: 1, 16>}, {pipeline_mode = #tpu.pipeline_mode<synchronous>, transform_indices = @transform_8, window_bounds = array<i64: 16, 32>}, {pipeline_mode = #tpu.pipeline_mode<synchronous>, transform_indices = @transform_9, window_bounds = array<i64: 1, 32>}, {pipeline_mode = #tpu.pipeline_mode<synchronous>, transform_indices = @transform_10, window_bounds = array<i64: 4, 32, 32>}, {pipeline_mode = #tpu.pipeline_mode<synchronous>, transform_indices = @transform_11, window_bounds = array<i64: 1, 32>}, {pipeline_mode = #tpu.pipeline_mode<synchronous>, transform_indices = @transform_12, window_bounds = array<i64: 1, 32>}, {pipeline_mode = #tpu.pipeline_mode<synchronous>, transform_indices = @transform_13, window_bounds = array<i64: 1, 32>}, {pipeline_mode = #tpu.pipeline_mode<synchronous>, transform_indices = @transform_14, window_bounds = array<i64: 2, 32, 96>}, {pipeline_mode = #tpu.pipeline_mode<synchronous>, transform_indices = @transform_15, window_bounds = array<i64: 2, 1, 96>}, {pipeline_mode = #tpu.pipeline_mode<synchronous>, transform_indices = @transform_16, window_bounds = array<i64: 2, 32, 32>}, {pipeline_mode = #tpu.pipeline_mode<synchronous>, transform_indices = @transform_17, window_bounds = array<i64: 2, 1, 32>}, {pipeline_mode = #tpu.pipeline_mode<synchronous>, transform_indices = @transform_18, window_bounds = array<i64: 2, 1, 32>}, {pipeline_mode = #tpu.pipeline_mode<synchronous>, transform_indices = @transform_19, window_bounds = array<i64: 2, 1, 32>}, {pipeline_mode = #tpu.pipeline_mode<synchronous>, transform_indices = @transform_20, window_bounds = array<i64: 2, 32, 64>}, {pipeline_mode = #tpu.pipeline_mode<synchronous>, transform_indices = @transform_21, window_bounds = array<i64: 2, 1, 64>}, {pipeline_mode = #tpu.pipeline_mode<synchronous>, transform_indices = @transform_22, window_bounds = array<i64: 2, 64, 32>}, {pipeline_mode = #tpu.pipeline_mode<synchronous>, transform_indices = @transform_23, window_bounds = array<i64: 2, 1, 32>}, {pipeline_mode = #tpu.pipeline_mode<synchronous>, transform_indices = @transform_24, window_bounds = array<i64: 2, 1, 32>}, {pipeline_mode = #tpu.pipeline_mode<synchronous>, transform_indices = @transform_25, window_bounds = array<i64: 2, 1, 32>}, {transform_indices = @transform_26, window_bounds = array<i64: 1, 15, 32>}]} {
    %c0 = arith.constant 0 : index
    %c0_0 = arith.constant 0 : index
    %c0_1 = arith.constant 0 : index
    %0 = vector.load %arg1[%c0, %c0_0, %c0_1] : memref<1x64x5xf32, #tpu.memory_space<vmem>>, vector<1x64x5xf32>
    %1 = vector.shape_cast %0 : vector<1x64x5xf32> to vector<64x5xf32>
    %2 = vector.shape_cast %1 : vector<64x5xf32> to vector<1x64x5xf32>
    %cst = arith.constant dense<0.000000e+00> : vector<1xf32>
    %3 = vector.multi_reduction <add>, %2, %cst [1, 2] : vector<1x64x5xf32> to vector<1xf32>
    %4 = vector.shape_cast %3 : vector<1xf32> to vector<1x1x1xf32>
    %5 = vector.extract %4[0, 0, 0] : f32 from vector<1x1x1xf32>
    %cst_2 = arith.constant 3.200000e+02 : f32
    %6 = arith.divf %5, %cst_2 : f32
    %7 = vector.broadcast %6 : f32 to vector<64x5xf32>
    %8 = arith.subf %1, %7 : vector<64x5xf32>
    %9 = arith.mulf %8, %8 : vector<64x5xf32>
    %10 = vector.shape_cast %9 : vector<64x5xf32> to vector<1x64x5xf32>
    %cst_3 = arith.constant dense<0.000000e+00> : vector<1xf32>
    %11 = vector.multi_reduction <add>, %10, %cst_3 [1, 2] : vector<1x64x5xf32> to vector<1xf32>
    %12 = vector.shape_cast %11 : vector<1xf32> to vector<1x1x1xf32>
    %13 = vector.extract %12[0, 0, 0] : f32 from vector<1x1x1xf32>
    %cst_4 = arith.constant 3.200000e+02 : f32
    %14 = arith.divf %13, %cst_4 : f32
    %15 = vector.broadcast %6 : f32 to vector<64x5xf32>
    %16 = arith.subf %1, %15 : vector<64x5xf32>
    %cst_5 = arith.constant 1.000000e-07 : f32
    %17 = arith.addf %14, %cst_5 : f32
    %18 = math.rsqrt %17 : f32
    %19 = vector.broadcast %18 : f32 to vector<64x5xf32>
    %20 = arith.mulf %16, %19 : vector<64x5xf32>
    %cst_6 = arith.constant 0.000000e+00 : f32
    %21 = vector.broadcast %cst_6 : f32 to vector<63x16xf32>
    %22 = vector.extract_strided_slice %20 {offsets = [0, 0], sizes = [63, 5], strides = [1, 1]} : vector<64x5xf32> to vector<63x5xf32>
    %c0_7 = arith.constant 0 : index
    %c0_8 = arith.constant 0 : index
    %c0_9 = arith.constant 0 : index
    %23 = vector.load %arg2[%c0_7, %c0_8, %c0_9] : memref<2x5x16xf32, #tpu.memory_space<vmem>>, vector<1x5x16xf32>
    %24 = vector.shape_cast %23 : vector<1x5x16xf32> to vector<5x16xf32>
    %cst_10 = arith.constant dense<0.000000e+00> : vector<63x16xf32>
    %25 = tpu.matmul %22, %24, %cst_10 {dimension_numbers = #tpu.dot_dimension_numbers<[1], [0], [0], [1], [0, 0, 1, 1], [], []>} : vector<63x5xf32>, vector<5x16xf32>, vector<63x16xf32> -> vector<63x16xf32>
    %26 = arith.addf %21, %25 : vector<63x16xf32>
    %27 = vector.extract_strided_slice %20 {offsets = [1, 0], sizes = [63, 5], strides = [1, 1]} : vector<64x5xf32> to vector<63x5xf32>
    %c1 = arith.constant 1 : index
    %c0_11 = arith.constant 0 : index
    %c0_12 = arith.constant 0 : index
    %28 = vector.load %arg2[%c1, %c0_11, %c0_12] : memref<2x5x16xf32, #tpu.memory_space<vmem>>, vector<1x5x16xf32>
    %29 = vector.shape_cast %28 : vector<1x5x16xf32> to vector<5x16xf32>
    %cst_13 = arith.constant dense<0.000000e+00> : vector<63x16xf32>
    %30 = tpu.matmul %27, %29, %cst_13 {dimension_numbers = #tpu.dot_dimension_numbers<[1], [0], [0], [1], [0, 0, 1, 1], [], []>} : vector<63x5xf32>, vector<5x16xf32>, vector<63x16xf32> -> vector<63x16xf32>
    %31 = arith.addf %26, %30 : vector<63x16xf32>
    %cst_14 = arith.constant dense<0.000000e+00> : vector<16xf32>
    %32 = vector.multi_reduction <add>, %31, %cst_14 [0] : vector<63x16xf32> to vector<16xf32>
    %33 = vector.shape_cast %32 : vector<16xf32> to vector<1x16xf32>
    %cst_15 = arith.constant 6.300000e+01 : f32
    %34 = vector.broadcast %cst_15 : f32 to vector<1x16xf32>
    %35 = arith.divf %33, %34 : vector<1x16xf32>
    %36 = vector.broadcast %35 : vector<1x16xf32> to vector<63x16xf32>
    %37 = arith.subf %31, %36 : vector<63x16xf32>
    %38 = arith.mulf %37, %37 : vector<63x16xf32>
    %cst_16 = arith.constant dense<0.000000e+00> : vector<16xf32>
    %39 = vector.multi_reduction <add>, %38, %cst_16 [0] : vector<63x16xf32> to vector<16xf32>
    %40 = vector.shape_cast %39 : vector<16xf32> to vector<1x16xf32>
    %cst_17 = arith.constant 6.300000e+01 : f32
    %41 = vector.broadcast %cst_17 : f32 to vector<1x16xf32>
    %42 = arith.divf %40, %41 : vector<1x16xf32>
    %43 = vector.broadcast %35 : vector<1x16xf32> to vector<63x16xf32>
    %44 = arith.subf %31, %43 : vector<63x16xf32>
    %cst_18 = arith.constant 9.99999974E-6 : f32
    %45 = vector.broadcast %cst_18 : f32 to vector<1x16xf32>
    %46 = arith.addf %42, %45 : vector<1x16xf32>
    %47 = math.rsqrt %46 : vector<1x16xf32>
    %48 = vector.broadcast %47 : vector<1x16xf32> to vector<63x16xf32>
    %49 = arith.mulf %44, %48 : vector<63x16xf32>
    %c0_19 = arith.constant 0 : index
    %c0_20 = arith.constant 0 : index
    %50 = vector.load %arg5[%c0_19, %c0_20] : memref<1x16xf32, #tpu.memory_space<vmem>>, vector<1x16xf32>
    %51 = vector.broadcast %50 : vector<1x16xf32> to vector<63x16xf32>
    %52 = arith.mulf %49, %51 : vector<63x16xf32>
    %c0_21 = arith.constant 0 : index
    %c0_22 = arith.constant 0 : index
    %53 = vector.load %arg6[%c0_21, %c0_22] : memref<1x16xf32, #tpu.memory_space<vmem>>, vector<1x16xf32>
    %54 = vector.broadcast %53 : vector<1x16xf32> to vector<63x16xf32>
    %55 = arith.addf %52, %54 : vector<63x16xf32>
    %cst_23 = arith.constant 5.000000e-01 : f32
    %56 = vector.broadcast %cst_23 : f32 to vector<63x16xf32>
    %57 = arith.mulf %56, %55 : vector<63x16xf32>
    %cst_24 = arith.constant 4.471500e-02 : f32
    %58 = vector.broadcast %cst_24 : f32 to vector<63x16xf32>
    %59 = arith.mulf %58, %55 : vector<63x16xf32>
    %60 = arith.mulf %59, %55 : vector<63x16xf32>
    %61 = arith.mulf %60, %55 : vector<63x16xf32>
    %62 = arith.addf %55, %61 : vector<63x16xf32>
    %cst_25 = arith.constant 0.797884583 : f32
    %63 = vector.broadcast %cst_25 : f32 to vector<63x16xf32>
    %64 = arith.mulf %63, %62 : vector<63x16xf32>
    %65 = math.tanh %64 : vector<63x16xf32>
    %cst_26 = arith.constant 1.000000e+00 : f32
    %66 = vector.broadcast %cst_26 : f32 to vector<63x16xf32>
    %67 = arith.addf %66, %65 : vector<63x16xf32>
    %68 = arith.mulf %57, %67 : vector<63x16xf32>
    %c0_27 = arith.constant 0 : index
    %c0_28 = arith.constant 0 : index
    %69 = vector.load %arg28[%c0_27, %c0_28] : memref<63x16xf32, #tpu.memory_space<vmem>>, vector<63x16xf32>
    tpu.vector_store %arg28[%c0_27, %c0_28], %68 {strides = array<i32>} : memref<63x16xf32, #tpu.memory_space<vmem>>, vector<63x16xf32>,
    %cst_29 = arith.constant 0.000000e+00 : f32
    %70 = vector.broadcast %cst_29 : f32 to vector<31x16xf32>
    %c0_30 = arith.constant 0 : index
    %c0_31 = arith.constant 0 : index
    %71 = tpu.strided_load %arg28[%c0_30, %c0_31] {strides = array<i32: 2, 1>} : memref<63x16xf32, #tpu.memory_space<vmem>>, vector<31x16xf32>
    %c0_32 = arith.constant 0 : index
    %c0_33 = arith.constant 0 : index
    %c0_34 = arith.constant 0 : index
    %72 = vector.load %arg3[%c0_32, %c0_33, %c0_34] : memref<3x16x16xf32, #tpu.memory_space<vmem>>, vector<1x16x16xf32>
    %73 = vector.shape_cast %72 : vector<1x16x16xf32> to vector<16x16xf32>
    %cst_35 = arith.constant dense<0.000000e+00> : vector<31x16xf32>
    %74 = tpu.matmul %71, %73, %cst_35 {dimension_numbers = #tpu.dot_dimension_numbers<[1], [0], [0], [1], [0, 0, 1, 1], [], []>} : vector<31x16xf32>, vector<16x16xf32>, vector<31x16xf32> -> vector<31x16xf32>
    %75 = arith.addf %70, %74 : vector<31x16xf32>
    %c1_36 = arith.constant 1 : index
    %c0_37 = arith.constant 0 : index
    %76 = tpu.strided_load %arg28[%c1_36, %c0_37] {strides = array<i32: 2, 1>} : memref<63x16xf32, #tpu.memory_space<vmem>>, vector<31x16xf32>
    %c1_38 = arith.constant 1 : index
    %c0_39 = arith.constant 0 : index
    %c0_40 = arith.constant 0 : index
    %77 = vector.load %arg3[%c1_38, %c0_39, %c0_40] : memref<3x16x16xf32, #tpu.memory_space<vmem>>, vector<1x16x16xf32>
    %78 = vector.shape_cast %77 : vector<1x16x16xf32> to vector<16x16xf32>
    %cst_41 = arith.constant dense<0.000000e+00> : vector<31x16xf32>
    %79 = tpu.matmul %76, %78, %cst_41 {dimension_numbers = #tpu.dot_dimension_numbers<[1], [0], [0], [1], [0, 0, 1, 1], [], []>} : vector<31x16xf32>, vector<16x16xf32>, vector<31x16xf32> -> vector<31x16xf32>
    %80 = arith.addf %75, %79 : vector<31x16xf32>
    %c2 = arith.constant 2 : index
    %c0_42 = arith.constant 0 : index
    %81 = tpu.strided_load %arg28[%c2, %c0_42] {strides = array<i32: 2, 1>} : memref<63x16xf32, #tpu.memory_space<vmem>>, vector<31x16xf32>
    %c2_43 = arith.constant 2 : index
    %c0_44 = arith.constant 0 : index
    %c0_45 = arith.constant 0 : index
    %82 = vector.load %arg3[%c2_43, %c0_44, %c0_45] : memref<3x16x16xf32, #tpu.memory_space<vmem>>, vector<1x16x16xf32>
    %83 = vector.shape_cast %82 : vector<1x16x16xf32> to vector<16x16xf32>
    %cst_46 = arith.constant dense<0.000000e+00> : vector<31x16xf32>
    %84 = tpu.matmul %81, %83, %cst_46 {dimension_numbers = #tpu.dot_dimension_numbers<[1], [0], [0], [1], [0, 0, 1, 1], [], []>} : vector<31x16xf32>, vector<16x16xf32>, vector<31x16xf32> -> vector<31x16xf32>
    %85 = arith.addf %80, %84 : vector<31x16xf32>
    %cst_47 = arith.constant 5.000000e-01 : f32
    %86 = vector.broadcast %cst_47 : f32 to vector<31x16xf32>
    %87 = arith.mulf %86, %85 : vector<31x16xf32>
    %cst_48 = arith.constant 4.471500e-02 : f32
    %88 = vector.broadcast %cst_48 : f32 to vector<31x16xf32>
    %89 = arith.mulf %88, %85 : vector<31x16xf32>
    %90 = arith.mulf %89, %85 : vector<31x16xf32>
    %91 = arith.mulf %90, %85 : vector<31x16xf32>
    %92 = arith.addf %85, %91 : vector<31x16xf32>
    %cst_49 = arith.constant 0.797884583 : f32
    %93 = vector.broadcast %cst_49 : f32 to vector<31x16xf32>
    %94 = arith.mulf %93, %92 : vector<31x16xf32>
    %95 = math.tanh %94 : vector<31x16xf32>
    %cst_50 = arith.constant 1.000000e+00 : f32
    %96 = vector.broadcast %cst_50 : f32 to vector<31x16xf32>
    %97 = arith.addf %96, %95 : vector<31x16xf32>
    %98 = arith.mulf %87, %97 : vector<31x16xf32>
    %c0_51 = arith.constant 0 : index
    %c0_52 = arith.constant 0 : index
    %99 = vector.load %arg29[%c0_51, %c0_52] : memref<31x16xf32, #tpu.memory_space<vmem>>, vector<31x16xf32>
    tpu.vector_store %arg29[%c0_51, %c0_52], %98 {strides = array<i32>} : memref<31x16xf32, #tpu.memory_space<vmem>>, vector<31x16xf32>,
    %cst_53 = arith.constant 0.000000e+00 : f32
    %100 = vector.broadcast %cst_53 : f32 to vector<15x16xf32>
    %c0_54 = arith.constant 0 : index
    %c0_55 = arith.constant 0 : index
    %101 = tpu.strided_load %arg29[%c0_54, %c0_55] {strides = array<i32: 2, 1>} : memref<31x16xf32, #tpu.memory_space<vmem>>, vector<15x16xf32>
    %c0_56 = arith.constant 0 : index
    %c0_57 = arith.constant 0 : index
    %c0_58 = arith.constant 0 : index
    %102 = vector.load %arg4[%c0_56, %c0_57, %c0_58] : memref<2x16x16xf32, #tpu.memory_space<vmem>>, vector<1x16x16xf32>
    %103 = vector.shape_cast %102 : vector<1x16x16xf32> to vector<16x16xf32>
    %cst_59 = arith.constant dense<0.000000e+00> : vector<15x16xf32>
    %104 = tpu.matmul %101, %103, %cst_59 {dimension_numbers = #tpu.dot_dimension_numbers<[1], [0], [0], [1], [0, 0, 1, 1], [], []>} : vector<15x16xf32>, vector<16x16xf32>, vector<15x16xf32> -> vector<15x16xf32>
    %105 = arith.addf %100, %104 : vector<15x16xf32>
    %c1_60 = arith.constant 1 : index
    %c0_61 = arith.constant 0 : index
    %106 = tpu.strided_load %arg29[%c1_60, %c0_61] {strides = array<i32: 2, 1>} : memref<31x16xf32, #tpu.memory_space<vmem>>, vector<15x16xf32>
    %c1_62 = arith.constant 1 : index
    %c0_63 = arith.constant 0 : index
    %c0_64 = arith.constant 0 : index
    %107 = vector.load %arg4[%c1_62, %c0_63, %c0_64] : memref<2x16x16xf32, #tpu.memory_space<vmem>>, vector<1x16x16xf32>
    %108 = vector.shape_cast %107 : vector<1x16x16xf32> to vector<16x16xf32>
    %cst_65 = arith.constant dense<0.000000e+00> : vector<15x16xf32>
    %109 = tpu.matmul %106, %108, %cst_65 {dimension_numbers = #tpu.dot_dimension_numbers<[1], [0], [0], [1], [0, 0, 1, 1], [], []>} : vector<15x16xf32>, vector<16x16xf32>, vector<15x16xf32> -> vector<15x16xf32>
    %110 = arith.addf %105, %109 : vector<15x16xf32>
    %cst_66 = arith.constant 5.000000e-01 : f32
    %111 = vector.broadcast %cst_66 : f32 to vector<15x16xf32>
    %112 = arith.mulf %111, %110 : vector<15x16xf32>
    %cst_67 = arith.constant 4.471500e-02 : f32
    %113 = vector.broadcast %cst_67 : f32 to vector<15x16xf32>
    %114 = arith.mulf %113, %110 : vector<15x16xf32>
    %115 = arith.mulf %114, %110 : vector<15x16xf32>
    %116 = arith.mulf %115, %110 : vector<15x16xf32>
    %117 = arith.addf %110, %116 : vector<15x16xf32>
    %cst_68 = arith.constant 0.797884583 : f32
    %118 = vector.broadcast %cst_68 : f32 to vector<15x16xf32>
    %119 = arith.mulf %118, %117 : vector<15x16xf32>
    %120 = math.tanh %119 : vector<15x16xf32>
    %cst_69 = arith.constant 1.000000e+00 : f32
    %121 = vector.broadcast %cst_69 : f32 to vector<15x16xf32>
    %122 = arith.addf %121, %120 : vector<15x16xf32>
    %123 = arith.mulf %112, %122 : vector<15x16xf32>
    %c0_70 = arith.constant 0 : index
    %c0_71 = arith.constant 0 : index
    %124 = vector.load %arg7[%c0_70, %c0_71] : memref<1x16xf32, #tpu.memory_space<vmem>>, vector<1x16xf32>
    %c0_72 = arith.constant 0 : index
    %c0_73 = arith.constant 0 : index
    %125 = vector.load %arg8[%c0_72, %c0_73] : memref<1x16xf32, #tpu.memory_space<vmem>>, vector<1x16xf32>
    %cst_74 = arith.constant dense<0.000000e+00> : vector<15xf32>
    %126 = vector.multi_reduction <add>, %123, %cst_74 [1] : vector<15x16xf32> to vector<15xf32>
    %127 = vector.shape_cast %126 : vector<15xf32> to vector<15x1xf32>
    %cst_75 = arith.constant 1.600000e+01 : f32
    %128 = vector.broadcast %cst_75 : f32 to vector<15x1xf32>
    %129 = arith.divf %127, %128 : vector<15x1xf32>
    %130 = vector.broadcast %129 : vector<15x1xf32> to vector<15x16xf32>
    %131 = arith.subf %123, %130 : vector<15x16xf32>
    %132 = arith.mulf %131, %131 : vector<15x16xf32>
    %cst_76 = arith.constant dense<0.000000e+00> : vector<15xf32>
    %133 = vector.multi_reduction <add>, %132, %cst_76 [1] : vector<15x16xf32> to vector<15xf32>
    %134 = vector.shape_cast %133 : vector<15xf32> to vector<15x1xf32>
    %cst_77 = arith.constant 1.600000e+01 : f32
    %135 = vector.broadcast %cst_77 : f32 to vector<15x1xf32>
    %136 = arith.divf %134, %135 : vector<15x1xf32>
    %137 = vector.broadcast %129 : vector<15x1xf32> to vector<15x16xf32>
    %138 = arith.subf %123, %137 : vector<15x16xf32>
    %cst_78 = arith.constant 9.99999974E-6 : f32
    %139 = vector.broadcast %cst_78 : f32 to vector<15x1xf32>
    %140 = arith.addf %136, %139 : vector<15x1xf32>
    %141 = math.rsqrt %140 : vector<15x1xf32>
    %142 = vector.broadcast %141 : vector<15x1xf32> to vector<15x16xf32>
    %143 = arith.mulf %138, %142 : vector<15x16xf32>
    %144 = vector.broadcast %124 : vector<1x16xf32> to vector<15x16xf32>
    %145 = arith.mulf %143, %144 : vector<15x16xf32>
    %146 = vector.broadcast %125 : vector<1x16xf32> to vector<15x16xf32>
    %147 = arith.addf %145, %146 : vector<15x16xf32>
    %c0_79 = arith.constant 0 : index
    %c0_80 = arith.constant 0 : index
    %148 = vector.load %arg9[%c0_79, %c0_80] : memref<16x32xf32, #tpu.memory_space<vmem>>, vector<16x32xf32>
    %cst_81 = arith.constant dense<0.000000e+00> : vector<15x32xf32>
    %149 = tpu.matmul %147, %148, %cst_81 {dimension_numbers = #tpu.dot_dimension_numbers<[1], [0], [0], [1], [0, 0, 1, 1], [], []>} : vector<15x16xf32>, vector<16x32xf32>, vector<15x32xf32> -> vector<15x32xf32>
    %c0_82 = arith.constant 0 : index
    %c0_83 = arith.constant 0 : index
    %150 = vector.load %arg10[%c0_82, %c0_83] : memref<1x32xf32, #tpu.memory_space<vmem>>, vector<1x32xf32>
    %151 = vector.broadcast %150 : vector<1x32xf32> to vector<15x32xf32>
    %152 = arith.addf %149, %151 : vector<15x32xf32>
    %cst_84 = arith.constant 0.000000e+00 : f32
    %153 = vector.broadcast %cst_84 : f32 to vector<27x32xf32>
    %c0_85 = arith.constant 0 : index
    %c0_86 = arith.constant 0 : index
    %154 = vector.load %arg30[%c0_85, %c0_86] : memref<27x32xf32, #tpu.memory_space<vmem>>, vector<27x32xf32>
    tpu.vector_store %arg30[%c0_85, %c0_86], %153 {strides = array<i32>} : memref<27x32xf32, #tpu.memory_space<vmem>>, vector<27x32xf32>,
    %c8 = arith.constant 8 : index
    %c0_87 = arith.constant 0 : index
    %155 = vector.load %arg30[%c8, %c0_87] : memref<27x32xf32, #tpu.memory_space<vmem>>, vector<15x32xf32>
    tpu.vector_store %arg30[%c8, %c0_87], %152 {strides = array<i32>} : memref<27x32xf32, #tpu.memory_space<vmem>>, vector<15x32xf32>,
    %cst_88 = arith.constant 0.000000e+00 : f32
    %156 = vector.broadcast %cst_88 : f32 to vector<15x32xf32>
    %c6 = arith.constant 6 : index
    %c0_89 = arith.constant 0 : index
    %157 = vector.load %arg30[%c6, %c0_89] : memref<27x32xf32, #tpu.memory_space<vmem>>, vector<15x32xf32>
    %c0_90 = arith.constant 0 : index
    %c0_91 = arith.constant 0 : index
    %c0_92 = arith.constant 0 : index
    %158 = vector.load %arg11[%c0_90, %c0_91, %c0_92] : memref<4x32x32xf32, #tpu.memory_space<vmem>>, vector<1x32x32xf32>
    %159 = vector.shape_cast %158 : vector<1x32x32xf32> to vector<32x32xf32>
    %cst_93 = arith.constant dense<0.000000e+00> : vector<15x32xf32>
    %160 = tpu.matmul %157, %159, %cst_93 {dimension_numbers = #tpu.dot_dimension_numbers<[1], [0], [0], [1], [0, 0, 1, 1], [], []>} : vector<15x32xf32>, vector<32x32xf32>, vector<15x32xf32> -> vector<15x32xf32>
    %161 = arith.addf %156, %160 : vector<15x32xf32>
    %c7 = arith.constant 7 : index
    %c0_94 = arith.constant 0 : index
    %162 = vector.load %arg30[%c7, %c0_94] : memref<27x32xf32, #tpu.memory_space<vmem>>, vector<15x32xf32>
    %c1_95 = arith.constant 1 : index
    %c0_96 = arith.constant 0 : index
    %c0_97 = arith.constant 0 : index
    %163 = vector.load %arg11[%c1_95, %c0_96, %c0_97] : memref<4x32x32xf32, #tpu.memory_space<vmem>>, vector<1x32x32xf32>
    %164 = vector.shape_cast %163 : vector<1x32x32xf32> to vector<32x32xf32>
    %cst_98 = arith.constant dense<0.000000e+00> : vector<15x32xf32>
    %165 = tpu.matmul %162, %164, %cst_98 {dimension_numbers = #tpu.dot_dimension_numbers<[1], [0], [0], [1], [0, 0, 1, 1], [], []>} : vector<15x32xf32>, vector<32x32xf32>, vector<15x32xf32> -> vector<15x32xf32>
    %166 = arith.addf %161, %165 : vector<15x32xf32>
    %c8_99 = arith.constant 8 : index
    %c0_100 = arith.constant 0 : index
    %167 = vector.load %arg30[%c8_99, %c0_100] : memref<27x32xf32, #tpu.memory_space<vmem>>, vector<15x32xf32>
    %c2_101 = arith.constant 2 : index
    %c0_102 = arith.constant 0 : index
    %c0_103 = arith.constant 0 : index
    %168 = vector.load %arg11[%c2_101, %c0_102, %c0_103] : memref<4x32x32xf32, #tpu.memory_space<vmem>>, vector<1x32x32xf32>
    %169 = vector.shape_cast %168 : vector<1x32x32xf32> to vector<32x32xf32>
    %cst_104 = arith.constant dense<0.000000e+00> : vector<15x32xf32>
    %170 = tpu.matmul %167, %169, %cst_104 {dimension_numbers = #tpu.dot_dimension_numbers<[1], [0], [0], [1], [0, 0, 1, 1], [], []>} : vector<15x32xf32>, vector<32x32xf32>, vector<15x32xf32> -> vector<15x32xf32>
    %171 = arith.addf %166, %170 : vector<15x32xf32>
    %c9 = arith.constant 9 : index
    %c0_105 = arith.constant 0 : index
    %172 = vector.load %arg30[%c9, %c0_105] : memref<27x32xf32, #tpu.memory_space<vmem>>, vector<15x32xf32>
    %c3 = arith.constant 3 : index
    %c0_106 = arith.constant 0 : index
    %c0_107 = arith.constant 0 : index
    %173 = vector.load %arg11[%c3, %c0_106, %c0_107] : memref<4x32x32xf32, #tpu.memory_space<vmem>>, vector<1x32x32xf32>
    %174 = vector.shape_cast %173 : vector<1x32x32xf32> to vector<32x32xf32>
    %cst_108 = arith.constant dense<0.000000e+00> : vector<15x32xf32>
    %175 = tpu.matmul %172, %174, %cst_108 {dimension_numbers = #tpu.dot_dimension_numbers<[1], [0], [0], [1], [0, 0, 1, 1], [], []>} : vector<15x32xf32>, vector<32x32xf32>, vector<15x32xf32> -> vector<15x32xf32>
    %176 = arith.addf %171, %175 : vector<15x32xf32>
    %c0_109 = arith.constant 0 : index
    %c0_110 = arith.constant 0 : index
    %177 = vector.load %arg12[%c0_109, %c0_110] : memref<1x32xf32, #tpu.memory_space<vmem>>, vector<1x32xf32>
    %178 = vector.broadcast %177 : vector<1x32xf32> to vector<15x32xf32>
    %179 = arith.addf %176, %178 : vector<15x32xf32>
    %cst_111 = arith.constant 5.000000e-01 : f32
    %180 = vector.broadcast %cst_111 : f32 to vector<15x32xf32>
    %181 = arith.mulf %180, %179 : vector<15x32xf32>
    %cst_112 = arith.constant 4.471500e-02 : f32
    %182 = vector.broadcast %cst_112 : f32 to vector<15x32xf32>
    %183 = arith.mulf %182, %179 : vector<15x32xf32>
    %184 = arith.mulf %183, %179 : vector<15x32xf32>
    %185 = arith.mulf %184, %179 : vector<15x32xf32>
    %186 = arith.addf %179, %185 : vector<15x32xf32>
    %cst_113 = arith.constant 0.797884583 : f32
    %187 = vector.broadcast %cst_113 : f32 to vector<15x32xf32>
    %188 = arith.mulf %187, %186 : vector<15x32xf32>
    %189 = math.tanh %188 : vector<15x32xf32>
    %cst_114 = arith.constant 1.000000e+00 : f32
    %190 = vector.broadcast %cst_114 : f32 to vector<15x32xf32>
    %191 = arith.addf %190, %189 : vector<15x32xf32>
    %192 = arith.mulf %181, %191 : vector<15x32xf32>
    %193 = arith.addf %152, %192 : vector<15x32xf32>
    %c0_115 = arith.constant 0 : index
    %c0_116 = arith.constant 0 : index
    %194 = vector.load %arg13[%c0_115, %c0_116] : memref<1x32xf32, #tpu.memory_space<vmem>>, vector<1x32xf32>
    %c0_117 = arith.constant 0 : index
    %c0_118 = arith.constant 0 : index
    %195 = vector.load %arg14[%c0_117, %c0_118] : memref<1x32xf32, #tpu.memory_space<vmem>>, vector<1x32xf32>
    %cst_119 = arith.constant dense<0.000000e+00> : vector<15xf32>
    %196 = vector.multi_reduction <add>, %193, %cst_119 [1] : vector<15x32xf32> to vector<15xf32>
    %197 = vector.shape_cast %196 : vector<15xf32> to vector<15x1xf32>
    %cst_120 = arith.constant 3.200000e+01 : f32
    %198 = vector.broadcast %cst_120 : f32 to vector<15x1xf32>
    %199 = arith.divf %197, %198 : vector<15x1xf32>
    %200 = vector.broadcast %199 : vector<15x1xf32> to vector<15x32xf32>
    %201 = arith.subf %193, %200 : vector<15x32xf32>
    %202 = arith.mulf %201, %201 : vector<15x32xf32>
    %cst_121 = arith.constant dense<0.000000e+00> : vector<15xf32>
    %203 = vector.multi_reduction <add>, %202, %cst_121 [1] : vector<15x32xf32> to vector<15xf32>
    %204 = vector.shape_cast %203 : vector<15xf32> to vector<15x1xf32>
    %cst_122 = arith.constant 3.200000e+01 : f32
    %205 = vector.broadcast %cst_122 : f32 to vector<15x1xf32>
    %206 = arith.divf %204, %205 : vector<15x1xf32>
    %207 = vector.broadcast %199 : vector<15x1xf32> to vector<15x32xf32>
    %208 = arith.subf %193, %207 : vector<15x32xf32>
    %cst_123 = arith.constant 9.99999974E-6 : f32
    %209 = vector.broadcast %cst_123 : f32 to vector<15x1xf32>
    %210 = arith.addf %206, %209 : vector<15x1xf32>
    %211 = math.rsqrt %210 : vector<15x1xf32>
    %212 = vector.broadcast %211 : vector<15x1xf32> to vector<15x32xf32>
    %213 = arith.mulf %208, %212 : vector<15x32xf32>
    %214 = vector.broadcast %194 : vector<1x32xf32> to vector<15x32xf32>
    %215 = arith.mulf %213, %214 : vector<15x32xf32>
    %216 = vector.broadcast %195 : vector<1x32xf32> to vector<15x32xf32>
    %217 = arith.addf %215, %216 : vector<15x32xf32>
    %c0_124 = arith.constant 0 : index
    %c0_125 = arith.constant 0 : index
    %c0_126 = arith.constant 0 : index
    %218 = vector.load %arg15[%c0_124, %c0_125, %c0_126] : memref<2x32x96xf32, #tpu.memory_space<vmem>>, vector<1x32x96xf32>
    %219 = vector.shape_cast %218 : vector<1x32x96xf32> to vector<32x96xf32>
    %cst_127 = arith.constant dense<0.000000e+00> : vector<15x96xf32>
    %220 = tpu.matmul %217, %219, %cst_127 {dimension_numbers = #tpu.dot_dimension_numbers<[1], [0], [0], [1], [0, 0, 1, 1], [], []>} : vector<15x32xf32>, vector<32x96xf32>, vector<15x96xf32> -> vector<15x96xf32>
    %c0_128 = arith.constant 0 : index
    %c0_129 = arith.constant 0 : index
    %c0_130 = arith.constant 0 : index
    %221 = vector.load %arg16[%c0_128, %c0_129, %c0_130] : memref<2x1x96xf32, #tpu.memory_space<vmem>>, vector<1x1x96xf32>
    %222 = vector.shape_cast %221 : vector<1x1x96xf32> to vector<1x96xf32>
    %223 = vector.broadcast %222 : vector<1x96xf32> to vector<15x96xf32>
    %224 = arith.addf %220, %223 : vector<15x96xf32>
    %225 = vector.extract_strided_slice %224 {offsets = [0, 0], sizes = [15, 16], strides = [1, 1]} : vector<15x96xf32> to vector<15x16xf32>
    %cst_131 = arith.constant 2.500000e-01 : f32
    %226 = vector.broadcast %cst_131 : f32 to vector<15x16xf32>
    %227 = arith.mulf %225, %226 : vector<15x16xf32>
    %228 = vector.extract_strided_slice %224 {offsets = [0, 16], sizes = [15, 16], strides = [1, 1]} : vector<15x96xf32> to vector<15x16xf32>
    %229 = vector.extract_strided_slice %224 {offsets = [0, 32], sizes = [15, 16], strides = [1, 1]} : vector<15x96xf32> to vector<15x16xf32>
    %cst_132 = arith.constant dense<0.000000e+00> : vector<15x15xf32>
    %230 = tpu.matmul %227, %228, %cst_132 {dimension_numbers = #tpu.dot_dimension_numbers<[1], [1], [0], [0], [0, 0, 1, 0], [], []>} : vector<15x16xf32>, vector<15x16xf32>, vector<15x15xf32> -> vector<15x15xf32>
    %cst_133 = arith.constant dense<0xFF800000> : vector<15xf32>
    %231 = vector.multi_reduction <maximumf>, %230, %cst_133 [1] : vector<15x15xf32> to vector<15xf32>
    %232 = vector.shape_cast %231 : vector<15xf32> to vector<15x1xf32>
    %233 = vector.broadcast %232 : vector<15x1xf32> to vector<15x15xf32>
    %234 = arith.subf %230, %233 : vector<15x15xf32>
    %235 = math.exp %234 : vector<15x15xf32>
    %cst_134 = arith.constant dense<0.000000e+00> : vector<15xf32>
    %236 = vector.multi_reduction <add>, %235, %cst_134 [1] : vector<15x15xf32> to vector<15xf32>
    %237 = vector.shape_cast %236 : vector<15xf32> to vector<15x1xf32>
    %238 = vector.broadcast %237 : vector<15x1xf32> to vector<15x15xf32>
    %239 = arith.divf %235, %238 : vector<15x15xf32>
    %cst_135 = arith.constant dense<0.000000e+00> : vector<15x16xf32>
    %240 = tpu.matmul %239, %229, %cst_135 {dimension_numbers = #tpu.dot_dimension_numbers<[1], [0], [0], [1], [0, 0, 1, 1], [], []>} : vector<15x15xf32>, vector<15x16xf32>, vector<15x16xf32> -> vector<15x16xf32>
    %241 = vector.extract_strided_slice %224 {offsets = [0, 48], sizes = [15, 16], strides = [1, 1]} : vector<15x96xf32> to vector<15x16xf32>
    %cst_136 = arith.constant 2.500000e-01 : f32
    %242 = vector.broadcast %cst_136 : f32 to vector<15x16xf32>
    %243 = arith.mulf %241, %242 : vector<15x16xf32>
    %244 = vector.extract_strided_slice %224 {offsets = [0, 64], sizes = [15, 16], strides = [1, 1]} : vector<15x96xf32> to vector<15x16xf32>
    %245 = vector.extract_strided_slice %224 {offsets = [0, 80], sizes = [15, 16], strides = [1, 1]} : vector<15x96xf32> to vector<15x16xf32>
    %cst_137 = arith.constant dense<0.000000e+00> : vector<15x15xf32>
    %246 = tpu.matmul %243, %244, %cst_137 {dimension_numbers = #tpu.dot_dimension_numbers<[1], [1], [0], [0], [0, 0, 1, 0], [], []>} : vector<15x16xf32>, vector<15x16xf32>, vector<15x15xf32> -> vector<15x15xf32>
    %cst_138 = arith.constant dense<0xFF800000> : vector<15xf32>
    %247 = vector.multi_reduction <maximumf>, %246, %cst_138 [1] : vector<15x15xf32> to vector<15xf32>
    %248 = vector.shape_cast %247 : vector<15xf32> to vector<15x1xf32>
    %249 = vector.broadcast %248 : vector<15x1xf32> to vector<15x15xf32>
    %250 = arith.subf %246, %249 : vector<15x15xf32>
    %251 = math.exp %250 : vector<15x15xf32>
    %cst_139 = arith.constant dense<0.000000e+00> : vector<15xf32>
    %252 = vector.multi_reduction <add>, %251, %cst_139 [1] : vector<15x15xf32> to vector<15xf32>
    %253 = vector.shape_cast %252 : vector<15xf32> to vector<15x1xf32>
    %254 = vector.broadcast %253 : vector<15x1xf32> to vector<15x15xf32>
    %255 = arith.divf %251, %254 : vector<15x15xf32>
    %cst_140 = arith.constant dense<0.000000e+00> : vector<15x16xf32>
    %256 = tpu.matmul %255, %245, %cst_140 {dimension_numbers = #tpu.dot_dimension_numbers<[1], [0], [0], [1], [0, 0, 1, 1], [], []>} : vector<15x15xf32>, vector<15x16xf32>, vector<15x16xf32> -> vector<15x16xf32>
    %257 = tpu.concatenate %240, %256 in 1 : vector<15x16xf32>, vector<15x16xf32> -> vector<15x32xf32>
    %c0_141 = arith.constant 0 : index
    %c0_142 = arith.constant 0 : index
    %c0_143 = arith.constant 0 : index
    %258 = vector.load %arg17[%c0_141, %c0_142, %c0_143] : memref<2x32x32xf32, #tpu.memory_space<vmem>>, vector<1x32x32xf32>
    %259 = vector.shape_cast %258 : vector<1x32x32xf32> to vector<32x32xf32>
    %cst_144 = arith.constant dense<0.000000e+00> : vector<15x32xf32>
    %260 = tpu.matmul %257, %259, %cst_144 {dimension_numbers = #tpu.dot_dimension_numbers<[1], [0], [0], [1], [0, 0, 1, 1], [], []>} : vector<15x32xf32>, vector<32x32xf32>, vector<15x32xf32> -> vector<15x32xf32>
    %c0_145 = arith.constant 0 : index
    %c0_146 = arith.constant 0 : index
    %c0_147 = arith.constant 0 : index
    %261 = vector.load %arg18[%c0_145, %c0_146, %c0_147] : memref<2x1x32xf32, #tpu.memory_space<vmem>>, vector<1x1x32xf32>
    %262 = vector.shape_cast %261 : vector<1x1x32xf32> to vector<1x32xf32>
    %263 = vector.broadcast %262 : vector<1x32xf32> to vector<15x32xf32>
    %264 = arith.addf %260, %263 : vector<15x32xf32>
    %265 = arith.addf %217, %264 : vector<15x32xf32>
    %c0_148 = arith.constant 0 : index
    %c0_149 = arith.constant 0 : index
    %c0_150 = arith.constant 0 : index
    %266 = vector.load %arg19[%c0_148, %c0_149, %c0_150] : memref<2x1x32xf32, #tpu.memory_space<vmem>>, vector<1x1x32xf32>
    %267 = vector.shape_cast %266 : vector<1x1x32xf32> to vector<1x32xf32>
    %c0_151 = arith.constant 0 : index
    %c0_152 = arith.constant 0 : index
    %c0_153 = arith.constant 0 : index
    %268 = vector.load %arg20[%c0_151, %c0_152, %c0_153] : memref<2x1x32xf32, #tpu.memory_space<vmem>>, vector<1x1x32xf32>
    %269 = vector.shape_cast %268 : vector<1x1x32xf32> to vector<1x32xf32>
    %cst_154 = arith.constant dense<0.000000e+00> : vector<15xf32>
    %270 = vector.multi_reduction <add>, %265, %cst_154 [1] : vector<15x32xf32> to vector<15xf32>
    %271 = vector.shape_cast %270 : vector<15xf32> to vector<15x1xf32>
    %cst_155 = arith.constant 3.200000e+01 : f32
    %272 = vector.broadcast %cst_155 : f32 to vector<15x1xf32>
    %273 = arith.divf %271, %272 : vector<15x1xf32>
    %274 = vector.broadcast %273 : vector<15x1xf32> to vector<15x32xf32>
    %275 = arith.subf %265, %274 : vector<15x32xf32>
    %276 = arith.mulf %275, %275 : vector<15x32xf32>
    %cst_156 = arith.constant dense<0.000000e+00> : vector<15xf32>
    %277 = vector.multi_reduction <add>, %276, %cst_156 [1] : vector<15x32xf32> to vector<15xf32>
    %278 = vector.shape_cast %277 : vector<15xf32> to vector<15x1xf32>
    %cst_157 = arith.constant 3.200000e+01 : f32
    %279 = vector.broadcast %cst_157 : f32 to vector<15x1xf32>
    %280 = arith.divf %278, %279 : vector<15x1xf32>
    %281 = vector.broadcast %273 : vector<15x1xf32> to vector<15x32xf32>
    %282 = arith.subf %265, %281 : vector<15x32xf32>
    %cst_158 = arith.constant 9.99999974E-6 : f32
    %283 = vector.broadcast %cst_158 : f32 to vector<15x1xf32>
    %284 = arith.addf %280, %283 : vector<15x1xf32>
    %285 = math.rsqrt %284 : vector<15x1xf32>
    %286 = vector.broadcast %285 : vector<15x1xf32> to vector<15x32xf32>
    %287 = arith.mulf %282, %286 : vector<15x32xf32>
    %288 = vector.broadcast %267 : vector<1x32xf32> to vector<15x32xf32>
    %289 = arith.mulf %287, %288 : vector<15x32xf32>
    %290 = vector.broadcast %269 : vector<1x32xf32> to vector<15x32xf32>
    %291 = arith.addf %289, %290 : vector<15x32xf32>
    %c0_159 = arith.constant 0 : index
    %c0_160 = arith.constant 0 : index
    %c0_161 = arith.constant 0 : index
    %292 = vector.load %arg21[%c0_159, %c0_160, %c0_161] : memref<2x32x64xf32, #tpu.memory_space<vmem>>, vector<1x32x64xf32>
    %293 = vector.shape_cast %292 : vector<1x32x64xf32> to vector<32x64xf32>
    %cst_162 = arith.constant dense<0.000000e+00> : vector<15x64xf32>
    %294 = tpu.matmul %291, %293, %cst_162 {dimension_numbers = #tpu.dot_dimension_numbers<[1], [0], [0], [1], [0, 0, 1, 1], [], []>} : vector<15x32xf32>, vector<32x64xf32>, vector<15x64xf32> -> vector<15x64xf32>
    %c0_163 = arith.constant 0 : index
    %c0_164 = arith.constant 0 : index
    %c0_165 = arith.constant 0 : index
    %295 = vector.load %arg22[%c0_163, %c0_164, %c0_165] : memref<2x1x64xf32, #tpu.memory_space<vmem>>, vector<1x1x64xf32>
    %296 = vector.shape_cast %295 : vector<1x1x64xf32> to vector<1x64xf32>
    %297 = vector.broadcast %296 : vector<1x64xf32> to vector<15x64xf32>
    %298 = arith.addf %294, %297 : vector<15x64xf32>
    %cst_166 = arith.constant 5.000000e-01 : f32
    %299 = vector.broadcast %cst_166 : f32 to vector<15x64xf32>
    %300 = arith.mulf %299, %298 : vector<15x64xf32>
    %cst_167 = arith.constant 4.471500e-02 : f32
    %301 = vector.broadcast %cst_167 : f32 to vector<15x64xf32>
    %302 = arith.mulf %301, %298 : vector<15x64xf32>
    %303 = arith.mulf %302, %298 : vector<15x64xf32>
    %304 = arith.mulf %303, %298 : vector<15x64xf32>
    %305 = arith.addf %298, %304 : vector<15x64xf32>
    %cst_168 = arith.constant 0.797884583 : f32
    %306 = vector.broadcast %cst_168 : f32 to vector<15x64xf32>
    %307 = arith.mulf %306, %305 : vector<15x64xf32>
    %308 = math.tanh %307 : vector<15x64xf32>
    %cst_169 = arith.constant 1.000000e+00 : f32
    %309 = vector.broadcast %cst_169 : f32 to vector<15x64xf32>
    %310 = arith.addf %309, %308 : vector<15x64xf32>
    %311 = arith.mulf %300, %310 : vector<15x64xf32>
    %c0_170 = arith.constant 0 : index
    %c0_171 = arith.constant 0 : index
    %c0_172 = arith.constant 0 : index
    %312 = vector.load %arg23[%c0_170, %c0_171, %c0_172] : memref<2x64x32xf32, #tpu.memory_space<vmem>>, vector<1x64x32xf32>
    %313 = vector.shape_cast %312 : vector<1x64x32xf32> to vector<64x32xf32>
    %cst_173 = arith.constant dense<0.000000e+00> : vector<15x32xf32>
    %314 = tpu.matmul %311, %313, %cst_173 {dimension_numbers = #tpu.dot_dimension_numbers<[1], [0], [0], [1], [0, 0, 1, 1], [], []>} : vector<15x64xf32>, vector<64x32xf32>, vector<15x32xf32> -> vector<15x32xf32>
    %c0_174 = arith.constant 0 : index
    %c0_175 = arith.constant 0 : index
    %c0_176 = arith.constant 0 : index
    %315 = vector.load %arg24[%c0_174, %c0_175, %c0_176] : memref<2x1x32xf32, #tpu.memory_space<vmem>>, vector<1x1x32xf32>
    %316 = vector.shape_cast %315 : vector<1x1x32xf32> to vector<1x32xf32>
    %317 = vector.broadcast %316 : vector<1x32xf32> to vector<15x32xf32>
    %318 = arith.addf %314, %317 : vector<15x32xf32>
    %319 = arith.addf %291, %318 : vector<15x32xf32>
    %c0_177 = arith.constant 0 : index
    %c0_178 = arith.constant 0 : index
    %c0_179 = arith.constant 0 : index
    %320 = vector.load %arg25[%c0_177, %c0_178, %c0_179] : memref<2x1x32xf32, #tpu.memory_space<vmem>>, vector<1x1x32xf32>
    %321 = vector.shape_cast %320 : vector<1x1x32xf32> to vector<1x32xf32>
    %c0_180 = arith.constant 0 : index
    %c0_181 = arith.constant 0 : index
    %c0_182 = arith.constant 0 : index
    %322 = vector.load %arg26[%c0_180, %c0_181, %c0_182] : memref<2x1x32xf32, #tpu.memory_space<vmem>>, vector<1x1x32xf32>
    %323 = vector.shape_cast %322 : vector<1x1x32xf32> to vector<1x32xf32>
    %cst_183 = arith.constant dense<0.000000e+00> : vector<15xf32>
    %324 = vector.multi_reduction <add>, %319, %cst_183 [1] : vector<15x32xf32> to vector<15xf32>
    %325 = vector.shape_cast %324 : vector<15xf32> to vector<15x1xf32>
    %cst_184 = arith.constant 3.200000e+01 : f32
    %326 = vector.broadcast %cst_184 : f32 to vector<15x1xf32>
    %327 = arith.divf %325, %326 : vector<15x1xf32>
    %328 = vector.broadcast %327 : vector<15x1xf32> to vector<15x32xf32>
    %329 = arith.subf %319, %328 : vector<15x32xf32>
    %330 = arith.mulf %329, %329 : vector<15x32xf32>
    %cst_185 = arith.constant dense<0.000000e+00> : vector<15xf32>
    %331 = vector.multi_reduction <add>, %330, %cst_185 [1] : vector<15x32xf32> to vector<15xf32>
    %332 = vector.shape_cast %331 : vector<15xf32> to vector<15x1xf32>
    %cst_186 = arith.constant 3.200000e+01 : f32
    %333 = vector.broadcast %cst_186 : f32 to vector<15x1xf32>
    %334 = arith.divf %332, %333 : vector<15x1xf32>
    %335 = vector.broadcast %327 : vector<15x1xf32> to vector<15x32xf32>
    %336 = arith.subf %319, %335 : vector<15x32xf32>
    %cst_187 = arith.constant 9.99999974E-6 : f32
    %337 = vector.broadcast %cst_187 : f32 to vector<15x1xf32>
    %338 = arith.addf %334, %337 : vector<15x1xf32>
    %339 = math.rsqrt %338 : vector<15x1xf32>
    %340 = vector.broadcast %339 : vector<15x1xf32> to vector<15x32xf32>
    %341 = arith.mulf %336, %340 : vector<15x32xf32>
    %342 = vector.broadcast %321 : vector<1x32xf32> to vector<15x32xf32>
    %343 = arith.mulf %341, %342 : vector<15x32xf32>
    %344 = vector.broadcast %323 : vector<1x32xf32> to vector<15x32xf32>
    %345 = arith.addf %343, %344 : vector<15x32xf32>
    %c1_188 = arith.constant 1 : index
    %c0_189 = arith.constant 0 : index
    %c0_190 = arith.constant 0 : index
    %346 = vector.load %arg15[%c1_188, %c0_189, %c0_190] : memref<2x32x96xf32, #tpu.memory_space<vmem>>, vector<1x32x96xf32>
    %347 = vector.shape_cast %346 : vector<1x32x96xf32> to vector<32x96xf32>
    %cst_191 = arith.constant dense<0.000000e+00> : vector<15x96xf32>
    %348 = tpu.matmul %345, %347, %cst_191 {dimension_numbers = #tpu.dot_dimension_numbers<[1], [0], [0], [1], [0, 0, 1, 1], [], []>} : vector<15x32xf32>, vector<32x96xf32>, vector<15x96xf32> -> vector<15x96xf32>
    %c1_192 = arith.constant 1 : index
    %c0_193 = arith.constant 0 : index
    %c0_194 = arith.constant 0 : index
    %349 = vector.load %arg16[%c1_192, %c0_193, %c0_194] : memref<2x1x96xf32, #tpu.memory_space<vmem>>, vector<1x1x96xf32>
    %350 = vector.shape_cast %349 : vector<1x1x96xf32> to vector<1x96xf32>
    %351 = vector.broadcast %350 : vector<1x96xf32> to vector<15x96xf32>
    %352 = arith.addf %348, %351 : vector<15x96xf32>
    %353 = vector.extract_strided_slice %352 {offsets = [0, 0], sizes = [15, 16], strides = [1, 1]} : vector<15x96xf32> to vector<15x16xf32>
    %cst_195 = arith.constant 2.500000e-01 : f32
    %354 = vector.broadcast %cst_195 : f32 to vector<15x16xf32>
    %355 = arith.mulf %353, %354 : vector<15x16xf32>
    %356 = vector.extract_strided_slice %352 {offsets = [0, 16], sizes = [15, 16], strides = [1, 1]} : vector<15x96xf32> to vector<15x16xf32>
    %357 = vector.extract_strided_slice %352 {offsets = [0, 32], sizes = [15, 16], strides = [1, 1]} : vector<15x96xf32> to vector<15x16xf32>
    %cst_196 = arith.constant dense<0.000000e+00> : vector<15x15xf32>
    %358 = tpu.matmul %355, %356, %cst_196 {dimension_numbers = #tpu.dot_dimension_numbers<[1], [1], [0], [0], [0, 0, 1, 0], [], []>} : vector<15x16xf32>, vector<15x16xf32>, vector<15x15xf32> -> vector<15x15xf32>
    %cst_197 = arith.constant dense<0xFF800000> : vector<15xf32>
    %359 = vector.multi_reduction <maximumf>, %358, %cst_197 [1] : vector<15x15xf32> to vector<15xf32>
    %360 = vector.shape_cast %359 : vector<15xf32> to vector<15x1xf32>
    %361 = vector.broadcast %360 : vector<15x1xf32> to vector<15x15xf32>
    %362 = arith.subf %358, %361 : vector<15x15xf32>
    %363 = math.exp %362 : vector<15x15xf32>
    %cst_198 = arith.constant dense<0.000000e+00> : vector<15xf32>
    %364 = vector.multi_reduction <add>, %363, %cst_198 [1] : vector<15x15xf32> to vector<15xf32>
    %365 = vector.shape_cast %364 : vector<15xf32> to vector<15x1xf32>
    %366 = vector.broadcast %365 : vector<15x1xf32> to vector<15x15xf32>
    %367 = arith.divf %363, %366 : vector<15x15xf32>
    %cst_199 = arith.constant dense<0.000000e+00> : vector<15x16xf32>
    %368 = tpu.matmul %367, %357, %cst_199 {dimension_numbers = #tpu.dot_dimension_numbers<[1], [0], [0], [1], [0, 0, 1, 1], [], []>} : vector<15x15xf32>, vector<15x16xf32>, vector<15x16xf32> -> vector<15x16xf32>
    %369 = vector.extract_strided_slice %352 {offsets = [0, 48], sizes = [15, 16], strides = [1, 1]} : vector<15x96xf32> to vector<15x16xf32>
    %cst_200 = arith.constant 2.500000e-01 : f32
    %370 = vector.broadcast %cst_200 : f32 to vector<15x16xf32>
    %371 = arith.mulf %369, %370 : vector<15x16xf32>
    %372 = vector.extract_strided_slice %352 {offsets = [0, 64], sizes = [15, 16], strides = [1, 1]} : vector<15x96xf32> to vector<15x16xf32>
    %373 = vector.extract_strided_slice %352 {offsets = [0, 80], sizes = [15, 16], strides = [1, 1]} : vector<15x96xf32> to vector<15x16xf32>
    %cst_201 = arith.constant dense<0.000000e+00> : vector<15x15xf32>
    %374 = tpu.matmul %371, %372, %cst_201 {dimension_numbers = #tpu.dot_dimension_numbers<[1], [1], [0], [0], [0, 0, 1, 0], [], []>} : vector<15x16xf32>, vector<15x16xf32>, vector<15x15xf32> -> vector<15x15xf32>
    %cst_202 = arith.constant dense<0xFF800000> : vector<15xf32>
    %375 = vector.multi_reduction <maximumf>, %374, %cst_202 [1] : vector<15x15xf32> to vector<15xf32>
    %376 = vector.shape_cast %375 : vector<15xf32> to vector<15x1xf32>
    %377 = vector.broadcast %376 : vector<15x1xf32> to vector<15x15xf32>
    %378 = arith.subf %374, %377 : vector<15x15xf32>
    %379 = math.exp %378 : vector<15x15xf32>
    %cst_203 = arith.constant dense<0.000000e+00> : vector<15xf32>
    %380 = vector.multi_reduction <add>, %379, %cst_203 [1] : vector<15x15xf32> to vector<15xf32>
    %381 = vector.shape_cast %380 : vector<15xf32> to vector<15x1xf32>
    %382 = vector.broadcast %381 : vector<15x1xf32> to vector<15x15xf32>
    %383 = arith.divf %379, %382 : vector<15x15xf32>
    %cst_204 = arith.constant dense<0.000000e+00> : vector<15x16xf32>
    %384 = tpu.matmul %383, %373, %cst_204 {dimension_numbers = #tpu.dot_dimension_numbers<[1], [0], [0], [1], [0, 0, 1, 1], [], []>} : vector<15x15xf32>, vector<15x16xf32>, vector<15x16xf32> -> vector<15x16xf32>
    %385 = tpu.concatenate %368, %384 in 1 : vector<15x16xf32>, vector<15x16xf32> -> vector<15x32xf32>
    %c1_205 = arith.constant 1 : index
    %c0_206 = arith.constant 0 : index
    %c0_207 = arith.constant 0 : index
    %386 = vector.load %arg17[%c1_205, %c0_206, %c0_207] : memref<2x32x32xf32, #tpu.memory_space<vmem>>, vector<1x32x32xf32>
    %387 = vector.shape_cast %386 : vector<1x32x32xf32> to vector<32x32xf32>
    %cst_208 = arith.constant dense<0.000000e+00> : vector<15x32xf32>
    %388 = tpu.matmul %385, %387, %cst_208 {dimension_numbers = #tpu.dot_dimension_numbers<[1], [0], [0], [1], [0, 0, 1, 1], [], []>} : vector<15x32xf32>, vector<32x32xf32>, vector<15x32xf32> -> vector<15x32xf32>
    %c1_209 = arith.constant 1 : index
    %c0_210 = arith.constant 0 : index
    %c0_211 = arith.constant 0 : index
    %389 = vector.load %arg18[%c1_209, %c0_210, %c0_211] : memref<2x1x32xf32, #tpu.memory_space<vmem>>, vector<1x1x32xf32>
    %390 = vector.shape_cast %389 : vector<1x1x32xf32> to vector<1x32xf32>
    %391 = vector.broadcast %390 : vector<1x32xf32> to vector<15x32xf32>
    %392 = arith.addf %388, %391 : vector<15x32xf32>
    %393 = arith.addf %345, %392 : vector<15x32xf32>
    %c1_212 = arith.constant 1 : index
    %c0_213 = arith.constant 0 : index
    %c0_214 = arith.constant 0 : index
    %394 = vector.load %arg19[%c1_212, %c0_213, %c0_214] : memref<2x1x32xf32, #tpu.memory_space<vmem>>, vector<1x1x32xf32>
    %395 = vector.shape_cast %394 : vector<1x1x32xf32> to vector<1x32xf32>
    %c1_215 = arith.constant 1 : index
    %c0_216 = arith.constant 0 : index
    %c0_217 = arith.constant 0 : index
    %396 = vector.load %arg20[%c1_215, %c0_216, %c0_217] : memref<2x1x32xf32, #tpu.memory_space<vmem>>, vector<1x1x32xf32>
    %397 = vector.shape_cast %396 : vector<1x1x32xf32> to vector<1x32xf32>
    %cst_218 = arith.constant dense<0.000000e+00> : vector<15xf32>
    %398 = vector.multi_reduction <add>, %393, %cst_218 [1] : vector<15x32xf32> to vector<15xf32>
    %399 = vector.shape_cast %398 : vector<15xf32> to vector<15x1xf32>
    %cst_219 = arith.constant 3.200000e+01 : f32
    %400 = vector.broadcast %cst_219 : f32 to vector<15x1xf32>
    %401 = arith.divf %399, %400 : vector<15x1xf32>
    %402 = vector.broadcast %401 : vector<15x1xf32> to vector<15x32xf32>
    %403 = arith.subf %393, %402 : vector<15x32xf32>
    %404 = arith.mulf %403, %403 : vector<15x32xf32>
    %cst_220 = arith.constant dense<0.000000e+00> : vector<15xf32>
    %405 = vector.multi_reduction <add>, %404, %cst_220 [1] : vector<15x32xf32> to vector<15xf32>
    %406 = vector.shape_cast %405 : vector<15xf32> to vector<15x1xf32>
    %cst_221 = arith.constant 3.200000e+01 : f32
    %407 = vector.broadcast %cst_221 : f32 to vector<15x1xf32>
    %408 = arith.divf %406, %407 : vector<15x1xf32>
    %409 = vector.broadcast %401 : vector<15x1xf32> to vector<15x32xf32>
    %410 = arith.subf %393, %409 : vector<15x32xf32>
    %cst_222 = arith.constant 9.99999974E-6 : f32
    %411 = vector.broadcast %cst_222 : f32 to vector<15x1xf32>
    %412 = arith.addf %408, %411 : vector<15x1xf32>
    %413 = math.rsqrt %412 : vector<15x1xf32>
    %414 = vector.broadcast %413 : vector<15x1xf32> to vector<15x32xf32>
    %415 = arith.mulf %410, %414 : vector<15x32xf32>
    %416 = vector.broadcast %395 : vector<1x32xf32> to vector<15x32xf32>
    %417 = arith.mulf %415, %416 : vector<15x32xf32>
    %418 = vector.broadcast %397 : vector<1x32xf32> to vector<15x32xf32>
    %419 = arith.addf %417, %418 : vector<15x32xf32>
    %c1_223 = arith.constant 1 : index
    %c0_224 = arith.constant 0 : index
    %c0_225 = arith.constant 0 : index
    %420 = vector.load %arg21[%c1_223, %c0_224, %c0_225] : memref<2x32x64xf32, #tpu.memory_space<vmem>>, vector<1x32x64xf32>
    %421 = vector.shape_cast %420 : vector<1x32x64xf32> to vector<32x64xf32>
    %cst_226 = arith.constant dense<0.000000e+00> : vector<15x64xf32>
    %422 = tpu.matmul %419, %421, %cst_226 {dimension_numbers = #tpu.dot_dimension_numbers<[1], [0], [0], [1], [0, 0, 1, 1], [], []>} : vector<15x32xf32>, vector<32x64xf32>, vector<15x64xf32> -> vector<15x64xf32>
    %c1_227 = arith.constant 1 : index
    %c0_228 = arith.constant 0 : index
    %c0_229 = arith.constant 0 : index
    %423 = vector.load %arg22[%c1_227, %c0_228, %c0_229] : memref<2x1x64xf32, #tpu.memory_space<vmem>>, vector<1x1x64xf32>
    %424 = vector.shape_cast %423 : vector<1x1x64xf32> to vector<1x64xf32>
    %425 = vector.broadcast %424 : vector<1x64xf32> to vector<15x64xf32>
    %426 = arith.addf %422, %425 : vector<15x64xf32>
    %cst_230 = arith.constant 5.000000e-01 : f32
    %427 = vector.broadcast %cst_230 : f32 to vector<15x64xf32>
    %428 = arith.mulf %427, %426 : vector<15x64xf32>
    %cst_231 = arith.constant 4.471500e-02 : f32
    %429 = vector.broadcast %cst_231 : f32 to vector<15x64xf32>
    %430 = arith.mulf %429, %426 : vector<15x64xf32>
    %431 = arith.mulf %430, %426 : vector<15x64xf32>
    %432 = arith.mulf %431, %426 : vector<15x64xf32>
    %433 = arith.addf %426, %432 : vector<15x64xf32>
    %cst_232 = arith.constant 0.797884583 : f32
    %434 = vector.broadcast %cst_232 : f32 to vector<15x64xf32>
    %435 = arith.mulf %434, %433 : vector<15x64xf32>
    %436 = math.tanh %435 : vector<15x64xf32>
    %cst_233 = arith.constant 1.000000e+00 : f32
    %437 = vector.broadcast %cst_233 : f32 to vector<15x64xf32>
    %438 = arith.addf %437, %436 : vector<15x64xf32>
    %439 = arith.mulf %428, %438 : vector<15x64xf32>
    %c1_234 = arith.constant 1 : index
    %c0_235 = arith.constant 0 : index
    %c0_236 = arith.constant 0 : index
    %440 = vector.load %arg23[%c1_234, %c0_235, %c0_236] : memref<2x64x32xf32, #tpu.memory_space<vmem>>, vector<1x64x32xf32>
    %441 = vector.shape_cast %440 : vector<1x64x32xf32> to vector<64x32xf32>
    %cst_237 = arith.constant dense<0.000000e+00> : vector<15x32xf32>
    %442 = tpu.matmul %439, %441, %cst_237 {dimension_numbers = #tpu.dot_dimension_numbers<[1], [0], [0], [1], [0, 0, 1, 1], [], []>} : vector<15x64xf32>, vector<64x32xf32>, vector<15x32xf32> -> vector<15x32xf32>
    %c1_238 = arith.constant 1 : index
    %c0_239 = arith.constant 0 : index
    %c0_240 = arith.constant 0 : index
    %443 = vector.load %arg24[%c1_238, %c0_239, %c0_240] : memref<2x1x32xf32, #tpu.memory_space<vmem>>, vector<1x1x32xf32>
    %444 = vector.shape_cast %443 : vector<1x1x32xf32> to vector<1x32xf32>
    %445 = vector.broadcast %444 : vector<1x32xf32> to vector<15x32xf32>
    %446 = arith.addf %442, %445 : vector<15x32xf32>
    %447 = arith.addf %419, %446 : vector<15x32xf32>
    %c1_241 = arith.constant 1 : index
    %c0_242 = arith.constant 0 : index
    %c0_243 = arith.constant 0 : index
    %448 = vector.load %arg25[%c1_241, %c0_242, %c0_243] : memref<2x1x32xf32, #tpu.memory_space<vmem>>, vector<1x1x32xf32>
    %449 = vector.shape_cast %448 : vector<1x1x32xf32> to vector<1x32xf32>
    %c1_244 = arith.constant 1 : index
    %c0_245 = arith.constant 0 : index
    %c0_246 = arith.constant 0 : index
    %450 = vector.load %arg26[%c1_244, %c0_245, %c0_246] : memref<2x1x32xf32, #tpu.memory_space<vmem>>, vector<1x1x32xf32>
    %451 = vector.shape_cast %450 : vector<1x1x32xf32> to vector<1x32xf32>
    %cst_247 = arith.constant dense<0.000000e+00> : vector<15xf32>
    %452 = vector.multi_reduction <add>, %447, %cst_247 [1] : vector<15x32xf32> to vector<15xf32>
    %453 = vector.shape_cast %452 : vector<15xf32> to vector<15x1xf32>
    %cst_248 = arith.constant 3.200000e+01 : f32
    %454 = vector.broadcast %cst_248 : f32 to vector<15x1xf32>
    %455 = arith.divf %453, %454 : vector<15x1xf32>
    %456 = vector.broadcast %455 : vector<15x1xf32> to vector<15x32xf32>
    %457 = arith.subf %447, %456 : vector<15x32xf32>
    %458 = arith.mulf %457, %457 : vector<15x32xf32>
    %cst_249 = arith.constant dense<0.000000e+00> : vector<15xf32>
    %459 = vector.multi_reduction <add>, %458, %cst_249 [1] : vector<15x32xf32> to vector<15xf32>
    %460 = vector.shape_cast %459 : vector<15xf32> to vector<15x1xf32>
    %cst_250 = arith.constant 3.200000e+01 : f32
    %461 = vector.broadcast %cst_250 : f32 to vector<15x1xf32>
    %462 = arith.divf %460, %461 : vector<15x1xf32>
    %463 = vector.broadcast %455 : vector<15x1xf32> to vector<15x32xf32>
    %464 = arith.subf %447, %463 : vector<15x32xf32>
    %cst_251 = arith.constant 9.99999974E-6 : f32
    %465 = vector.broadcast %cst_251 : f32 to vector<15x1xf32>
    %466 = arith.addf %462, %465 : vector<15x1xf32>
    %467 = math.rsqrt %466 : vector<15x1xf32>
    %468 = vector.broadcast %467 : vector<15x1xf32> to vector<15x32xf32>
    %469 = arith.mulf %464, %468 : vector<15x32xf32>
    %470 = vector.broadcast %449 : vector<1x32xf32> to vector<15x32xf32>
    %471 = arith.mulf %469, %470 : vector<15x32xf32>
    %472 = vector.broadcast %451 : vector<1x32xf32> to vector<15x32xf32>
    %473 = arith.addf %471, %472 : vector<15x32xf32>
    %c0_252 = arith.constant 0 : index
    %c0_253 = arith.constant 0 : index
    %c0_254 = arith.constant 0 : index
    %474 = vector.load %arg27[%c0_252, %c0_253, %c0_254] : memref<1x15x32xf32, #tpu.memory_space<vmem>>, vector<1x15x32xf32>
    %475 = vector.shape_cast %474 : vector<1x15x32xf32> to vector<15x32xf32>
    %476 = vector.shape_cast %473 : vector<15x32xf32> to vector<1x15x32xf32>
    tpu.vector_store %arg27[%c0_252, %c0_253, %c0_254], %476 {strides = array<i32>} : memref<1x15x32xf32, #tpu.memory_space<vmem>>, vector<1x15x32xf32>,
    return
  }
  func.func @transform_0(%arg0: i32) -> (i32, i32, i32) {
    %c0_i32 = arith.constant 0 : i32
    %c0_i32_0 = arith.constant 0 : i32
    %c0_i32_1 = arith.constant 0 : i32
    return %arg0, %c0_i32, %c0_i32_0 : i32, i32, i32
  }
  func.func @transform_1(%arg0: i32) -> (i32, i32, i32) {
    %c0_i32 = arith.constant 0 : i32
    %c0_i32_0 = arith.constant 0 : i32
    %c0_i32_1 = arith.constant 0 : i32
    %c0_i32_2 = arith.constant 0 : i32
    return %c0_i32, %c0_i32_0, %c0_i32_1 : i32, i32, i32
  }
  func.func @transform_2(%arg0: i32) -> (i32, i32, i32) {
    %c0_i32 = arith.constant 0 : i32
    %c0_i32_0 = arith.constant 0 : i32
    %c0_i32_1 = arith.constant 0 : i32
    %c0_i32_2 = arith.constant 0 : i32
    return %c0_i32, %c0_i32_0, %c0_i32_1 : i32, i32, i32
  }
  func.func @transform_3(%arg0: i32) -> (i32, i32, i32) {
    %c0_i32 = arith.constant 0 : i32
    %c0_i32_0 = arith.constant 0 : i32
    %c0_i32_1 = arith.constant 0 : i32
    %c0_i32_2 = arith.constant 0 : i32
    return %c0_i32, %c0_i32_0, %c0_i32_1 : i32, i32, i32
  }
  func.func @transform_4(%arg0: i32) -> (i32, i32) {
    %c0_i32 = arith.constant 0 : i32
    %c0_i32_0 = arith.constant 0 : i32
    %c0_i32_1 = arith.constant 0 : i32
    return %c0_i32, %c0_i32_0 : i32, i32
  }
  func.func @transform_5(%arg0: i32) -> (i32, i32) {
    %c0_i32 = arith.constant 0 : i32
    %c0_i32_0 = arith.constant 0 : i32
    %c0_i32_1 = arith.constant 0 : i32
    return %c0_i32, %c0_i32_0 : i32, i32
  }
  func.func @transform_6(%arg0: i32) -> (i32, i32) {
    %c0_i32 = arith.constant 0 : i32
    %c0_i32_0 = arith.constant 0 : i32
    %c0_i32_1 = arith.constant 0 : i32
    return %c0_i32, %c0_i32_0 : i32, i32
  }
  func.func @transform_7(%arg0: i32) -> (i32, i32) {
    %c0_i32 = arith.constant 0 : i32
    %c0_i32_0 = arith.constant 0 : i32
    %c0_i32_1 = arith.constant 0 : i32
    return %c0_i32, %c0_i32_0 : i32, i32
  }
  func.func @transform_8(%arg0: i32) -> (i32, i32) {
    %c0_i32 = arith.constant 0 : i32
    %c0_i32_0 = arith.constant 0 : i32
    %c0_i32_1 = arith.constant 0 : i32
    return %c0_i32, %c0_i32_0 : i32, i32
  }
  func.func @transform_9(%arg0: i32) -> (i32, i32) {
    %c0_i32 = arith.constant 0 : i32
    %c0_i32_0 = arith.constant 0 : i32
    %c0_i32_1 = arith.constant 0 : i32
    return %c0_i32, %c0_i32_0 : i32, i32
  }
  func.func @transform_10(%arg0: i32) -> (i32, i32, i32) {
    %c0_i32 = arith.constant 0 : i32
    %c0_i32_0 = arith.constant 0 : i32
    %c0_i32_1 = arith.constant 0 : i32
    %c0_i32_2 = arith.constant 0 : i32
    return %c0_i32, %c0_i32_0, %c0_i32_1 : i32, i32, i32
  }
  func.func @transform_11(%arg0: i32) -> (i32, i32) {
    %c0_i32 = arith.constant 0 : i32
    %c0_i32_0 = arith.constant 0 : i32
    %c0_i32_1 = arith.constant 0 : i32
    return %c0_i32, %c0_i32_0 : i32, i32
  }
  func.func @transform_12(%arg0: i32) -> (i32, i32) {
    %c0_i32 = arith.constant 0 : i32
    %c0_i32_0 = arith.constant 0 : i32
    %c0_i32_1 = arith.constant 0 : i32
    return %c0_i32, %c0_i32_0 : i32, i32
  }
  func.func @transform_13(%arg0: i32) -> (i32, i32) {
    %c0_i32 = arith.constant 0 : i32
    %c0_i32_0 = arith.constant 0 : i32
    %c0_i32_1 = arith.constant 0 : i32
    return %c0_i32, %c0_i32_0 : i32, i32
  }
  func.func @transform_14(%arg0: i32) -> (i32, i32, i32) {
    %c0_i32 = arith.constant 0 : i32
    %c0_i32_0 = arith.constant 0 : i32
    %c0_i32_1 = arith.constant 0 : i32
    %c0_i32_2 = arith.constant 0 : i32
    return %c0_i32, %c0_i32_0, %c0_i32_1 : i32, i32, i32
  }
  func.func @transform_15(%arg0: i32) -> (i32, i32, i32) {
    %c0_i32 = arith.constant 0 : i32
    %c0_i32_0 = arith.constant 0 : i32
    %c0_i32_1 = arith.constant 0 : i32
    %c0_i32_2 = arith.constant 0 : i32
    return %c0_i32, %c0_i32_0, %c0_i32_1 : i32, i32, i32
  }
  func.func @transform_16(%arg0: i32) -> (i32, i32, i32) {
    %c0_i32 = arith.constant 0 : i32
    %c0_i32_0 = arith.constant 0 : i32
    %c0_i32_1 = arith.constant 0 : i32
    %c0_i32_2 = arith.constant 0 : i32
    return %c0_i32, %c0_i32_0, %c0_i32_1 : i32, i32, i32
  }
  func.func @transform_17(%arg0: i32) -> (i32, i32, i32) {
    %c0_i32 = arith.constant 0 : i32
    %c0_i32_0 = arith.constant 0 : i32
    %c0_i32_1 = arith.constant 0 : i32
    %c0_i32_2 = arith.constant 0 : i32
    return %c0_i32, %c0_i32_0, %c0_i32_1 : i32, i32, i32
  }
  func.func @transform_18(%arg0: i32) -> (i32, i32, i32) {
    %c0_i32 = arith.constant 0 : i32
    %c0_i32_0 = arith.constant 0 : i32
    %c0_i32_1 = arith.constant 0 : i32
    %c0_i32_2 = arith.constant 0 : i32
    return %c0_i32, %c0_i32_0, %c0_i32_1 : i32, i32, i32
  }
  func.func @transform_19(%arg0: i32) -> (i32, i32, i32) {
    %c0_i32 = arith.constant 0 : i32
    %c0_i32_0 = arith.constant 0 : i32
    %c0_i32_1 = arith.constant 0 : i32
    %c0_i32_2 = arith.constant 0 : i32
    return %c0_i32, %c0_i32_0, %c0_i32_1 : i32, i32, i32
  }
  func.func @transform_20(%arg0: i32) -> (i32, i32, i32) {
    %c0_i32 = arith.constant 0 : i32
    %c0_i32_0 = arith.constant 0 : i32
    %c0_i32_1 = arith.constant 0 : i32
    %c0_i32_2 = arith.constant 0 : i32
    return %c0_i32, %c0_i32_0, %c0_i32_1 : i32, i32, i32
  }
  func.func @transform_21(%arg0: i32) -> (i32, i32, i32) {
    %c0_i32 = arith.constant 0 : i32
    %c0_i32_0 = arith.constant 0 : i32
    %c0_i32_1 = arith.constant 0 : i32
    %c0_i32_2 = arith.constant 0 : i32
    return %c0_i32, %c0_i32_0, %c0_i32_1 : i32, i32, i32
  }
  func.func @transform_22(%arg0: i32) -> (i32, i32, i32) {
    %c0_i32 = arith.constant 0 : i32
    %c0_i32_0 = arith.constant 0 : i32
    %c0_i32_1 = arith.constant 0 : i32
    %c0_i32_2 = arith.constant 0 : i32
    return %c0_i32, %c0_i32_0, %c0_i32_1 : i32, i32, i32
  }
  func.func @transform_23(%arg0: i32) -> (i32, i32, i32) {
    %c0_i32 = arith.constant 0 : i32
    %c0_i32_0 = arith.constant 0 : i32
    %c0_i32_1 = arith.constant 0 : i32
    %c0_i32_2 = arith.constant 0 : i32
    return %c0_i32, %c0_i32_0, %c0_i32_1 : i32, i32, i32
  }
  func.func @transform_24(%arg0: i32) -> (i32, i32, i32) {
    %c0_i32 = arith.constant 0 : i32
    %c0_i32_0 = arith.constant 0 : i32
    %c0_i32_1 = arith.constant 0 : i32
    %c0_i32_2 = arith.constant 0 : i32
    return %c0_i32, %c0_i32_0, %c0_i32_1 : i32, i32, i32
  }
  func.func @transform_25(%arg0: i32) -> (i32, i32, i32) {
    %c0_i32 = arith.constant 0 : i32
    %c0_i32_0 = arith.constant 0 : i32
    %c0_i32_1 = arith.constant 0 : i32
    %c0_i32_2 = arith.constant 0 : i32
    return %c0_i32, %c0_i32_0, %c0_i32_1 : i32, i32, i32
  }
  func.func @transform_26(%arg0: i32) -> (i32, i32, i32) {
    %c0_i32 = arith.constant 0 : i32
    %c0_i32_0 = arith.constant 0 : i32
    %c0_i32_1 = arith.constant 0 : i32
    return %arg0, %c0_i32, %c0_i32_0 : i32, i32, i32
  }
}

</mosaic_0001>

<llo_original>
// kernel: cnhubert_forward.1
$region0: #{cnhubert_forward.1}
  #allocation0 [shape = 'u32[]', space=smem, size = 0x4, offset = 0x4, fixed_abs, tag = 'smem constant byte address 0x4 - core index']
  #allocation1 [shape = 'u32[72,128]{1,0:T(1,128)}', space=vmem, size = 0x9000, scoped, tag = 'internal scratch']
  #allocation2 [shape = 'f32[63,16]{1,0:T(8,128)}', space=vmem, size = 0x8000, scoped, tag = 'scratch operand']
  #allocation3 [shape = 'f32[31,16]{1,0:T(8,128)}', space=vmem, size = 0x4000, scoped, tag = 'scratch operand']
  #allocation4 [shape = 'f32[27,32]{1,0:T(8,128)}', space=vmem, size = 0x4000, scoped, tag = 'scratch operand']
  %s0 = inlined_call_operand.vmem [shape: f32[2,64,5], index: 0, kind: input, shape index: {}]
  %s1 = inlined_call_operand.vmem [shape: f32[2,5,16], index: 1, kind: input, shape index: {}]
  %s2 = inlined_call_operand.hbm [shape: f32[3,16,16], index: 2, kind: input, shape index: {}]
  %s3 = inlined_call_operand.hbm [shape: f32[2,16,16], index: 3, kind: input, shape index: {}]
  %s4 = inlined_call_operand.vmem [shape: f32[1,16], index: 4, kind: input, shape index: {}]
  %s5 = inlined_call_operand.vmem [shape: f32[1,16], index: 5, kind: input, shape index: {}]
  %s6 = inlined_call_operand.vmem [shape: f32[1,16], index: 6, kind: input, shape index: {}]
  %s7 = inlined_call_operand.hbm [shape: f32[1,16], index: 7, kind: input, shape index: {}]
  %s8 = inlined_call_operand.vmem [shape: f32[16,32], index: 8, kind: input, shape index: {}]
  %s9 = inlined_call_operand.hbm [shape: f32[1,32], index: 9, kind: input, shape index: {}]
  %s10 = inlined_call_operand.vmem [shape: f32[4,32,32], index: 10, kind: input, shape index: {}]
  %s11 = inlined_call_operand.vmem [shape: f32[1,32], index: 11, kind: input, shape index: {}]
  %s12 = inlined_call_operand.hbm [shape: f32[1,32], index: 12, kind: input, shape index: {}]
  %s13 = inlined_call_operand.hbm [shape: f32[1,32], index: 13, kind: input, shape index: {}]
  %s14 = inlined_call_operand.vmem [shape: f32[2,32,96], index: 14, kind: input, shape index: {}]
  %s15 = inlined_call_operand.vmem [shape: f32[2,1,96], index: 15, kind: input, shape index: {}]
  %s16 = inlined_call_operand.vmem [shape: f32[2,32,32], index: 16, kind: input, shape index: {}]
  %s17 = inlined_call_operand.vmem [shape: f32[2,1,32], index: 17, kind: input, shape index: {}]
  %s18 = inlined_call_operand.vmem [shape: f32[2,1,32], index: 18, kind: input, shape index: {}]
  %s19 = inlined_call_operand.vmem [shape: f32[2,1,32], index: 19, kind: input, shape index: {}]
  %s20 = inlined_call_operand.hbm [shape: f32[2,32,64], index: 20, kind: input, shape index: {}]
  %s21 = inlined_call_operand.vmem [shape: f32[2,1,64], index: 21, kind: input, shape index: {}]
  %s22 = inlined_call_operand.vmem [shape: f32[2,64,32], index: 22, kind: input, shape index: {}]
  %s23 = inlined_call_operand.hbm [shape: f32[2,1,32], index: 23, kind: input, shape index: {}]
  %s24 = inlined_call_operand.vmem [shape: f32[2,1,32], index: 24, kind: input, shape index: {}]
  %s25 = inlined_call_operand.vmem [shape: f32[2,1,32], index: 25, kind: input, shape index: {}]
  %s26 = inlined_call_operand.vmem [shape: f32[2,15,32], index: 26, kind: output, shape index: {}]
  %s27 = sld [smem:[#allocation0]]
  $region169: #{cnhubert_forward.1} parent=0
    _
  %s29 = ssub.s32 1, %s27
  %s30 = scalar_select 0, %s29, %s27
  $region1: #{cnhubert_forward.1} parent=0
    #allocation5 [shape = 'u8[24576]{0}', space=vmem, size = 0x6000, scoped, tag = 'input window, operand 2, single buffered']
    #allocation6 [shape = 's32[2]{0}', space=sflag, size = 0x8, scoped, tag = 'scoped memory for cnhubert_forward.1']
    #allocation7 [shape = 'u8[16384]{0}', space=vmem, size = 0x4000, scoped, tag = 'input window, operand 3, single buffered']
    #allocation8 [shape = 's32[1]{0}', space=sflag, size = 0x4, scoped, tag = 'scoped memory for cnhubert_forward.1']
    #allocation9 [shape = 'u8[512]{0}', space=vmem, size = 0x400, scoped, tag = 'input window, operand 7, single buffered']
    #allocation10 [shape = 'u8[512]{0}', space=vmem, size = 0x400, scoped, tag = 'input window, operand 9, single buffered']
    #allocation11 [shape = 's32[1]{0}', space=sflag, size = 0x4, scoped, tag = 'scoped memory for cnhubert_forward.1']
    #allocation12 [shape = 'u8[512]{0}', space=vmem, size = 0x400, scoped, tag = 'input window, operand 12, single buffered']
    #allocation13 [shape = 'u8[512]{0}', space=vmem, size = 0x400, scoped, tag = 'input window, operand 13, single buffered']
    #allocation14 [shape = 's32[1]{0}', space=sflag, size = 0x4, scoped, tag = 'scoped memory for cnhubert_forward.1']
    #allocation15 [shape = 'u8[32768]{0}', space=vmem, size = 0x8000, scoped, tag = 'input window, operand 20, single buffered']
    #allocation16 [shape = 'u8[1024]{0}', space=vmem, size = 0x400, scoped, tag = 'input window, operand 23, single buffered']
    #allocation17 [shape = 's32[1]{0}', space=sflag, size = 0x4, scoped, tag = 'scoped memory for cnhubert_forward.1']
    %31 = vsyncpa [#allocation6], 0
    %32 = vsyncpa [#allocation8], 0
    %33 = vsyncpa [#allocation11], 0
    %34 = vsyncpa [#allocation14], 0
    %35 = vsyncpa [#allocation17], 0
    loop: start=0, step=1, limit=4
    $region2: #{cnhubert_forward.1} parent=1 // loop_pre_header
      _
    $region3: #{cnhubert_forward.1} parent=1 // loop_header
      %s37 = sphi 0, %s41
      %p38 = scmp.ge.s32.totalorder %s37, 4
      %s47 = sphi 0, %s49
      %s50 = sphi 0, %s47
      %s51 = sphi 0, %s50
      %s67 = sphi 0, %s51
      %s71 = sphi 0, %s71
      %s73 = sphi 0, %s71
      %s74 = sphi 0, %s73
      %s88 = sphi 0, %s74
      %s92 = sphi 0, %s92
      %s94 = sphi 0, %s92
      %s95 = sphi 0, %s94
      %s109 = sphi 0, %s95
      %s113 = sphi 0, %s113
      %s115 = sphi 0, %s113
      %s116 = sphi 0, %s115
      %s130 = sphi 0, %s116
      %s134 = sphi 0, %s134
      %s136 = sphi 0, %s134
      %s137 = sphi 0, %s136
      %s151 = sphi 0, %s137
      %s155 = sphi 0, %s155
      %s157 = sphi 0, %s155
      %s158 = sphi 0, %s157
      %s172 = sphi 0, %s158
      %s176 = sphi 0, %s176
      %s178 = sphi 0, %s176
      %s179 = sphi 0, %s178
      %s193 = sphi 0, %s179
      %s197 = sphi 0, %s197
      %s199 = sphi 0, %s197
      %s200 = sphi 0, %s199
      %s214 = sphi 0, %s200
      %s218 = sphi 0, %s218
      %s220 = sphi 0, %s218
      %s221 = sphi 0, %s220
      %s235 = sphi 0, %s221
      %s239 = sphi 0, %s239
      %s241 = sphi 0, %s239
      %s242 = sphi 0, %s241
      %s256 = sphi 0, %s242
      %s260 = sphi 0, %s260
      %s262 = sphi 0, %s260
      %s263 = sphi 0, %s262
      %s277 = sphi 0, %s263
      %s281 = sphi 0, %s281
      %s283 = sphi 0, %s281
      %s284 = sphi 0, %s283
      %s298 = sphi 0, %s284
      %s302 = sphi 0, %s302
      %s304 = sphi 0, %s302
      %s305 = sphi 0, %s304
      %s319 = sphi 0, %s305
      %s323 = sphi 0, %s323
      %s325 = sphi 0, %s323
      %s326 = sphi 0, %s325
      %s340 = sphi 0, %s326
      %s344 = sphi 0, %s344
      %s346 = sphi 0, %s344
      %s347 = sphi 0, %s346
      %s361 = sphi 0, %s347
      %s365 = sphi 0, %s365
      %s367 = sphi 0, %s365
      %s368 = sphi 0, %s367
      %s382 = sphi 0, %s368
      %s386 = sphi 0, %s386
      %s388 = sphi 0, %s386
      %s389 = sphi 0, %s388
      %s403 = sphi 0, %s389
      %s407 = sphi 0, %s407
      %s409 = sphi 0, %s407
      %s410 = sphi 0, %s409
      %s424 = sphi 0, %s410
      %s428 = sphi 0, %s428
      %s430 = sphi 0, %s428
      %s431 = sphi 0, %s430
      %s445 = sphi 0, %s431
      %s449 = sphi 0, %s449
      %s451 = sphi 0, %s449
      %s452 = sphi 0, %s451
      %s466 = sphi 0, %s452
      %s470 = sphi 0, %s470
      %s472 = sphi 0, %s470
      %s473 = sphi 0, %s472
      %s487 = sphi 0, %s473
      %s491 = sphi 0, %s491
      %s493 = sphi 0, %s491
      %s494 = sphi 0, %s493
      %s508 = sphi 0, %s494
      %s512 = sphi 0, %s512
      %s514 = sphi 0, %s512
      %s515 = sphi 0, %s514
      %s529 = sphi 0, %s515
      %s533 = sphi 0, %s533
      %s535 = sphi 0, %s533
      %s536 = sphi 0, %s535
      %s550 = sphi 0, %s536
      %s554 = sphi 0, %s554
      %s556 = sphi 0, %s554
      %s557 = sphi 0, %s556
      %s571 = sphi 0, %s557
      %s575 = sphi 0, %s575
      %s577 = sphi 0, %s575
      %s578 = sphi 0, %s577
      %s592 = sphi 0, %s578
      %s598 = sphi 0, %s600
      %s601 = sphi 0, %s598
      %s602 = sphi 0, %s601
      %s618 = sphi 0, %s602
    $region4: #{cnhubert_forward.1} parent=1 // loop_header_branch
      %40 = sbr.rel (%p38) target = $region8
    $region5: #{cnhubert_forward.1} parent=1 // loop_body
      %s42 = ssub.s32 %s37, 1
      %s43 = ssub.s32 %s37, 2
      %s44 = sadd.s32 %s37, 1
      %s45 = ssub.s32 %s37, %s44
      %p46 = scmp.eq.s32.totalorder %s45, 0
      %s48 = sadd.s32 %s47, 1
      %s49 = scalar_select %p46, %s47, %s48
      %p52 = pneg %p46
      %p53 = scmp.eq.s32.totalorder %s37, 1
      %p54 = por %p52, %p53
      %p55 = scmp.ne.s32.totalorder %s47, %s50
      %p56 = scmp.eq.s32.totalorder %s37, 0
      %p57 = por %p55, %p56
      %p58 = scmp.ne.s32.totalorder %s47, %s50
      %p59 = scmp.eq.s32.totalorder %s42, 1
      %p60 = por %p58, %p59
      %p61 = scmp.ne.s32.totalorder %s50, %s51
      %p62 = scmp.eq.s32.totalorder %s42, 0
      %p63 = por %p61, %p62
      %p64 = scmp.ne.s32.totalorder %s50, %s51
      %p65 = scmp.eq.s32.totalorder %s43, 1
      %p66 = por %p64, %p65
      %p68 = scmp.ne.s32.totalorder %s51, %s67
      %p69 = scmp.eq.s32.totalorder %s43, 0
      %p70 = por %p68, %p69
      %s72 = sadd.s32 %s71, 1
      %p75 = scmp.eq.s32.totalorder %s37, 1
      %p76 = scmp.ne.s32.totalorder %s71, %s73
      %p77 = scmp.eq.s32.totalorder %s37, 0
      %p78 = por %p76, %p77
      %p79 = scmp.ne.s32.totalorder %s71, %s73
      %p80 = scmp.eq.s32.totalorder %s42, 1
      %p81 = por %p79, %p80
      %p82 = scmp.ne.s32.totalorder %s73, %s74
      %p83 = scmp.eq.s32.totalorder %s42, 0
      %p84 = por %p82, %p83
      %p85 = scmp.ne.s32.totalorder %s73, %s74
      %p86 = scmp.eq.s32.totalorder %s43, 1
      %p87 = por %p85, %p86
      %p89 = scmp.ne.s32.totalorder %s74, %s88
      %p90 = scmp.eq.s32.totalorder %s43, 0
      %p91 = por %p89, %p90
      %s93 = sadd.s32 %s92, 1
      %p96 = scmp.eq.s32.totalorder %s37, 1
      %p97 = scmp.ne.s32.totalorder %s92, %s94
      %p98 = scmp.eq.s32.totalorder %s37, 0
      %p99 = por %p97, %p98
      %p100 = scmp.ne.s32.totalorder %s92, %s94
      %p101 = scmp.eq.s32.totalorder %s42, 1
      %p102 = por %p100, %p101
      %p103 = scmp.ne.s32.totalorder %s94, %s95
      %p104 = scmp.eq.s32.totalorder %s42, 0
      %p105 = por %p103, %p104
      %p106 = scmp.ne.s32.totalorder %s94, %s95
      %p107 = scmp.eq.s32.totalorder %s43, 1
      %p108 = por %p106, %p107
      %p110 = scmp.ne.s32.totalorder %s95, %s109
      %p111 = scmp.eq.s32.totalorder %s43, 0
      %p112 = por %p110, %p111
      %s114 = sadd.s32 %s113, 1
      %p117 = scmp.eq.s32.totalorder %s37, 1
      %p118 = scmp.ne.s32.totalorder %s113, %s115
      %p119 = scmp.eq.s32.totalorder %s37, 0
      %p120 = por %p118, %p119
      %p121 = scmp.ne.s32.totalorder %s113, %s115
      %p122 = scmp.eq.s32.totalorder %s42, 1
      %p123 = por %p121, %p122
      %p124 = scmp.ne.s32.totalorder %s115, %s116
      %p125 = scmp.eq.s32.totalorder %s42, 0
      %p126 = por %p124, %p125
      %p127 = scmp.ne.s32.totalorder %s115, %s116
      %p128 = scmp.eq.s32.totalorder %s43, 1
      %p129 = por %p127, %p128
      %p131 = scmp.ne.s32.totalorder %s116, %s130
      %p132 = scmp.eq.s32.totalorder %s43, 0
      %p133 = por %p131, %p132
      %s135 = sadd.s32 %s134, 1
      %p138 = scmp.eq.s32.totalorder %s37, 1
      %p139 = scmp.ne.s32.totalorder %s134, %s136
      %p140 = scmp.eq.s32.totalorder %s37, 0
      %p141 = por %p139, %p140
      %p142 = scmp.ne.s32.totalorder %s134, %s136
      %p143 = scmp.eq.s32.totalorder %s42, 1
      %p144 = por %p142, %p143
      %p145 = scmp.ne.s32.totalorder %s136, %s137
      %p146 = scmp.eq.s32.totalorder %s42, 0
      %p147 = por %p145, %p146
      %p148 = scmp.ne.s32.totalorder %s136, %s137
      %p149 = scmp.eq.s32.totalorder %s43, 1
      %p150 = por %p148, %p149
      %p152 = scmp.ne.s32.totalorder %s137, %s151
      %p153 = scmp.eq.s32.totalorder %s43, 0
      %p154 = por %p152, %p153
      %s156 = sadd.s32 %s155, 1
      %p159 = scmp.eq.s32.totalorder %s37, 1
      %p160 = scmp.ne.s32.totalorder %s155, %s157
      %p161 = scmp.eq.s32.totalorder %s37, 0
      %p162 = por %p160, %p161
      %p163 = scmp.ne.s32.totalorder %s155, %s157
      %p164 = scmp.eq.s32.totalorder %s42, 1
      %p165 = por %p163, %p164
      %p166 = scmp.ne.s32.totalorder %s157, %s158
      %p167 = scmp.eq.s32.totalorder %s42, 0
      %p168 = por %p166, %p167
      %p169 = scmp.ne.s32.totalorder %s157, %s158
      %p170 = scmp.eq.s32.totalorder %s43, 1
      %p171 = por %p169, %p170
      %p173 = scmp.ne.s32.totalorder %s158, %s172
      %p174 = scmp.eq.s32.totalorder %s43, 0
      %p175 = por %p173, %p174
      %s177 = sadd.s32 %s176, 1
      %p180 = scmp.eq.s32.totalorder %s37, 1
      %p181 = scmp.ne.s32.totalorder %s176, %s178
      %p182 = scmp.eq.s32.totalorder %s37, 0
      %p183 = por %p181, %p182
      %p184 = scmp.ne.s32.totalorder %s176, %s178
      %p185 = scmp.eq.s32.totalorder %s42, 1
      %p186 = por %p184, %p185
      %p187 = scmp.ne.s32.totalorder %s178, %s179
      %p188 = scmp.eq.s32.totalorder %s42, 0
      %p189 = por %p187, %p188
      %p190 = scmp.ne.s32.totalorder %s178, %s179
      %p191 = scmp.eq.s32.totalorder %s43, 1
      %p192 = por %p190, %p191
      %p194 = scmp.ne.s32.totalorder %s179, %s193
      %p195 = scmp.eq.s32.totalorder %s43, 0
      %p196 = por %p194, %p195
      %s198 = sadd.s32 %s197, 1
      %p201 = scmp.eq.s32.totalorder %s37, 1
      %p202 = scmp.ne.s32.totalorder %s197, %s199
      %p203 = scmp.eq.s32.totalorder %s37, 0
      %p204 = por %p202, %p203
      %p205 = scmp.ne.s32.totalorder %s197, %s199
      %p206 = scmp.eq.s32.totalorder %s42, 1
      %p207 = por %p205, %p206
      %p208 = scmp.ne.s32.totalorder %s199, %s200
      %p209 = scmp.eq.s32.totalorder %s42, 0
      %p210 = por %p208, %p209
      %p211 = scmp.ne.s32.totalorder %s199, %s200
      %p212 = scmp.eq.s32.totalorder %s43, 1
      %p213 = por %p211, %p212
      %p215 = scmp.ne.s32.totalorder %s200, %s214
      %p216 = scmp.eq.s32.totalorder %s43, 0
      %p217 = por %p215, %p216
      %s219 = sadd.s32 %s218, 1
      %p222 = scmp.eq.s32.totalorder %s37, 1
      %p223 = scmp.ne.s32.totalorder %s218, %s220
      %p224 = scmp.eq.s32.totalorder %s37, 0
      %p225 = por %p223, %p224
      %p226 = scmp.ne.s32.totalorder %s218, %s220
      %p227 = scmp.eq.s32.totalorder %s42, 1
      %p228 = por %p226, %p227
      %p229 = scmp.ne.s32.totalorder %s220, %s221
      %p230 = scmp.eq.s32.totalorder %s42, 0
      %p231 = por %p229, %p230
      %p232 = scmp.ne.s32.totalorder %s220, %s221
      %p233 = scmp.eq.s32.totalorder %s43, 1
      %p234 = por %p232, %p233
      %p236 = scmp.ne.s32.totalorder %s221, %s235
      %p237 = scmp.eq.s32.totalorder %s43, 0
      %p238 = por %p236, %p237
      %s240 = sadd.s32 %s239, 1
      %p243 = scmp.eq.s32.totalorder %s37, 1
      %p244 = scmp.ne.s32.totalorder %s239, %s241
      %p245 = scmp.eq.s32.totalorder %s37, 0
      %p246 = por %p244, %p245
      %p247 = scmp.ne.s32.totalorder %s239, %s241
      %p248 = scmp.eq.s32.totalorder %s42, 1
      %p249 = por %p247, %p248
      %p250 = scmp.ne.s32.totalorder %s241, %s242
      %p251 = scmp.eq.s32.totalorder %s42, 0
      %p252 = por %p250, %p251
      %p253 = scmp.ne.s32.totalorder %s241, %s242
      %p254 = scmp.eq.s32.totalorder %s43, 1
      %p255 = por %p253, %p254
      %p257 = scmp.ne.s32.totalorder %s242, %s256
      %p258 = scmp.eq.s32.totalorder %s43, 0
      %p259 = por %p257, %p258
      %s261 = sadd.s32 %s260, 1
      %p264 = scmp.eq.s32.totalorder %s37, 1
      %p265 = scmp.ne.s32.totalorder %s260, %s262
      %p266 = scmp.eq.s32.totalorder %s37, 0
      %p267 = por %p265, %p266
      %p268 = scmp.ne.s32.totalorder %s260, %s262
      %p269 = scmp.eq.s32.totalorder %s42, 1
      %p270 = por %p268, %p269
      %p271 = scmp.ne.s32.totalorder %s262, %s263
      %p272 = scmp.eq.s32.totalorder %s42, 0
      %p273 = por %p271, %p272
      %p274 = scmp.ne.s32.totalorder %s262, %s263
      %p275 = scmp.eq.s32.totalorder %s43, 1
      %p276 = por %p274, %p275
      %p278 = scmp.ne.s32.totalorder %s263, %s277
      %p279 = scmp.eq.s32.totalorder %s43, 0
      %p280 = por %p278, %p279
      %s282 = sadd.s32 %s281, 1
      %p285 = scmp.eq.s32.totalorder %s37, 1
      %p286 = scmp.ne.s32.totalorder %s281, %s283
      %p287 = scmp.eq.s32.totalorder %s37, 0
      %p288 = por %p286, %p287
      %p289 = scmp.ne.s32.totalorder %s281, %s283
      %p290 = scmp.eq.s32.totalorder %s42, 1
      %p291 = por %p289, %p290
      %p292 = scmp.ne.s32.totalorder %s283, %s284
      %p293 = scmp.eq.s32.totalorder %s42, 0
      %p294 = por %p292, %p293
      %p295 = scmp.ne.s32.totalorder %s283, %s284
      %p296 = scmp.eq.s32.totalorder %s43, 1
      %p297 = por %p295, %p296
      %p299 = scmp.ne.s32.totalorder %s284, %s298
      %p300 = scmp.eq.s32.totalorder %s43, 0
      %p301 = por %p299, %p300
      %s303 = sadd.s32 %s302, 1
      %p306 = scmp.eq.s32.totalorder %s37, 1
      %p307 = scmp.ne.s32.totalorder %s302, %s304
      %p308 = scmp.eq.s32.totalorder %s37, 0
      %p309 = por %p307, %p308
      %p310 = scmp.ne.s32.totalorder %s302, %s304
      %p311 = scmp.eq.s32.totalorder %s42, 1
      %p312 = por %p310, %p311
      %p313 = scmp.ne.s32.totalorder %s304, %s305
      %p314 = scmp.eq.s32.totalorder %s42, 0
      %p315 = por %p313, %p314
      %p316 = scmp.ne.s32.totalorder %s304, %s305
      %p317 = scmp.eq.s32.totalorder %s43, 1
      %p318 = por %p316, %p317
      %p320 = scmp.ne.s32.totalorder %s305, %s319
      %p321 = scmp.eq.s32.totalorder %s43, 0
      %p322 = por %p320, %p321
      %s324 = sadd.s32 %s323, 1
      %p327 = scmp.eq.s32.totalorder %s37, 1
      %p328 = scmp.ne.s32.totalorder %s323, %s325
      %p329 = scmp.eq.s32.totalorder %s37, 0
      %p330 = por %p328, %p329
      %p331 = scmp.ne.s32.totalorder %s323, %s325
      %p332 = scmp.eq.s32.totalorder %s42, 1
      %p333 = por %p331, %p332
      %p334 = scmp.ne.s32.totalorder %s325, %s326
      %p335 = scmp.eq.s32.totalorder %s42, 0
      %p336 = por %p334, %p335
      %p337 = scmp.ne.s32.totalorder %s325, %s326
      %p338 = scmp.eq.s32.totalorder %s43, 1
      %p339 = por %p337, %p338
      %p341 = scmp.ne.s32.totalorder %s326, %s340
      %p342 = scmp.eq.s32.totalorder %s43, 0
      %p343 = por %p341, %p342
      %s345 = sadd.s32 %s344, 1
      %p348 = scmp.eq.s32.totalorder %s37, 1
      %p349 = scmp.ne.s32.totalorder %s344, %s346
      %p350 = scmp.eq.s32.totalorder %s37, 0
      %p351 = por %p349, %p350
      %p352 = scmp.ne.s32.totalorder %s344, %s346
      %p353 = scmp.eq.s32.totalorder %s42, 1
      %p354 = por %p352, %p353
      %p355 = scmp.ne.s32.totalorder %s346, %s347
      %p356 = scmp.eq.s32.totalorder %s42, 0
      %p357 = por %p355, %p356
      %p358 = scmp.ne.s32.totalorder %s346, %s347
      %p359 = scmp.eq.s32.totalorder %s43, 1
      %p360 = por %p358, %p359
      %p362 = scmp.ne.s32.totalorder %s347, %s361
      %p363 = scmp.eq.s32.totalorder %s43, 0
      %p364 = por %p362, %p363
      %s366 = sadd.s32 %s365, 1
      %p369 = scmp.eq.s32.totalorder %s37, 1
      %p370 = scmp.ne.s32.totalorder %s365, %s367
      %p371 = scmp.eq.s32.totalorder %s37, 0
      %p372 = por %p370, %p371
      %p373 = scmp.ne.s32.totalorder %s365, %s367
      %p374 = scmp.eq.s32.totalorder %s42, 1
      %p375 = por %p373, %p374
      %p376 = scmp.ne.s32.totalorder %s367, %s368
      %p377 = scmp.eq.s32.totalorder %s42, 0
      %p378 = por %p376, %p377
      %p379 = scmp.ne.s32.totalorder %s367, %s368
      %p380 = scmp.eq.s32.totalorder %s43, 1
      %p381 = por %p379, %p380
      %p383 = scmp.ne.s32.totalorder %s368, %s382
      %p384 = scmp.eq.s32.totalorder %s43, 0
      %p385 = por %p383, %p384
      %s387 = sadd.s32 %s386, 1
      %p390 = scmp.eq.s32.totalorder %s37, 1
      %p391 = scmp.ne.s32.totalorder %s386, %s388
      %p392 = scmp.eq.s32.totalorder %s37, 0
      %p393 = por %p391, %p392
      %p394 = scmp.ne.s32.totalorder %s386, %s388
      %p395 = scmp.eq.s32.totalorder %s42, 1
      %p396 = por %p394, %p395
      %p397 = scmp.ne.s32.totalorder %s388, %s389
      %p398 = scmp.eq.s32.totalorder %s42, 0
      %p399 = por %p397, %p398
      %p400 = scmp.ne.s32.totalorder %s388, %s389
      %p401 = scmp.eq.s32.totalorder %s43, 1
      %p402 = por %p400, %p401
      %p404 = scmp.ne.s32.totalorder %s389, %s403
      %p405 = scmp.eq.s32.totalorder %s43, 0
      %p406 = por %p404, %p405
      %s408 = sadd.s32 %s407, 1
      %p411 = scmp.eq.s32.totalorder %s37, 1
      %p412 = scmp.ne.s32.totalorder %s407, %s409
      %p413 = scmp.eq.s32.totalorder %s37, 0
      %p414 = por %p412, %p413
      %p415 = scmp.ne.s32.totalorder %s407, %s409
      %p416 = scmp.eq.s32.totalorder %s42, 1
      %p417 = por %p415, %p416
      %p418 = scmp.ne.s32.totalorder %s409, %s410
      %p419 = scmp.eq.s32.totalorder %s42, 0
      %p420 = por %p418, %p419
      %p421 = scmp.ne.s32.totalorder %s409, %s410
      %p422 = scmp.eq.s32.totalorder %s43, 1
      %p423 = por %p421, %p422
      %p425 = scmp.ne.s32.totalorder %s410, %s424
      %p426 = scmp.eq.s32.totalorder %s43, 0
      %p427 = por %p425, %p426
      %s429 = sadd.s32 %s428, 1
      %p432 = scmp.eq.s32.totalorder %s37, 1
      %p433 = scmp.ne.s32.totalorder %s428, %s430
      %p434 = scmp.eq.s32.totalorder %s37, 0
      %p435 = por %p433, %p434
      %p436 = scmp.ne.s32.totalorder %s428, %s430
      %p437 = scmp.eq.s32.totalorder %s42, 1
      %p438 = por %p436, %p437
      %p439 = scmp.ne.s32.totalorder %s430, %s431
      %p440 = scmp.eq.s32.totalorder %s42, 0
      %p441 = por %p439, %p440
      %p442 = scmp.ne.s32.totalorder %s430, %s431
      %p443 = scmp.eq.s32.totalorder %s43, 1
      %p444 = por %p442, %p443
      %p446 = scmp.ne.s32.totalorder %s431, %s445
      %p447 = scmp.eq.s32.totalorder %s43, 0
      %p448 = por %p446, %p447
      %s450 = sadd.s32 %s449, 1
      %p453 = scmp.eq.s32.totalorder %s37, 1
      %p454 = scmp.ne.s32.totalorder %s449, %s451
      %p455 = scmp.eq.s32.totalorder %s37, 0
      %p456 = por %p454, %p455
      %p457 = scmp.ne.s32.totalorder %s449, %s451
      %p458 = scmp.eq.s32.totalorder %s42, 1
      %p459 = por %p457, %p458
      %p460 = scmp.ne.s32.totalorder %s451, %s452
      %p461 = scmp.eq.s32.totalorder %s42, 0
      %p462 = por %p460, %p461
      %p463 = scmp.ne.s32.totalorder %s451, %s452
      %p464 = scmp.eq.s32.totalorder %s43, 1
      %p465 = por %p463, %p464
      %p467 = scmp.ne.s32.totalorder %s452, %s466
      %p468 = scmp.eq.s32.totalorder %s43, 0
      %p469 = por %p467, %p468
      %s471 = sadd.s32 %s470, 1
      %p474 = scmp.eq.s32.totalorder %s37, 1
      %p475 = scmp.ne.s32.totalorder %s470, %s472
      %p476 = scmp.eq.s32.totalorder %s37, 0
      %p477 = por %p475, %p476
      %p478 = scmp.ne.s32.totalorder %s470, %s472
      %p479 = scmp.eq.s32.totalorder %s42, 1
      %p480 = por %p478, %p479
      %p481 = scmp.ne.s32.totalorder %s472, %s473
      %p482 = scmp.eq.s32.totalorder %s42, 0
      %p483 = por %p481, %p482
      %p484 = scmp.ne.s32.totalorder %s472, %s473
      %p485 = scmp.eq.s32.totalorder %s43, 1
      %p486 = por %p484, %p485
      %p488 = scmp.ne.s32.totalorder %s473, %s487
      %p489 = scmp.eq.s32.totalorder %s43, 0
      %p490 = por %p488, %p489
      %s492 = sadd.s32 %s491, 1
      %p495 = scmp.eq.s32.totalorder %s37, 1
      %p496 = scmp.ne.s32.totalorder %s491, %s493
      %p497 = scmp.eq.s32.totalorder %s37, 0
      %p498 = por %p496, %p497
      %p499 = scmp.ne.s32.totalorder %s491, %s493
      %p500 = scmp.eq.s32.totalorder %s42, 1
      %p501 = por %p499, %p500
      %p502 = scmp.ne.s32.totalorder %s493, %s494
      %p503 = scmp.eq.s32.totalorder %s42, 0
      %p504 = por %p502, %p503
      %p505 = scmp.ne.s32.totalorder %s493, %s494
      %p506 = scmp.eq.s32.totalorder %s43, 1
      %p507 = por %p505, %p506
      %p509 = scmp.ne.s32.totalorder %s494, %s508
      %p510 = scmp.eq.s32.totalorder %s43, 0
      %p511 = por %p509, %p510
      %s513 = sadd.s32 %s512, 1
      %p516 = scmp.eq.s32.totalorder %s37, 1
      %p517 = scmp.ne.s32.totalorder %s512, %s514
      %p518 = scmp.eq.s32.totalorder %s37, 0
      %p519 = por %p517, %p518
      %p520 = scmp.ne.s32.totalorder %s512, %s514
      %p521 = scmp.eq.s32.totalorder %s42, 1
      %p522 = por %p520, %p521
      %p523 = scmp.ne.s32.totalorder %s514, %s515
      %p524 = scmp.eq.s32.totalorder %s42, 0
      %p525 = por %p523, %p524
      %p526 = scmp.ne.s32.totalorder %s514, %s515
      %p527 = scmp.eq.s32.totalorder %s43, 1
      %p528 = por %p526, %p527
      %p530 = scmp.ne.s32.totalorder %s515, %s529
      %p531 = scmp.eq.s32.totalorder %s43, 0
      %p532 = por %p530, %p531
      %s534 = sadd.s32 %s533, 1
      %p537 = scmp.eq.s32.totalorder %s37, 1
      %p538 = scmp.ne.s32.totalorder %s533, %s535
      %p539 = scmp.eq.s32.totalorder %s37, 0
      %p540 = por %p538, %p539
      %p541 = scmp.ne.s32.totalorder %s533, %s535
      %p542 = scmp.eq.s32.totalorder %s42, 1
      %p543 = por %p541, %p542
      %p544 = scmp.ne.s32.totalorder %s535, %s536
      %p545 = scmp.eq.s32.totalorder %s42, 0
      %p546 = por %p544, %p545
      %p547 = scmp.ne.s32.totalorder %s535, %s536
      %p548 = scmp.eq.s32.totalorder %s43, 1
      %p549 = por %p547, %p548
      %p551 = scmp.ne.s32.totalorder %s536, %s550
      %p552 = scmp.eq.s32.totalorder %s43, 0
      %p553 = por %p551, %p552
      %s555 = sadd.s32 %s554, 1
      %p558 = scmp.eq.s32.totalorder %s37, 1
      %p559 = scmp.ne.s32.totalorder %s554, %s556
      %p560 = scmp.eq.s32.totalorder %s37, 0
      %p561 = por %p559, %p560
      %p562 = scmp.ne.s32.totalorder %s554, %s556
      %p563 = scmp.eq.s32.totalorder %s42, 1
      %p564 = por %p562, %p563
      %p565 = scmp.ne.s32.totalorder %s556, %s557
      %p566 = scmp.eq.s32.totalorder %s42, 0
      %p567 = por %p565, %p566
      %p568 = scmp.ne.s32.totalorder %s556, %s557
      %p569 = scmp.eq.s32.totalorder %s43, 1
      %p570 = por %p568, %p569
      %p572 = scmp.ne.s32.totalorder %s557, %s571
      %p573 = scmp.eq.s32.totalorder %s43, 0
      %p574 = por %p572, %p573
      %s576 = sadd.s32 %s575, 1
      %p579 = scmp.eq.s32.totalorder %s37, 1
      %p580 = scmp.ne.s32.totalorder %s575, %s577
      %p581 = scmp.eq.s32.totalorder %s37, 0
      %p582 = por %p580, %p581
      %p583 = scmp.ne.s32.totalorder %s575, %s577
      %p584 = scmp.eq.s32.totalorder %s42, 1
      %p585 = por %p583, %p584
      %p586 = scmp.ne.s32.totalorder %s577, %s578
      %p587 = scmp.eq.s32.totalorder %s42, 0
      %p588 = por %p586, %p587
      %p589 = scmp.ne.s32.totalorder %s577, %s578
      %p590 = scmp.eq.s32.totalorder %s43, 1
      %p591 = por %p589, %p590
      %p593 = scmp.ne.s32.totalorder %s578, %s592
      %p594 = scmp.eq.s32.totalorder %s43, 0
      %p595 = por %p593, %p594
      %s596 = ssub.s32 %s37, %s44
      %p597 = scmp.eq.s32.totalorder %s596, 0
      %s599 = sadd.s32 %s598, 1
      %s600 = scalar_select %p597, %s598, %s599
      %p603 = pneg %p597
      %p604 = scmp.eq.s32.totalorder %s37, 1
      %p605 = por %p603, %p604
      %p606 = scmp.ne.s32.totalorder %s598, %s601
      %p607 = scmp.eq.s32.totalorder %s37, 0
      %p608 = por %p606, %p607
      %p609 = scmp.ne.s32.totalorder %s598, %s601
      %p610 = scmp.eq.s32.totalorder %s42, 1
      %p611 = por %p609, %p610
      %p612 = scmp.ne.s32.totalorder %s601, %s602
      %p613 = scmp.eq.s32.totalorder %s42, 0
      %p614 = por %p612, %p613
      %p615 = scmp.ne.s32.totalorder %s601, %s602
      %p616 = scmp.eq.s32.totalorder %s43, 1
      %p617 = por %p615, %p616
      %p619 = scmp.ne.s32.totalorder %s602, %s618
      %p620 = scmp.eq.s32.totalorder %s43, 0
      %p621 = por %p619, %p620
      %p622 = scmp.le.s32.totalorder 1, %s37
      %p623 = scmp.lt.s32.totalorder %s37, 3
      %p624 = pnand %p622, %p623
      %p625 = pneg %p624
      // Predicated region
      $region9: #{cnhubert_forward.1} parent=5 // pred_check
        _
      $region10: #{cnhubert_forward.1} parent=5 // pred_check_branch
        %627 = sbr.rel (%p624) target = $region12
      $region11: #{cnhubert_forward.1} parent=5 // pred_region
        %s628 = ssub.s32 %s37, 1
        // Predicated region
        $region13: #{cnhubert_forward.1} parent=11 // pred_check
          %p629 = pneg %p84
        $region14: #{cnhubert_forward.1} parent=11 // pred_check_branch
          %631 = sbr.rel (%p629) target = $region16
        $region15: #{cnhubert_forward.1} parent=11 // pred_region
          _
        $region16: #{cnhubert_forward.1} parent=11 // pred_fallthru
          _
        // Predicated region
        $region17: #{cnhubert_forward.1} parent=11 // pred_check
          %p632 = pneg %p105
        $region18: #{cnhubert_forward.1} parent=11 // pred_check_branch
          %634 = sbr.rel (%p632) target = $region20
        $region19: #{cnhubert_forward.1} parent=11 // pred_region
          %636 = vsyncadd [#allocation6], 0
          %s637 = sshll.u32 %s2, 4
          %s638 = int_to_ptr.hbm [resolvable:$true] %s637
          %s639 = sshll.u32 [#allocation5], 4
          %s640 = int_to_ptr.vmem [resolvable:$true] %s639
          %645 = dma.hbm_to_vmem [thread:$0]  %s638, 768, %s640, [#allocation6], 128, 128, 8
        $region20: #{cnhubert_forward.1} parent=11 // pred_fallthru
          _
        // Predicated region
        $region21: #{cnhubert_forward.1} parent=11 // pred_check
          %p646 = pneg %p126
        $region22: #{cnhubert_forward.1} parent=11 // pred_check_branch
          %648 = sbr.rel (%p646) target = $region24
        $region23: #{cnhubert_forward.1} parent=11 // pred_region
          %650 = vsyncadd [#allocation8], 0
          %s651 = sshll.u32 %s3, 4
          %s652 = int_to_ptr.hbm [resolvable:$true] %s651
          %s653 = sshll.u32 [#allocation7], 4
          %s654 = int_to_ptr.vmem [resolvable:$true] %s653
          %659 = dma.hbm_to_vmem [thread:$0]  %s652, 512, %s654, [#allocation8], 128, 128, 8
        $region24: #{cnhubert_forward.1} parent=11 // pred_fallthru
          _
        // Predicated region
        $region25: #{cnhubert_forward.1} parent=11 // pred_check
          %p660 = pneg %p147
        $region26: #{cnhubert_forward.1} parent=11 // pred_check_branch
          %662 = sbr.rel (%p660) target = $region28
        $region27: #{cnhubert_forward.1} parent=11 // pred_region
          _
        $region28: #{cnhubert_forward.1} parent=11 // pred_fallthru
          _
        // Predicated region
        $region29: #{cnhubert_forward.1} parent=11 // pred_check
          %p663 = pneg %p168
        $region30: #{cnhubert_forward.1} parent=11 // pred_check_branch
          %665 = sbr.rel (%p663) target = $region32
        $region31: #{cnhubert_forward.1} parent=11 // pred_region
          _
        $region32: #{cnhubert_forward.1} parent=11 // pred_fallthru
          _
        // Predicated region
        $region33: #{cnhubert_forward.1} parent=11 // pred_check
          %p666 = pneg %p189
        $region34: #{cnhubert_forward.1} parent=11 // pred_check_branch
          %668 = sbr.rel (%p666) target = $region36
        $region35: #{cnhubert_forward.1} parent=11 // pred_region
          _
        $region36: #{cnhubert_forward.1} parent=11 // pred_fallthru
          _
        // Predicated region
        $region37: #{cnhubert_forward.1} parent=11 // pred_check
          %p669 = pneg %p210
        $region38: #{cnhubert_forward.1} parent=11 // pred_check_branch
          %671 = sbr.rel (%p669) target = $region40
        $region39: #{cnhubert_forward.1} parent=11 // pred_region
          %673 = vsyncadd [#allocation8], 0
          %s675 = sshll.u32 %s7, 4
          %s676 = int_to_ptr.hbm [resolvable:$true] %s675
          %s677 = sshll.u32 [#allocation9], 4
          %s678 = int_to_ptr.vmem [resolvable:$true] %s677
          %680 = dma.hbm_to_vmem [thread:$0]  %s676, 16, %s678, [#allocation8]
        $region40: #{cnhubert_forward.1} parent=11 // pred_fallthru
          _
        // Predicated region
        $region41: #{cnhubert_forward.1} parent=11 // pred_check
          %p681 = pneg %p231
        $region42: #{cnhubert_forward.1} parent=11 // pred_check_branch
          %683 = sbr.rel (%p681) target = $region44
        $region43: #{cnhubert_forward.1} parent=11 // pred_region
          _
        $region44: #{cnhubert_forward.1} parent=11 // pred_fallthru
          _
        // Predicated region
        $region45: #{cnhubert_forward.1} parent=11 // pred_check
          %p684 = pneg %p252
        $region46: #{cnhubert_forward.1} parent=11 // pred_check_branch
          %686 = sbr.rel (%p684) target = $region48
        $region47: #{cnhubert_forward.1} parent=11 // pred_region
          %688 = vsyncadd [#allocation11], 0
          %s690 = sshll.u32 %s9, 4
          %s691 = int_to_ptr.hbm [resolvable:$true] %s690
          %s692 = sshll.u32 [#allocation10], 4
          %s693 = int_to_ptr.vmem [resolvable:$true] %s692
          %695 = dma.hbm_to_vmem [thread:$0]  %s691, 16, %s693, [#allocation11]
        $region48: #{cnhubert_forward.1} parent=11 // pred_fallthru
          _
        // Predicated region
        $region49: #{cnhubert_forward.1} parent=11 // pred_check
          %p696 = pneg %p273
        $region50: #{cnhubert_forward.1} parent=11 // pred_check_branch
          %698 = sbr.rel (%p696) target = $region52
        $region51: #{cnhubert_forward.1} parent=11 // pred_region
          _
        $region52: #{cnhubert_forward.1} parent=11 // pred_fallthru
          _
        // Predicated region
        $region53: #{cnhubert_forward.1} parent=11 // pred_check
          %p699 = pneg %p294
        $region54: #{cnhubert_forward.1} parent=11 // pred_check_branch
          %701 = sbr.rel (%p699) target = $region56
        $region55: #{cnhubert_forward.1} parent=11 // pred_region
          _
        $region56: #{cnhubert_forward.1} parent=11 // pred_fallthru
          _
        // Predicated region
        $region57: #{cnhubert_forward.1} parent=11 // pred_check
          %p702 = pneg %p315
        $region58: #{cnhubert_forward.1} parent=11 // pred_check_branch
          %704 = sbr.rel (%p702) target = $region60
        $region59: #{cnhubert_forward.1} parent=11 // pred_region
          %706 = vsyncadd [#allocation11], 0
          %s708 = sshll.u32 %s12, 4
          %s709 = int_to_ptr.hbm [resolvable:$true] %s708
          %s710 = sshll.u32 [#allocation12], 4
          %s711 = int_to_ptr.vmem [resolvable:$true] %s710
          %713 = dma.hbm_to_vmem [thread:$0]  %s709, 16, %s711, [#allocation11]
        $region60: #{cnhubert_forward.1} parent=11 // pred_fallthru
          _
        // Predicated region
        $region61: #{cnhubert_forward.1} parent=11 // pred_check
          %p714 = pneg %p336
        $region62: #{cnhubert_forward.1} parent=11 // pred_check_branch
          %716 = sbr.rel (%p714) target = $region64
        $region63: #{cnhubert_forward.1} parent=11 // pred_region
          %718 = vsyncadd [#allocation14], 0
          %s720 = sshll.u32 %s13, 4
          %s721 = int_to_ptr.hbm [resolvable:$true] %s720
          %s722 = sshll.u32 [#allocation13], 4
          %s723 = int_to_ptr.vmem [resolvable:$true] %s722
          %725 = dma.hbm_to_vmem [thread:$0]  %s721, 16, %s723, [#allocation14]
        $region64: #{cnhubert_forward.1} parent=11 // pred_fallthru
          _
        // Predicated region
        $region65: #{cnhubert_forward.1} parent=11 // pred_check
          %p726 = pneg %p357
        $region66: #{cnhubert_forward.1} parent=11 // pred_check_branch
          %728 = sbr.rel (%p726) target = $region68
        $region67: #{cnhubert_forward.1} parent=11 // pred_region
          _
        $region68: #{cnhubert_forward.1} parent=11 // pred_fallthru
          _
        // Predicated region
        $region69: #{cnhubert_forward.1} parent=11 // pred_check
          %p729 = pneg %p378
        $region70: #{cnhubert_forward.1} parent=11 // pred_check_branch
          %731 = sbr.rel (%p729) target = $region72
        $region71: #{cnhubert_forward.1} parent=11 // pred_region
          _
        $region72: #{cnhubert_forward.1} parent=11 // pred_fallthru
          _
        // Predicated region
        $region73: #{cnhubert_forward.1} parent=11 // pred_check
          %p732 = pneg %p399
        $region74: #{cnhubert_forward.1} parent=11 // pred_check_branch
          %734 = sbr.rel (%p732) target = $region76
        $region75: #{cnhubert_forward.1} parent=11 // pred_region
          _
        $region76: #{cnhubert_forward.1} parent=11 // pred_fallthru
          _
        // Predicated region
        $region77: #{cnhubert_forward.1} parent=11 // pred_check
          %p735 = pneg %p420
        $region78: #{cnhubert_forward.1} parent=11 // pred_check_branch
          %737 = sbr.rel (%p735) target = $region80
        $region79: #{cnhubert_forward.1} parent=11 // pred_region
          _
        $region80: #{cnhubert_forward.1} parent=11 // pred_fallthru
          _
        // Predicated region
        $region81: #{cnhubert_forward.1} parent=11 // pred_check
          %p738 = pneg %p441
        $region82: #{cnhubert_forward.1} parent=11 // pred_check_branch
          %740 = sbr.rel (%p738) target = $region84
        $region83: #{cnhubert_forward.1} parent=11 // pred_region
          _
        $region84: #{cnhubert_forward.1} parent=11 // pred_fallthru
          _
        // Predicated region
        $region85: #{cnhubert_forward.1} parent=11 // pred_check
          %p741 = pneg %p462
        $region86: #{cnhubert_forward.1} parent=11 // pred_check_branch
          %743 = sbr.rel (%p741) target = $region88
        $region87: #{cnhubert_forward.1} parent=11 // pred_region
          _
        $region88: #{cnhubert_forward.1} parent=11 // pred_fallthru
          _
        // Predicated region
        $region89: #{cnhubert_forward.1} parent=11 // pred_check
          %p744 = pneg %p483
        $region90: #{cnhubert_forward.1} parent=11 // pred_check_branch
          %746 = sbr.rel (%p744) target = $region92
        $region91: #{cnhubert_forward.1} parent=11 // pred_region
          %748 = vsyncadd [#allocation14], 0
          %s749 = sshll.u32 %s20, 4
          %s750 = int_to_ptr.hbm [resolvable:$true] %s749
          %s751 = sshll.u32 [#allocation15], 4
          %s752 = int_to_ptr.vmem [resolvable:$true] %s751
          %757 = dma.hbm_to_vmem [thread:$0]  %s750, 1024, %s752, [#allocation14], 128, 128, 8
        $region92: #{cnhubert_forward.1} parent=11 // pred_fallthru
          _
        // Predicated region
        $region93: #{cnhubert_forward.1} parent=11 // pred_check
          %p758 = pneg %p504
        $region94: #{cnhubert_forward.1} parent=11 // pred_check_branch
          %760 = sbr.rel (%p758) target = $region96
        $region95: #{cnhubert_forward.1} parent=11 // pred_region
          _
        $region96: #{cnhubert_forward.1} parent=11 // pred_fallthru
          _
        // Predicated region
        $region97: #{cnhubert_forward.1} parent=11 // pred_check
          %p761 = pneg %p525
        $region98: #{cnhubert_forward.1} parent=11 // pred_check_branch
          %763 = sbr.rel (%p761) target = $region100
        $region99: #{cnhubert_forward.1} parent=11 // pred_region
          _
        $region100: #{cnhubert_forward.1} parent=11 // pred_fallthru
          _
        // Predicated region
        $region101: #{cnhubert_forward.1} parent=11 // pred_check
          %p764 = pneg %p546
        $region102: #{cnhubert_forward.1} parent=11 // pred_check_branch
          %766 = sbr.rel (%p764) target = $region104
        $region103: #{cnhubert_forward.1} parent=11 // pred_region
          %768 = vsyncadd [#allocation17], 0
          %s769 = sshll.u32 %s23, 4
          %s770 = int_to_ptr.hbm [resolvable:$true] %s769
          %s771 = sshll.u32 [#allocation16], 4
          %s772 = int_to_ptr.vmem [resolvable:$true] %s771
          %777 = dma.hbm_to_vmem [thread:$0]  %s770, 32, %s772, [#allocation17], 16, 16, 1
        $region104: #{cnhubert_forward.1} parent=11 // pred_fallthru
          _
        // Predicated region
        $region105: #{cnhubert_forward.1} parent=11 // pred_check
          %p778 = pneg %p567
        $region106: #{cnhubert_forward.1} parent=11 // pred_check_branch
          %780 = sbr.rel (%p778) target = $region108
        $region107: #{cnhubert_forward.1} parent=11 // pred_region
          _
        $region108: #{cnhubert_forward.1} parent=11 // pred_fallthru
          _
        // Predicated region
        $region109: #{cnhubert_forward.1} parent=11 // pred_check
          %p781 = pneg %p588
        $region110: #{cnhubert_forward.1} parent=11 // pred_check_branch
          %783 = sbr.rel (%p781) target = $region112
        $region111: #{cnhubert_forward.1} parent=11 // pred_region
          _
        $region112: #{cnhubert_forward.1} parent=11 // pred_fallthru
          _
      $region12: #{cnhubert_forward.1} parent=5 // pred_fallthru
        _
      %p784 = scmp.lt.s32.totalorder %s37, 2
      // Predicated region
      $region113: #{cnhubert_forward.1} parent=5 // pred_check
        %p785 = pneg %p784
      $region114: #{cnhubert_forward.1} parent=5 // pred_check_branch
        %787 = sbr.rel (%p785) target = $region116
      $region115: #{cnhubert_forward.1} parent=5 // pred_region
        // Predicated region
        $region117: #{cnhubert_forward.1} parent=115 // pred_check
          %p788 = pneg %p57
        $region118: #{cnhubert_forward.1} parent=115 // pred_check_branch
          %790 = sbr.rel (%p788) target = $region120
        $region119: #{cnhubert_forward.1} parent=115 // pred_region
          %p791 = scmp.lt.s32.totalorder %s37, 1
          %s792 = scalar_select %p791, %s37, 1
          %s793 = smul.addr %s792, 8
          %s794 = smul.addr %s793, 8
          %s795 = scalar_lea.vmem %s0, %s794
        $region120: #{cnhubert_forward.1} parent=115 // pred_fallthru
          _
      $region116: #{cnhubert_forward.1} parent=5 // pred_fallthru
        _
      %p796 = scmp.le.s32.totalorder 1, %s37
      %p797 = scmp.lt.s32.totalorder %s37, 3
      %p798 = pnand %p796, %p797
      %p799 = pneg %p798
      // Predicated region
      $region121: #{cnhubert_forward.1} parent=5 // pred_check
        _
      $region122: #{cnhubert_forward.1} parent=5 // pred_check_branch
        %801 = sbr.rel (%p798) target = $region124
      $region123: #{cnhubert_forward.1} parent=5 // pred_region
        %s802 = ssub.s32 %s37, 1
        // Predicated region
        $region125: #{cnhubert_forward.1} parent=123 // pred_check
          %p803 = pneg %p105
        $region126: #{cnhubert_forward.1} parent=123 // pred_check_branch
          %805 = sbr.rel (%p803) target = $region128
        $region127: #{cnhubert_forward.1} parent=123 // pred_region
          %807 = dma.done [#allocation6], 768
        $region128: #{cnhubert_forward.1} parent=123 // pred_fallthru
          _
        // Predicated region
        $region129: #{cnhubert_forward.1} parent=123 // pred_check
          %p808 = pneg %p126
        $region130: #{cnhubert_forward.1} parent=123 // pred_check_branch
          %810 = sbr.rel (%p808) target = $region132
        $region131: #{cnhubert_forward.1} parent=123 // pred_region
          %812 = dma.done [#allocation8], 512
        $region132: #{cnhubert_forward.1} parent=123 // pred_fallthru
          _
        // Predicated region
        $region133: #{cnhubert_forward.1} parent=123 // pred_check
          %p813 = pneg %p210
        $region134: #{cnhubert_forward.1} parent=123 // pred_check_branch
          %815 = sbr.rel (%p813) target = $region136
        $region135: #{cnhubert_forward.1} parent=123 // pred_region
          %817 = dma.done [#allocation8], 16
        $region136: #{cnhubert_forward.1} parent=123 // pred_fallthru
          _
        // Predicated region
        $region137: #{cnhubert_forward.1} parent=123 // pred_check
          %p818 = pneg %p252
        $region138: #{cnhubert_forward.1} parent=123 // pred_check_branch
          %820 = sbr.rel (%p818) target = $region140
        $region139: #{cnhubert_forward.1} parent=123 // pred_region
          %822 = dma.done [#allocation11], 16
        $region140: #{cnhubert_forward.1} parent=123 // pred_fallthru
          _
        // Predicated region
        $region141: #{cnhubert_forward.1} parent=123 // pred_check
          %p823 = pneg %p315
        $region142: #{cnhubert_forward.1} parent=123 // pred_check_branch
          %825 = sbr.rel (%p823) target = $region144
        $region143: #{cnhubert_forward.1} parent=123 // pred_region
          %827 = dma.done [#allocation11], 16
        $region144: #{cnhubert_forward.1} parent=123 // pred_fallthru
          _
        // Predicated region
        $region145: #{cnhubert_forward.1} parent=123 // pred_check
          %p828 = pneg %p336
        $region146: #{cnhubert_forward.1} parent=123 // pred_check_branch
          %830 = sbr.rel (%p828) target = $region148
        $region147: #{cnhubert_forward.1} parent=123 // pred_region
          %832 = dma.done [#allocation14], 16
        $region148: #{cnhubert_forward.1} parent=123 // pred_fallthru
          _
        // Predicated region
        $region149: #{cnhubert_forward.1} parent=123 // pred_check
          %p833 = pneg %p483
        $region150: #{cnhubert_forward.1} parent=123 // pred_check_branch
          %835 = sbr.rel (%p833) target = $region152
        $region151: #{cnhubert_forward.1} parent=123 // pred_region
          %837 = dma.done [#allocation14], 1024
        $region152: #{cnhubert_forward.1} parent=123 // pred_fallthru
          _
        // Predicated region
        $region153: #{cnhubert_forward.1} parent=123 // pred_check
          %p838 = pneg %p546
        $region154: #{cnhubert_forward.1} parent=123 // pred_check_branch
          %840 = sbr.rel (%p838) target = $region156
        $region155: #{cnhubert_forward.1} parent=123 // pred_region
          %842 = dma.done [#allocation17], 32
        $region156: #{cnhubert_forward.1} parent=123 // pred_fallthru
          _
        %p843 = scmp.lt.s32.totalorder %s42, 1
        %s844 = scalar_select %p843, %s42, 1
        %s845 = smul.addr %s844, 8
        %s846 = smul.addr %s845, 8
        %s847 = scalar_lea.vmem %s0, %s846
        %p848 = pneg %p63
        %p849 = pneg %p60
        %p850 = pneg %p84
        %p851 = pneg %p81
        %p852 = pneg %p105
        %p853 = pneg %p102
        %p854 = pneg %p126
        %p855 = pneg %p123
        %p856 = pneg %p147
        %p857 = pneg %p144
        %p858 = pneg %p168
        %p859 = pneg %p165
        %p860 = pneg %p189
        %p861 = pneg %p186
        %p862 = pneg %p210
        %p863 = pneg %p207
        %p864 = pneg %p231
        %p865 = pneg %p228
        %p866 = pneg %p252
        %p867 = pneg %p249
        %p868 = pneg %p273
        %p869 = pneg %p270
        %p870 = pneg %p294
        %p871 = pneg %p291
        %p872 = pneg %p315
        %p873 = pneg %p312
        %p874 = pneg %p336
        %p875 = pneg %p333
        %p876 = pneg %p357
        %p877 = pneg %p354
        %p878 = pneg %p378
        %p879 = pneg %p375
        %p880 = pneg %p399
        %p881 = pneg %p396
        %p882 = pneg %p420
        %p883 = pneg %p417
        %p884 = pneg %p441
        %p885 = pneg %p438
        %p886 = pneg %p462
        %p887 = pneg %p459
        %p888 = pneg %p483
        %p889 = pneg %p480
        %p890 = pneg %p504
        %p891 = pneg %p501
        %p892 = pneg %p525
        %p893 = pneg %p522
        %p894 = pneg %p546
        %p895 = pneg %p543
        %p896 = pneg %p567
        %p897 = pneg %p564
        %p898 = pneg %p588
        %p899 = pneg %p585
        %p900 = pneg %p614
        %p901 = pneg %p611
        %p902 = scmp.lt.s32.totalorder %s42, 1
        %s903 = scalar_select %p902, %s42, 1
        %s904 = smul.addr %s903, 2
        %s905 = smul.addr %s904, 8
        %s906 = scalar_lea.vmem %s26, %s905
        %p907 = scmp.lt.s32.totalorder %s42, 1
        %s908 = scalar_select %p907, %s42, 1
        %s909 = smul.addr %s908, 8
        %s910 = smul.addr %s909, 8
        %s911 = scalar_lea.vmem %s0, %s910
        %p912 = scmp.lt.s32.totalorder %s42, 1
        %s913 = scalar_select %p912, %s42, 1
        %s914 = smul.addr %s913, 2
        %s915 = smul.addr %s914, 8
        %s916 = scalar_lea.vmem %s26, %s915
        %v917 = vld [vmem:[%s911] sm:$0xff]
        %v918 = vld [vmem:[%s911 + $0x8] sm:$0xff]
        %v919 = vld [vmem:[%s911 + $0x10] sm:$0xff]
        %v920 = vld [vmem:[%s911 + $0x18] sm:$0xff]
        %v921 = vld [vmem:[%s911 + $0x20] sm:$0xff]
        %v922 = vld [vmem:[%s911 + $0x28] sm:$0xff]
        %v923 = vld [vmem:[%s911 + $0x30] sm:$0xff]
        %v924 = vld [vmem:[%s911 + $0x38] sm:$0xff]
        %vm925 = vcmask 39936
        %v926 = vsel %vm925, %v917, 0.0
        %v927 = vsel %vm925, %v918, 0.0
        %v928 = vadd.f32 %v926, %v927
        %v929 = vsel %vm925, %v919, 0.0
        %v930 = vadd.f32 %v928, %v929
        %v931 = vsel %vm925, %v920, 0.0
        %v932 = vadd.f32 %v930, %v931
        %v933 = vsel %vm925, %v921, 0.0
        %v934 = vadd.f32 %v932, %v933
        %v935 = vsel %vm925, %v922, 0.0
        %v936 = vadd.f32 %v934, %v935
        %v937 = vsel %vm925, %v923, 0.0
        %v938 = vadd.f32 %v936, %v937
        %v939 = vsel %vm925, %v924, 0.0
        %v940 = vadd.f32 %v938, %v939
        %941 = vadd.xlane.f32.xlu0 %v940
        %v942 = vpop.xlane.xlu0 %941
        %v943 = vrot.slane %v942, 4
        %v944 = vadd.f32 %v942, %v943
        %v945 = vrot.slane %v944, 2
        %v946 = vadd.f32 %v944, %v945
        %v947 = vrot.slane %v946, 1
        %v948 = vadd.f32 %v946, %v947
        %s949 = vtos %v948
        %v950 = vrcp.pop 320.0
        %v951 = vmul.f32 320.0, %v950
        %v952 = vsub.f32 1.0, %v951
        %v953 = vmul.f32 %v950, %v952
        %v954 = vadd.f32 %v950, %v953
        %vm955 = vweird.f32 %v950
        %v956 = vsel %vm955, %v950, %v954
        %s957 = vtos %v956
        %s958 = smul.f32 %s949, %s957
        %v959 = vstv %s958
        %v960 = vsub.f32 %v917, %v959
        %v961 = vsub.f32 %v918, %v959
        %v962 = vsub.f32 %v919, %v959
        %v963 = vsub.f32 %v920, %v959
        %v964 = vsub.f32 %v921, %v959
        %v965 = vsub.f32 %v922, %v959
        %v966 = vsub.f32 %v923, %v959
        %v967 = vsub.f32 %v924, %v959
        %v968 = vmul.f32 %v960, %v960
        %v969 = vmul.f32 %v961, %v961
        %v970 = vmul.f32 %v962, %v962
        %v971 = vmul.f32 %v963, %v963
        %v972 = vmul.f32 %v964, %v964
        %v973 = vmul.f32 %v965, %v965
        %v974 = vmul.f32 %v966, %v966
        %v975 = vmul.f32 %v967, %v967
        %v976 = vsel %vm925, %v968, 0.0
        %v977 = vsel %vm925, %v969, 0.0
        %v978 = vadd.f32 %v976, %v977
        %v979 = vsel %vm925, %v970, 0.0
        %v980 = vadd.f32 %v978, %v979
        %v981 = vsel %vm925, %v971, 0.0
        %v982 = vadd.f32 %v980, %v981
        %v983 = vsel %vm925, %v972, 0.0
        %v984 = vadd.f32 %v982, %v983
        %v985 = vsel %vm925, %v973, 0.0
        %v986 = vadd.f32 %v984, %v985
        %v987 = vsel %vm925, %v974, 0.0
        %v988 = vadd.f32 %v986, %v987
        %v989 = vsel %vm925, %v975, 0.0
        %v990 = vadd.f32 %v988, %v989
        %991 = vadd.xlane.f32.xlu0 %v990
        %v992 = vpop.xlane.xlu0 %991
        %v993 = vrot.slane %v992, 4
        %v994 = vadd.f32 %v992, %v993
        %v995 = vrot.slane %v994, 2
        %v996 = vadd.f32 %v994, %v995
        %v997 = vrot.slane %v996, 1
        %v998 = vadd.f32 %v996, %v997
        %s999 = vtos %v998
        %v1000 = vrcp.pop 320.0
        %v1001 = vmul.f32 320.0, %v1000
        %v1002 = vsub.f32 1.0, %v1001
        %v1003 = vmul.f32 %v1000, %v1002
        %v1004 = vadd.f32 %v1000, %v1003
        %vm1005 = vweird.f32 %v1000
        %v1006 = vsel %vm1005, %v1000, %v1004
        %s1007 = vtos %v1006
        %s1008 = smul.f32 %s999, %s1007
        %s1009 = sadd.f32 %s1008, 1e-07
        %v1010 = vstv %s1009
        %v1011 = vrsqrt.pop %v1010
        %v1012 = vmul.f32 %v1011, %v1010
        %v1013 = vmul.f32 %v1012, %v1011
        %v1014 = vmul.f32 0.5, %v1013
        %v1015 = vsub.f32 1.5, %v1014
        %v1016 = vmul.f32 %v1011, %v1015
        %vm1017 = vweird.f32 %v1010
        %vm1018 = vweird.f32 %v1011
        %vm1019 = vmor %vm1017, %vm1018
        %v1020 = vsel %vm1019, %v1011, %v1016
        %s1021 = vtos %v1020
        %v1022 = vstv %s1021
        %v1023 = vmul.f32 %v960, %v1022
        %v1024 = vmul.f32 %v961, %v1022
        %v1025 = vmul.f32 %v962, %v1022
        %v1026 = vmul.f32 %v963, %v1022
        %v1027 = vmul.f32 %v964, %v1022
        %v1028 = vmul.f32 %v965, %v1022
        %v1029 = vmul.f32 %v966, %v1022
        %v1030 = vmul.f32 %v967, %v1022
        %v1031 = vld [vmem:[%s1] sm:$0x1f]
        %s1032 = scalar_lea.vmem %s1, 8
        %v1033 = vld [vmem:[%s1032] sm:$0x1f]
        %vm1042 = vcmask 1046528
        %v1043 = vrot.slane %v1023, 1
        %v1044 = vrot.slane %v1024, 1
        %v1045 = vsel %vm1042, %v1043, %v1044
        %v1046 = vrot.slane %v1025, 1
        %v1047 = vsel %vm1042, %v1044, %v1046
        %v1048 = vrot.slane %v1026, 1
        %v1049 = vsel %vm1042, %v1046, %v1048
        %v1050 = vrot.slane %v1027, 1
        %v1051 = vsel %vm1042, %v1048, %v1050
        %v1052 = vrot.slane %v1028, 1
        %v1053 = vsel %vm1042, %v1050, %v1052
        %v1054 = vrot.slane %v1029, 1
        %v1055 = vsel %vm1042, %v1052, %v1054
        %v1056 = vrot.slane %v1030, 1
        %v1057 = vsel %vm1042, %v1054, %v1056
        %v1058 = vsel %vm925, %v1045, 0
        %v1060 = vsel %vm925, %v1047, 0
        %v1062 = vsel %vm925, %v1049, 0
        %v1064 = vsel %vm925, %v1051, 0
        %v1066 = vsel %vm925, %v1053, 0
        %v1068 = vsel %vm925, %v1055, 0
        %v1070 = vsel %vm925, %v1057, 0
        %v1072 = vsel %vm925, %v1056, 0
        %vm1074 = vcmask 1044480
        %v1076 = vsel %vm1074, %v1033, 0
        %1078 = vmatpush.msra.mxu0 0.0
        %1079 = vmatpush.msra.mxu0 0.0
        %1080 = vmatpush.msra.mxu0 0.0
        %1081 = vmatpush.msra.mxu0 0.0
        %1082 = vmatpush.msra.mxu0 0.0
        %1083 = vmatpush.msra.mxu0 0.0
        %1084 = vmatpush.msra.mxu0 0.0
        %1085 = vmatpush.msra.mxu0 0.0
        %1086 = vmatpush.msra.mxu0 0.0
        %1087 = vmatpush.msra.mxu0 0.0
        %1088 = vmatpush.msra.mxu0 0.0
        %1089 = vmatpush.msra.mxu0 0.0
        %1090 = vmatpush.msra.mxu0 0.0
        %1091 = vmatpush.msra.mxu0 0.0
        %1092 = vmatpush.msra.mxu0 0.0
        %1093 = vmatpush.msra.mxu0 %v1076
        %1094 = vmatmul.f32.gmra.mxu0 %v1058
        %v1095 = vpop.f32.mrf.mxu0
        %v1096 = vadd.f32 0.0, %v1095
        %1097 = vmatmul.f32.gmra.mxu0 %v1060
        %v1098 = vpop.f32.mrf.mxu0
        %v1099 = vadd.f32 0.0, %v1098
        %1100 = vmatmul.f32.gmra.mxu0 %v1062
        %v1101 = vpop.f32.mrf.mxu0
        %v1102 = vadd.f32 0.0, %v1101
        %1103 = vmatmul.f32.gmra.mxu0 %v1064
        %v1104 = vpop.f32.mrf.mxu0
        %v1105 = vadd.f32 0.0, %v1104
        %1106 = vmatmul.f32.gmra.mxu0 %v1066
        %v1107 = vpop.f32.mrf.mxu0
        %v1108 = vadd.f32 0.0, %v1107
        %1109 = vmatmul.f32.gmra.mxu0 %v1068
        %v1110 = vpop.f32.mrf.mxu0
        %v1111 = vadd.f32 0.0, %v1110
        %1112 = vmatmul.f32.gmra.mxu0 %v1070
        %v1113 = vpop.f32.mrf.mxu0
        %v1114 = vadd.f32 0.0, %v1113
        %1115 = vmatmul.f32.gmra.mxu0 %v1072
        %v1116 = vpop.f32.mrf.mxu0
        %v1117 = vadd.f32 0.0, %v1116
        %1118 = vdwg.mxu0
        %v1119 = vsel %vm925, %v1023, 0
        %v1121 = vsel %vm925, %v1024, 0
        %v1123 = vsel %vm925, %v1025, 0
        %v1125 = vsel %vm925, %v1026, 0
        %v1127 = vsel %vm925, %v1027, 0
        %v1129 = vsel %vm925, %v1028, 0
        %v1131 = vsel %vm925, %v1029, 0
        %v1133 = vsel %vm925, %v1030, 0
        %v1136 = vsel %vm1074, %v1031, 0
        %1138 = vmatpush.msra.mxu0 0.0
        %1139 = vmatpush.msra.mxu0 0.0
        %1140 = vmatpush.msra.mxu0 0.0
        %1141 = vmatpush.msra.mxu0 0.0
        %1142 = vmatpush.msra.mxu0 0.0
        %1143 = vmatpush.msra.mxu0 0.0
        %1144 = vmatpush.msra.mxu0 0.0
        %1145 = vmatpush.msra.mxu0 0.0
        %1146 = vmatpush.msra.mxu0 0.0
        %1147 = vmatpush.msra.mxu0 0.0
        %1148 = vmatpush.msra.mxu0 0.0
        %1149 = vmatpush.msra.mxu0 0.0
        %1150 = vmatpush.msra.mxu0 0.0
        %1151 = vmatpush.msra.mxu0 0.0
        %1152 = vmatpush.msra.mxu0 0.0
        %1153 = vmatpush.msra.mxu0 %v1136
        %1154 = vmatmul.f32.gmra.mxu0 %v1119
        %v1155 = vpop.f32.mrf.mxu0
        %v1156 = vadd.f32 %v1096, %v1155
        %1157 = vmatmul.f32.gmra.mxu0 %v1121
        %v1158 = vpop.f32.mrf.mxu0
        %v1159 = vadd.f32 %v1099, %v1158
        %1160 = vmatmul.f32.gmra.mxu0 %v1123
        %v1161 = vpop.f32.mrf.mxu0
        %v1162 = vadd.f32 %v1102, %v1161
        %1163 = vmatmul.f32.gmra.mxu0 %v1125
        %v1164 = vpop.f32.mrf.mxu0
        %v1165 = vadd.f32 %v1105, %v1164
        %1166 = vmatmul.f32.gmra.mxu0 %v1127
        %v1167 = vpop.f32.mrf.mxu0
        %v1168 = vadd.f32 %v1108, %v1167
        %1169 = vmatmul.f32.gmra.mxu0 %v1129
        %v1170 = vpop.f32.mrf.mxu0
        %v1171 = vadd.f32 %v1111, %v1170
        %1172 = vmatmul.f32.gmra.mxu0 %v1131
        %v1173 = vpop.f32.mrf.mxu0
        %v1174 = vadd.f32 %v1114, %v1173
        %1175 = vmatmul.f32.gmra.mxu0 %v1133
        %v1176 = vpop.f32.mrf.mxu0
        %v1177 = vadd.f32 %v1117, %v1176
        %1178 = vdwg.mxu0
        %vm1179 = vcmask 130048
        %v1180 = vsel %vm1179, %v1156, 0.0
        %v1181 = vsel %vm1179, %v1159, 0.0
        %v1182 = vadd.f32 %v1180, %v1181
        %v1183 = vsel %vm1179, %v1162, 0.0
        %v1184 = vadd.f32 %v1182, %v1183
        %v1185 = vsel %vm1179, %v1165, 0.0
        %v1186 = vadd.f32 %v1184, %v1185
        %v1187 = vsel %vm1179, %v1168, 0.0
        %v1188 = vadd.f32 %v1186, %v1187
        %v1189 = vsel %vm1179, %v1171, 0.0
        %v1190 = vadd.f32 %v1188, %v1189
        %v1191 = vsel %vm1179, %v1174, 0.0
        %v1192 = vadd.f32 %v1190, %v1191
        %vm1193 = vcmask 129024
        %v1194 = vsel %vm1193, %v1177, 0.0
        %v1195 = vadd.f32 %v1192, %v1194
        %v1196 = vrot.slane %v1195, 4
        %v1197 = vadd.f32 %v1195, %v1196
        %v1198 = vrot.slane %v1197, 2
        %v1199 = vadd.f32 %v1197, %v1198
        %v1200 = vrot.slane %v1199, 1
        %v1201 = vadd.f32 %v1199, %v1200
        %v1202 = vrcp.pop 63.0
        %v1203 = vmul.f32 63.0, %v1202
        %v1204 = vsub.f32 1.0, %v1203
        %v1205 = vmul.f32 %v1202, %v1204
        %v1206 = vadd.f32 %v1202, %v1205
        %vm1207 = vweird.f32 %v1202
        %v1208 = vsel %vm1207, %v1202, %v1206
        %v1209 = vmul.f32 %v1201, %v1208
        %v1210 = vsub.f32 %v1156, %v1209
        %v1211 = vsub.f32 %v1159, %v1209
        %v1212 = vsub.f32 %v1162, %v1209
        %v1213 = vsub.f32 %v1165, %v1209
        %v1214 = vsub.f32 %v1168, %v1209
        %v1215 = vsub.f32 %v1171, %v1209
        %v1216 = vsub.f32 %v1174, %v1209
        %v1217 = vsub.f32 %v1177, %v1209
        %v1218 = vmul.f32 %v1210, %v1210
        %v1219 = vmul.f32 %v1211, %v1211
        %v1220 = vmul.f32 %v1212, %v1212
        %v1221 = vmul.f32 %v1213, %v1213
        %v1222 = vmul.f32 %v1214, %v1214
        %v1223 = vmul.f32 %v1215, %v1215
        %v1224 = vmul.f32 %v1216, %v1216
        %v1225 = vmul.f32 %v1217, %v1217
        %v1226 = vsel %vm1179, %v1218, 0.0
        %v1227 = vsel %vm1179, %v1219, 0.0
        %v1228 = vadd.f32 %v1226, %v1227
        %v1229 = vsel %vm1179, %v1220, 0.0
        %v1230 = vadd.f32 %v1228, %v1229
        %v1231 = vsel %vm1179, %v1221, 0.0
        %v1232 = vadd.f32 %v1230, %v1231
        %v1233 = vsel %vm1179, %v1222, 0.0
        %v1234 = vadd.f32 %v1232, %v1233
        %v1235 = vsel %vm1179, %v1223, 0.0
        %v1236 = vadd.f32 %v1234, %v1235
        %v1237 = vsel %vm1179, %v1224, 0.0
        %v1238 = vadd.f32 %v1236, %v1237
        %v1239 = vsel %vm1193, %v1225, 0.0
        %v1240 = vadd.f32 %v1238, %v1239
        %v1241 = vrot.slane %v1240, 4
        %v1242 = vadd.f32 %v1240, %v1241
        %v1243 = vrot.slane %v1242, 2
        %v1244 = vadd.f32 %v1242, %v1243
        %v1245 = vrot.slane %v1244, 1
        %v1246 = vadd.f32 %v1244, %v1245
        %v1247 = vmul.f32 %v1246, %v1208
        %v1248 = vadd.f32 %v1247, 1e-05
        %v1249 = vrsqrt.pop %v1248
        %v1250 = vmul.f32 %v1249, %v1248
        %v1251 = vmul.f32 %v1250, %v1249
        %v1252 = vmul.f32 0.5, %v1251
        %v1253 = vsub.f32 1.5, %v1252
        %v1254 = vmul.f32 %v1249, %v1253
        %vm1255 = vweird.f32 %v1248
        %vm1256 = vweird.f32 %v1249
        %vm1257 = vmor %vm1255, %vm1256
        %v1258 = vsel %vm1257, %v1249, %v1254
        %v1259 = vmul.f32 %v1210, %v1258
        %v1260 = vmul.f32 %v1211, %v1258
        %v1261 = vmul.f32 %v1212, %v1258
        %v1262 = vmul.f32 %v1213, %v1258
        %v1263 = vmul.f32 %v1214, %v1258
        %v1264 = vmul.f32 %v1215, %v1258
        %v1265 = vmul.f32 %v1216, %v1258
        %v1266 = vmul.f32 %v1217, %v1258
        %v1267 = vld [vmem:[%s4] sm:$0x1]
        %v1269 = vperm.slane %v1267, 0
        %v1271 = vmul.f32 %v1259, %v1269
        %v1272 = vmul.f32 %v1260, %v1269
        %v1273 = vmul.f32 %v1261, %v1269
        %v1274 = vmul.f32 %v1262, %v1269
        %v1275 = vmul.f32 %v1263, %v1269
        %v1276 = vmul.f32 %v1264, %v1269
        %v1277 = vmul.f32 %v1265, %v1269
        %v1278 = vmul.f32 %v1266, %v1269
        %v1279 = vld [vmem:[%s5] sm:$0x1]
        %v1281 = vperm.slane %v1279, 0
        %v1283 = vadd.f32 %v1271, %v1281
        %v1284 = vadd.f32 %v1272, %v1281
        %v1285 = vadd.f32 %v1273, %v1281
        %v1286 = vadd.f32 %v1274, %v1281
        %v1287 = vadd.f32 %v1275, %v1281
        %v1288 = vadd.f32 %v1276, %v1281
        %v1289 = vadd.f32 %v1277, %v1281
        %v1290 = vadd.f32 %v1278, %v1281
        %v1291 = vmul.f32 %v1283, 0.5
        %v1292 = vmul.f32 %v1284, 0.5
        %v1293 = vmul.f32 %v1285, 0.5
        %v1294 = vmul.f32 %v1286, 0.5
        %v1295 = vmul.f32 %v1287, 0.5
        %v1296 = vmul.f32 %v1288, 0.5
        %v1297 = vmul.f32 %v1289, 0.5
        %v1298 = vmul.f32 %v1290, 0.5
        %v1299 = vmul.f32 %v1283, 0.044715
        %v1300 = vmul.f32 %v1284, 0.044715
        %v1301 = vmul.f32 %v1285, 0.044715
        %v1302 = vmul.f32 %v1286, 0.044715
        %v1303 = vmul.f32 %v1287, 0.044715
        %v1304 = vmul.f32 %v1288, 0.044715
        %v1305 = vmul.f32 %v1289, 0.044715
        %v1306 = vmul.f32 %v1290, 0.044715
        %v1307 = vmul.f32 %v1299, %v1283
        %v1308 = vmul.f32 %v1300, %v1284
        %v1309 = vmul.f32 %v1301, %v1285
        %v1310 = vmul.f32 %v1302, %v1286
        %v1311 = vmul.f32 %v1303, %v1287
        %v1312 = vmul.f32 %v1304, %v1288
        %v1313 = vmul.f32 %v1305, %v1289
        %v1314 = vmul.f32 %v1306, %v1290
        %v1315 = vmul.f32 %v1307, %v1283
        %v1316 = vmul.f32 %v1308, %v1284
        %v1317 = vmul.f32 %v1309, %v1285
        %v1318 = vmul.f32 %v1310, %v1286
        %v1319 = vmul.f32 %v1311, %v1287
        %v1320 = vmul.f32 %v1312, %v1288
        %v1321 = vmul.f32 %v1313, %v1289
        %v1322 = vmul.f32 %v1314, %v1290
        %v1323 = vadd.f32 %v1283, %v1315
        %v1324 = vadd.f32 %v1284, %v1316
        %v1325 = vadd.f32 %v1285, %v1317
        %v1326 = vadd.f32 %v1286, %v1318
        %v1327 = vadd.f32 %v1287, %v1319
        %v1328 = vadd.f32 %v1288, %v1320
        %v1329 = vadd.f32 %v1289, %v1321
        %v1330 = vadd.f32 %v1290, %v1322
        %v1331 = vmul.f32 %v1323, 0.7978846
        %v1332 = vmul.f32 %v1324, 0.7978846
        %v1333 = vmul.f32 %v1325, 0.7978846
        %v1334 = vmul.f32 %v1326, 0.7978846
        %v1335 = vmul.f32 %v1327, 0.7978846
        %v1336 = vmul.f32 %v1328, 0.7978846
        %v1337 = vmul.f32 %v1329, 0.7978846
        %v1338 = vmul.f32 %v1330, 0.7978846
        %v1339 = vtanh.pop %v1331
        %v1340 = vtanh.pop %v1332
        %v1341 = vtanh.pop %v1333
        %v1342 = vtanh.pop %v1334
        %v1343 = vtanh.pop %v1335
        %v1344 = vtanh.pop %v1336
        %v1345 = vtanh.pop %v1337
        %v1346 = vtanh.pop %v1338
        %v1347 = vadd.f32 %v1339, 1.0
        %v1348 = vadd.f32 %v1340, 1.0
        %v1349 = vadd.f32 %v1341, 1.0
        %v1350 = vadd.f32 %v1342, 1.0
        %v1351 = vadd.f32 %v1343, 1.0
        %v1352 = vadd.f32 %v1344, 1.0
        %v1353 = vadd.f32 %v1345, 1.0
        %v1354 = vadd.f32 %v1346, 1.0
        %v1355 = vmul.f32 %v1291, %v1347
        %v1356 = vmul.f32 %v1292, %v1348
        %v1357 = vmul.f32 %v1293, %v1349
        %v1358 = vmul.f32 %v1294, %v1350
        %v1359 = vmul.f32 %v1295, %v1351
        %v1360 = vmul.f32 %v1296, %v1352
        %v1361 = vmul.f32 %v1297, %v1353
        %v1362 = vmul.f32 %v1298, %v1354
        %1363 = vst.msk [vmem:[#allocation2] sm:$0xff] %vm1179, %v1355
        %1364 = vst.msk [vmem:[#allocation2 + $0x8] sm:$0xff] %vm1179, %v1356
        %1365 = vst.msk [vmem:[#allocation2 + $0x10] sm:$0xff] %vm1179, %v1357
        %1366 = vst.msk [vmem:[#allocation2 + $0x18] sm:$0xff] %vm1179, %v1358
        %1367 = vst.msk [vmem:[#allocation2 + $0x20] sm:$0xff] %vm1179, %v1359
        %1368 = vst.msk [vmem:[#allocation2 + $0x28] sm:$0xff] %vm1179, %v1360
        %1369 = vst.msk [vmem:[#allocation2 + $0x30] sm:$0xff] %vm1179, %v1361
        %1370 = vst.msk [vmem:[#allocation2 + $0x38] sm:$0x7f] %vm1193, %v1362
        %v1371 = vld [vmem:[#allocation2] ss:$2 sm:$0xff]
        %s1372 = scalar_lea.vmem [#allocation2], 16
        %v1373 = vld [vmem:[%s1372] ss:$2 sm:$0xff]
        %s1374 = scalar_lea.vmem [#allocation2], 32
        %v1375 = vld [vmem:[%s1374] ss:$2 sm:$0xff]
        %s1376 = scalar_lea.vmem [#allocation2], 48
        %v1377 = vld [vmem:[%s1376] ss:$2 sm:$0x7f]
        %v1378 = vld [vmem:[#allocation5] sm:$0xff]
        %v1379 = vld [vmem:[#allocation5 + $0x8] sm:$0xff]
        %s1380 = scalar_lea.vmem [#allocation2], 1
        %v1381 = vld [vmem:[%s1380] ss:$2 sm:$0xff]
        %s1382 = scalar_lea.vmem [#allocation2], 17
        %v1383 = vld [vmem:[%s1382] ss:$2 sm:$0xff]
        %s1384 = scalar_lea.vmem [#allocation2], 33
        %v1385 = vld [vmem:[%s1384] ss:$2 sm:$0xff]
        %s1386 = scalar_lea.vmem [#allocation2], 49
        %v1387 = vld [vmem:[%s1386] ss:$2 sm:$0x7f]
        %s1388 = scalar_lea.vmem [#allocation5], 16
        %v1389 = vld [vmem:[%s1388] sm:$0xff]
        %v1390 = vld [vmem:[%s1388 + $0x8] sm:$0xff]
        %v1392 = vsel %vm1179, %v1381, 0
        %v1395 = vsel %vm1179, %v1383, 0
        %v1398 = vsel %vm1179, %v1385, 0
        %v1401 = vsel %vm1179, %v1387, 0
        %1403 = vmatpush.msra.mxu0 0.0
        %1404 = vmatpush.msra.mxu0 0.0
        %1405 = vmatpush.msra.mxu0 0.0
        %1406 = vmatpush.msra.mxu0 0.0
        %1407 = vmatpush.msra.mxu0 0.0
        %1408 = vmatpush.msra.mxu0 0.0
        %1409 = vmatpush.msra.mxu0 0.0
        %1410 = vmatpush.msra.mxu0 0.0
        %1411 = vmatpush.msra.mxu0 0.0
        %1412 = vmatpush.msra.mxu0 0.0
        %1413 = vmatpush.msra.mxu0 0.0
        %1414 = vmatpush.msra.mxu0 0.0
        %1415 = vmatpush.msra.mxu0 0.0
        %1416 = vmatpush.msra.mxu0 0.0
        %1417 = vmatpush.msra.mxu0 %v1390
        %1418 = vmatpush.msra.mxu0 %v1389
        %1419 = vmatmul.f32.gmra.mxu0 %v1392
        %v1420 = vpop.f32.mrf.mxu0
        %v1421 = vadd.f32 0.0, %v1420
        %1422 = vmatmul.f32.gmra.mxu0 %v1395
        %v1423 = vpop.f32.mrf.mxu0
        %v1424 = vadd.f32 0.0, %v1423
        %1425 = vmatmul.f32.gmra.mxu0 %v1398
        %v1426 = vpop.f32.mrf.mxu0
        %v1427 = vadd.f32 0.0, %v1426
        %1428 = vmatmul.f32.gmra.mxu0 %v1401
        %v1429 = vpop.f32.mrf.mxu0
        %v1430 = vadd.f32 0.0, %v1429
        %1431 = vdwg.mxu0
        %v1433 = vsel %vm1179, %v1371, 0
        %v1436 = vsel %vm1179, %v1373, 0
        %v1439 = vsel %vm1179, %v1375, 0
        %v1442 = vsel %vm1179, %v1377, 0
        %1444 = vmatpush.msra.mxu0 0.0
        %1445 = vmatpush.msra.mxu0 0.0
        %1446 = vmatpush.msra.mxu0 0.0
        %1447 = vmatpush.msra.mxu0 0.0
        %1448 = vmatpush.msra.mxu0 0.0
        %1449 = vmatpush.msra.mxu0 0.0
        %1450 = vmatpush.msra.mxu0 0.0
        %1451 = vmatpush.msra.mxu0 0.0
        %1452 = vmatpush.msra.mxu0 0.0
        %1453 = vmatpush.msra.mxu0 0.0
        %1454 = vmatpush.msra.mxu0 0.0
        %1455 = vmatpush.msra.mxu0 0.0
        %1456 = vmatpush.msra.mxu0 0.0
        %1457 = vmatpush.msra.mxu0 0.0
        %1458 = vmatpush.msra.mxu0 %v1379
        %1459 = vmatpush.msra.mxu0 %v1378
        %1460 = vmatmul.f32.gmra.mxu0 %v1433
        %v1461 = vpop.f32.mrf.mxu0
        %v1462 = vadd.f32 %v1421, %v1461
        %1463 = vmatmul.f32.gmra.mxu0 %v1436
        %v1464 = vpop.f32.mrf.mxu0
        %v1465 = vadd.f32 %v1424, %v1464
        %1466 = vmatmul.f32.gmra.mxu0 %v1439
        %v1467 = vpop.f32.mrf.mxu0
        %v1468 = vadd.f32 %v1427, %v1467
        %1469 = vmatmul.f32.gmra.mxu0 %v1442
        %v1470 = vpop.f32.mrf.mxu0
        %v1471 = vadd.f32 %v1430, %v1470
        %1472 = vdwg.mxu0
        %s1473 = scalar_lea.vmem [#allocation2], 2
        %v1474 = vld [vmem:[%s1473] ss:$2 sm:$0xff]
        %s1475 = scalar_lea.vmem [#allocation2], 18
        %v1476 = vld [vmem:[%s1475] ss:$2 sm:$0xff]
        %s1477 = scalar_lea.vmem [#allocation2], 34
        %v1478 = vld [vmem:[%s1477] ss:$2 sm:$0xff]
        %s1479 = scalar_lea.vmem [#allocation2], 50
        %v1480 = vld [vmem:[%s1479] ss:$2 sm:$0x7f]
        %s1481 = scalar_lea.vmem [#allocation5], 32
        %v1482 = vld [vmem:[%s1481] sm:$0xff]
        %v1483 = vld [vmem:[%s1481 + $0x8] sm:$0xff]
        %v1485 = vsel %vm1179, %v1474, 0
        %v1488 = vsel %vm1179, %v1476, 0
        %v1491 = vsel %vm1179, %v1478, 0
        %v1494 = vsel %vm1179, %v1480, 0
        %1496 = vmatpush.msra.mxu0 0.0
        %1497 = vmatpush.msra.mxu0 0.0
        %1498 = vmatpush.msra.mxu0 0.0
        %1499 = vmatpush.msra.mxu0 0.0
        %1500 = vmatpush.msra.mxu0 0.0
        %1501 = vmatpush.msra.mxu0 0.0
        %1502 = vmatpush.msra.mxu0 0.0
        %1503 = vmatpush.msra.mxu0 0.0
        %1504 = vmatpush.msra.mxu0 0.0
        %1505 = vmatpush.msra.mxu0 0.0
        %1506 = vmatpush.msra.mxu0 0.0
        %1507 = vmatpush.msra.mxu0 0.0
        %1508 = vmatpush.msra.mxu0 0.0
        %1509 = vmatpush.msra.mxu0 0.0
        %1510 = vmatpush.msra.mxu0 %v1483
        %1511 = vmatpush.msra.mxu0 %v1482
        %1512 = vmatmul.f32.gmra.mxu0 %v1485
        %v1513 = vpop.f32.mrf.mxu0
        %v1514 = vadd.f32 0.0, %v1513
        %1515 = vmatmul.f32.gmra.mxu0 %v1488
        %v1516 = vpop.f32.mrf.mxu0
        %v1517 = vadd.f32 0.0, %v1516
        %1518 = vmatmul.f32.gmra.mxu0 %v1491
        %v1519 = vpop.f32.mrf.mxu0
        %v1520 = vadd.f32 0.0, %v1519
        %1521 = vmatmul.f32.gmra.mxu0 %v1494
        %v1522 = vpop.f32.mrf.mxu0
        %v1523 = vadd.f32 0.0, %v1522
        %1524 = vdwg.mxu0
        %v1525 = vadd.f32 %v1462, %v1514
        %v1526 = vadd.f32 %v1465, %v1517
        %v1527 = vadd.f32 %v1468, %v1520
        %v1528 = vadd.f32 %v1471, %v1523
        %v1529 = vmul.f32 %v1525, 0.5
        %v1530 = vmul.f32 %v1526, 0.5
        %v1531 = vmul.f32 %v1527, 0.5
        %v1532 = vmul.f32 %v1528, 0.5
        %v1533 = vmul.f32 %v1525, 0.044715
        %v1534 = vmul.f32 %v1526, 0.044715
        %v1535 = vmul.f32 %v1527, 0.044715
        %v1536 = vmul.f32 %v1528, 0.044715
        %v1537 = vmul.f32 %v1533, %v1525
        %v1538 = vmul.f32 %v1534, %v1526
        %v1539 = vmul.f32 %v1535, %v1527
        %v1540 = vmul.f32 %v1536, %v1528
        %v1541 = vmul.f32 %v1537, %v1525
        %v1542 = vmul.f32 %v1538, %v1526
        %v1543 = vmul.f32 %v1539, %v1527
        %v1544 = vmul.f32 %v1540, %v1528
        %v1545 = vadd.f32 %v1525, %v1541
        %v1546 = vadd.f32 %v1526, %v1542
        %v1547 = vadd.f32 %v1527, %v1543
        %v1548 = vadd.f32 %v1528, %v1544
        %v1549 = vmul.f32 %v1545, 0.7978846
        %v1550 = vmul.f32 %v1546, 0.7978846
        %v1551 = vmul.f32 %v1547, 0.7978846
        %v1552 = vmul.f32 %v1548, 0.7978846
        %v1553 = vtanh.pop %v1549
        %v1554 = vtanh.pop %v1550
        %v1555 = vtanh.pop %v1551
        %v1556 = vtanh.pop %v1552
        %v1557 = vadd.f32 %v1553, 1.0
        %v1558 = vadd.f32 %v1554, 1.0
        %v1559 = vadd.f32 %v1555, 1.0
        %v1560 = vadd.f32 %v1556, 1.0
        %v1561 = vmul.f32 %v1529, %v1557
        %v1562 = vmul.f32 %v1530, %v1558
        %v1563 = vmul.f32 %v1531, %v1559
        %v1564 = vmul.f32 %v1532, %v1560
        %1565 = vst.msk [vmem:[#allocation3] sm:$0xff] %vm1179, %v1561
        %1566 = vst.msk [vmem:[#allocation3 + $0x8] sm:$0xff] %vm1179, %v1562
        %1567 = vst.msk [vmem:[#allocation3 + $0x10] sm:$0xff] %vm1179, %v1563
        %1568 = vst.msk [vmem:[#allocation3 + $0x18] sm:$0x7f] %vm1193, %v1564
        %v1569 = vld [vmem:[#allocation3] ss:$2 sm:$0xff]
        %s1570 = scalar_lea.vmem [#allocation3], 16
        %v1571 = vld [vmem:[%s1570] ss:$2 sm:$0x7f]
        %v1572 = vld [vmem:[#allocation7] sm:$0xff]
        %v1573 = vld [vmem:[#allocation7 + $0x8] sm:$0xff]
        %s1574 = scalar_lea.vmem [#allocation3], 1
        %v1575 = vld [vmem:[%s1574] ss:$2 sm:$0xff]
        %s1576 = scalar_lea.vmem [#allocation3], 17
        %v1577 = vld [vmem:[%s1576] ss:$2 sm:$0x7f]
        %s1578 = scalar_lea.vmem [#allocation7], 16
        %v1579 = vld [vmem:[%s1578] sm:$0xff]
        %v1580 = vld [vmem:[%s1578 + $0x8] sm:$0xff]
        %v1582 = vsel %vm1179, %v1575, 0
        %v1585 = vsel %vm1179, %v1577, 0
        %1587 = vmatpush.msra.mxu0 0.0
        %1588 = vmatpush.msra.mxu0 0.0
        %1589 = vmatpush.msra.mxu0 0.0
        %1590 = vmatpush.msra.mxu0 0.0
        %1591 = vmatpush.msra.mxu0 0.0
        %1592 = vmatpush.msra.mxu0 0.0
        %1593 = vmatpush.msra.mxu0 0.0
        %1594 = vmatpush.msra.mxu0 0.0
        %1595 = vmatpush.msra.mxu0 0.0
        %1596 = vmatpush.msra.mxu0 0.0
        %1597 = vmatpush.msra.mxu0 0.0
        %1598 = vmatpush.msra.mxu0 0.0
        %1599 = vmatpush.msra.mxu0 0.0
        %1600 = vmatpush.msra.mxu0 0.0
        %1601 = vmatpush.msra.mxu0 %v1580
        %1602 = vmatpush.msra.mxu0 %v1579
        %1603 = vmatmul.f32.gmra.mxu0 %v1582
        %v1604 = vpop.f32.mrf.mxu0
        %v1605 = vadd.f32 0.0, %v1604
        %1606 = vmatmul.f32.gmra.mxu0 %v1585
        %v1607 = vpop.f32.mrf.mxu0
        %v1608 = vadd.f32 0.0, %v1607
        %1609 = vdwg.mxu0
        %v1611 = vsel %vm1179, %v1569, 0
        %v1614 = vsel %vm1179, %v1571, 0
        %1616 = vmatpush.msra.mxu0 0.0
        %1617 = vmatpush.msra.mxu0 0.0
        %1618 = vmatpush.msra.mxu0 0.0
        %1619 = vmatpush.msra.mxu0 0.0
        %1620 = vmatpush.msra.mxu0 0.0
        %1621 = vmatpush.msra.mxu0 0.0
        %1622 = vmatpush.msra.mxu0 0.0
        %1623 = vmatpush.msra.mxu0 0.0
        %1624 = vmatpush.msra.mxu0 0.0
        %1625 = vmatpush.msra.mxu0 0.0
        %1626 = vmatpush.msra.mxu0 0.0
        %1627 = vmatpush.msra.mxu0 0.0
        %1628 = vmatpush.msra.mxu0 0.0
        %1629 = vmatpush.msra.mxu0 0.0
        %1630 = vmatpush.msra.mxu0 %v1573
        %1631 = vmatpush.msra.mxu0 %v1572
        %1632 = vmatmul.f32.gmra.mxu0 %v1611
        %v1633 = vpop.f32.mrf.mxu0
        %v1634 = vadd.f32 %v1605, %v1633
        %1635 = vmatmul.f32.gmra.mxu0 %v1614
        %v1636 = vpop.f32.mrf.mxu0
        %v1637 = vadd.f32 %v1608, %v1636
        %1638 = vdwg.mxu0
        %v1639 = vmul.f32 %v1634, 0.5
        %v1640 = vmul.f32 %v1637, 0.5
        %v1641 = vmul.f32 %v1634, 0.044715
        %v1642 = vmul.f32 %v1637, 0.044715
        %v1643 = vmul.f32 %v1641, %v1634
        %v1644 = vmul.f32 %v1642, %v1637
        %v1645 = vmul.f32 %v1643, %v1634
        %v1646 = vmul.f32 %v1644, %v1637
        %v1647 = vadd.f32 %v1634, %v1645
        %v1648 = vadd.f32 %v1637, %v1646
        %v1649 = vmul.f32 %v1647, 0.7978846
        %v1650 = vmul.f32 %v1648, 0.7978846
        %v1651 = vtanh.pop %v1649
        %v1652 = vtanh.pop %v1650
        %v1653 = vadd.f32 %v1651, 1.0
        %v1654 = vadd.f32 %v1652, 1.0
        %v1655 = vmul.f32 %v1639, %v1653
        %v1656 = vmul.f32 %v1640, %v1654
        %v1657 = vld [vmem:[%s6] sm:$0x1]
        %v1658 = vld [vmem:[#allocation9] sm:$0x1]
        %v1659 = vsel %vm1179, %v1655, 0.0
        %1660 = vadd.xlane.f32.xlu0 %v1659
        %v1661 = vpop.xlane.xlu0 %1660
        %v1662 = vsel %vm1193, %v1656, 0.0
        %1663 = vadd.xlane.f32.xlu0 %v1662
        %v1664 = vpop.xlane.xlu0 %1663
        %v1665 = vrcp.pop 16.0
        %v1666 = vmul.f32 16.0, %v1665
        %v1667 = vsub.f32 1.0, %v1666
        %v1668 = vmul.f32 %v1665, %v1667
        %v1669 = vadd.f32 %v1665, %v1668
        %vm1670 = vweird.f32 %v1665
        %v1671 = vsel %vm1670, %v1665, %v1669
        %v1672 = vmul.f32 %v1661, %v1671
        %v1673 = vmul.f32 %v1664, %v1671
        %v1674 = vsub.f32 %v1655, %v1672
        %v1675 = vsub.f32 %v1656, %v1673
        %v1676 = vmul.f32 %v1674, %v1674
        %v1677 = vmul.f32 %v1675, %v1675
        %v1678 = vsel %vm1179, %v1676, 0.0
        %1679 = vadd.xlane.f32.xlu0 %v1678
        %v1680 = vpop.xlane.xlu0 %1679
        %v1681 = vsel %vm1193, %v1677, 0.0
        %1682 = vadd.xlane.f32.xlu0 %v1681
        %v1683 = vpop.xlane.xlu0 %1682
        %v1684 = vmul.f32 %v1680, %v1671
        %v1685 = vmul.f32 %v1683, %v1671
        %v1686 = vadd.f32 %v1684, 1e-05
        %v1687 = vadd.f32 %v1685, 1e-05
        %v1688 = vrsqrt.pop %v1686
        %v1689 = vmul.f32 %v1688, %v1686
        %v1690 = vmul.f32 %v1689, %v1688
        %v1691 = vmul.f32 0.5, %v1690
        %v1692 = vsub.f32 1.5, %v1691
        %v1693 = vmul.f32 %v1688, %v1692
        %vm1694 = vweird.f32 %v1686
        %vm1695 = vweird.f32 %v1688
        %vm1696 = vmor %vm1694, %vm1695
        %v1697 = vsel %vm1696, %v1688, %v1693
        %v1698 = vrsqrt.pop %v1687
        %v1699 = vmul.f32 %v1698, %v1687
        %v1700 = vmul.f32 %v1699, %v1698
        %v1701 = vmul.f32 0.5, %v1700
        %v1702 = vsub.f32 1.5, %v1701
        %v1703 = vmul.f32 %v1698, %v1702
        %vm1704 = vweird.f32 %v1687
        %vm1705 = vweird.f32 %v1698
        %vm1706 = vmor %vm1704, %vm1705
        %v1707 = vsel %vm1706, %v1698, %v1703
        %v1708 = vmul.f32 %v1674, %v1697
        %v1709 = vmul.f32 %v1675, %v1707
        %v1711 = vperm.slane %v1657, 0
        %v1713 = vmul.f32 %v1708, %v1711
        %v1714 = vmul.f32 %v1709, %v1711
        %v1716 = vperm.slane %v1658, 0
        %v1718 = vadd.f32 %v1713, %v1716
        %v1719 = vadd.f32 %v1714, %v1716
        %v1720 = vld [vmem:[%s8] sm:$0xff]
        %v1721 = vld [vmem:[%s8 + $0x8] sm:$0xff]
        %v1722 = vld [vmem:[#allocation10] sm:$0x1]
        %v1724 = vperm.slane %v1722, 0
        %v1727 = vsel %vm1179, %v1718, 0
        %v1730 = vsel %vm1179, %v1719, 0
        %1732 = vmatpush.msra.mxu0 0.0
        %1733 = vmatpush.msra.mxu0 0.0
        %1734 = vmatpush.msra.mxu0 0.0
        %1735 = vmatpush.msra.mxu0 0.0
        %1736 = vmatpush.msra.mxu0 0.0
        %1737 = vmatpush.msra.mxu0 0.0
        %1738 = vmatpush.msra.mxu0 0.0
        %1739 = vmatpush.msra.mxu0 0.0
        %1740 = vmatpush.msra.mxu0 0.0
        %1741 = vmatpush.msra.mxu0 0.0
        %1742 = vmatpush.msra.mxu0 0.0
        %1743 = vmatpush.msra.mxu0 0.0
        %1744 = vmatpush.msra.mxu0 0.0
        %1745 = vmatpush.msra.mxu0 0.0
        %1746 = vmatpush.msra.mxu0 %v1721
        %1747 = vmatpush.msra.mxu0 %v1720
        %1748 = vmatmul.f32.gmra.mxu0 %v1727
        %v1749 = vpop.f32.mrf.mxu0
        %v1750 = vadd.f32 %v1724, %v1749
        %1751 = vmatmul.f32.gmra.mxu0 %v1730
        %v1752 = vpop.f32.mrf.mxu0
        %v1753 = vadd.f32 %v1724, %v1752
        %1754 = vdwg.mxu0
        %vm1755 = vcmask 261120
        %1756 = vst.msk [vmem:[#allocation4] sm:$0xff] %vm1755, 0.0
        %1757 = vst.msk [vmem:[#allocation4 + $0x8] sm:$0xff] %vm1755, 0.0
        %1758 = vst.msk [vmem:[#allocation4 + $0x10] sm:$0xff] %vm1755, 0.0
        %vm1759 = vcmask 256000
        %1760 = vst.msk [vmem:[#allocation4 + $0x18] sm:$0x7] %vm1759, 0.0
        %1761 = vst.msk [vmem:[#allocation4 + $0x8] sm:$0xff] %vm1755, %v1750
        %vm1762 = vcmask 260096
        %1763 = vst.msk [vmem:[#allocation4 + $0x10] sm:$0x7f] %vm1762, %v1753
        %v1764 = vld [vmem:[#allocation4 + $0x6] sm:$0xff]
        %v1765 = vld [vmem:[#allocation4 + $0xe] sm:$0x7f]
        %v1766 = vld [vmem:[%s10] sm:$0xff]
        %v1767 = vld [vmem:[%s10 + $0x8] sm:$0xff]
        %v1768 = vld [vmem:[%s10 + $0x10] sm:$0xff]
        %v1769 = vld [vmem:[%s10 + $0x18] sm:$0xff]
        %v1770 = vld [vmem:[#allocation4 + $0x7] sm:$0xff]
        %v1771 = vld [vmem:[#allocation4 + $0xf] sm:$0x7f]
        %s1772 = scalar_lea.vmem %s10, 32
        %v1773 = vld [vmem:[%s1772] sm:$0xff]
        %v1774 = vld [vmem:[%s1772 + $0x8] sm:$0xff]
        %v1775 = vld [vmem:[%s1772 + $0x10] sm:$0xff]
        %v1776 = vld [vmem:[%s1772 + $0x18] sm:$0xff]
        %v1778 = vsel %vm1755, %v1770, 0
        %v1781 = vsel %vm1755, %v1771, 0
        %1783 = vmatpush.msra.mxu0 0.0
        %1784 = vmatpush.msra.mxu0 0.0
        %1785 = vmatpush.msra.mxu0 0.0
        %1786 = vmatpush.msra.mxu0 0.0
        %1787 = vmatpush.msra.mxu0 0.0
        %1788 = vmatpush.msra.mxu0 0.0
        %1789 = vmatpush.msra.mxu0 0.0
        %1790 = vmatpush.msra.mxu0 0.0
        %1791 = vmatpush.msra.mxu0 0.0
        %1792 = vmatpush.msra.mxu0 0.0
        %1793 = vmatpush.msra.mxu0 0.0
        %1794 = vmatpush.msra.mxu0 0.0
        %1795 = vmatpush.msra.mxu0 %v1776
        %1796 = vmatpush.msra.mxu0 %v1775
        %1797 = vmatpush.msra.mxu0 %v1774
        %1798 = vmatpush.msra.mxu0 %v1773
        %1799 = vmatmul.f32.gmra.mxu0 %v1778
        %v1800 = vpop.f32.mrf.mxu0
        %v1801 = vadd.f32 0.0, %v1800
        %1802 = vmatmul.f32.gmra.mxu0 %v1781
        %v1803 = vpop.f32.mrf.mxu0
        %v1804 = vadd.f32 0.0, %v1803
        %1805 = vdwg.mxu0
        %v1807 = vsel %vm1755, %v1764, 0
        %v1810 = vsel %vm1755, %v1765, 0
        %1812 = vmatpush.msra.mxu0 0.0
        %1813 = vmatpush.msra.mxu0 0.0
        %1814 = vmatpush.msra.mxu0 0.0
        %1815 = vmatpush.msra.mxu0 0.0
        %1816 = vmatpush.msra.mxu0 0.0
        %1817 = vmatpush.msra.mxu0 0.0
        %1818 = vmatpush.msra.mxu0 0.0
        %1819 = vmatpush.msra.mxu0 0.0
        %1820 = vmatpush.msra.mxu0 0.0
        %1821 = vmatpush.msra.mxu0 0.0
        %1822 = vmatpush.msra.mxu0 0.0
        %1823 = vmatpush.msra.mxu0 0.0
        %1824 = vmatpush.msra.mxu0 %v1769
        %1825 = vmatpush.msra.mxu0 %v1768
        %1826 = vmatpush.msra.mxu0 %v1767
        %1827 = vmatpush.msra.mxu0 %v1766
        %1828 = vmatmul.f32.gmra.mxu0 %v1807
        %v1829 = vpop.f32.mrf.mxu0
        %v1830 = vadd.f32 %v1801, %v1829
        %1831 = vmatmul.f32.gmra.mxu0 %v1810
        %v1832 = vpop.f32.mrf.mxu0
        %v1833 = vadd.f32 %v1804, %v1832
        %1834 = vdwg.mxu0
        %v1835 = vld [vmem:[#allocation4 + $0x8] sm:$0xff]
        %v1836 = vld [vmem:[#allocation4 + $0x10] sm:$0x7f]
        %s1837 = scalar_lea.vmem %s10, 64
        %v1838 = vld [vmem:[%s1837] sm:$0xff]
        %v1839 = vld [vmem:[%s1837 + $0x8] sm:$0xff]
        %v1840 = vld [vmem:[%s1837 + $0x10] sm:$0xff]
        %v1841 = vld [vmem:[%s1837 + $0x18] sm:$0xff]
        %v1843 = vsel %vm1755, %v1835, 0
        %v1846 = vsel %vm1755, %v1836, 0
        %1848 = vmatpush.msra.mxu0 0.0
        %1849 = vmatpush.msra.mxu0 0.0
        %1850 = vmatpush.msra.mxu0 0.0
        %1851 = vmatpush.msra.mxu0 0.0
        %1852 = vmatpush.msra.mxu0 0.0
        %1853 = vmatpush.msra.mxu0 0.0
        %1854 = vmatpush.msra.mxu0 0.0
        %1855 = vmatpush.msra.mxu0 0.0
        %1856 = vmatpush.msra.mxu0 0.0
        %1857 = vmatpush.msra.mxu0 0.0
        %1858 = vmatpush.msra.mxu0 0.0
        %1859 = vmatpush.msra.mxu0 0.0
        %1860 = vmatpush.msra.mxu0 %v1841
        %1861 = vmatpush.msra.mxu0 %v1840
        %1862 = vmatpush.msra.mxu0 %v1839
        %1863 = vmatpush.msra.mxu0 %v1838
        %1864 = vmatmul.f32.gmra.mxu0 %v1843
        %v1865 = vpop.f32.mrf.mxu0
        %v1866 = vadd.f32 0.0, %v1865
        %1867 = vmatmul.f32.gmra.mxu0 %v1846
        %v1868 = vpop.f32.mrf.mxu0
        %v1869 = vadd.f32 0.0, %v1868
        %1870 = vdwg.mxu0
        %v1871 = vadd.f32 %v1830, %v1866
        %v1872 = vadd.f32 %v1833, %v1869
        %v1873 = vld [vmem:[#allocation4 + $0x9] sm:$0xff]
        %v1874 = vld [vmem:[#allocation4 + $0x11] sm:$0x7f]
        %s1875 = scalar_lea.vmem %s10, 96
        %v1876 = vld [vmem:[%s1875] sm:$0xff]
        %v1877 = vld [vmem:[%s1875 + $0x8] sm:$0xff]
        %v1878 = vld [vmem:[%s1875 + $0x10] sm:$0xff]
        %v1879 = vld [vmem:[%s1875 + $0x18] sm:$0xff]
        %v1881 = vsel %vm1755, %v1873, 0
        %v1884 = vsel %vm1755, %v1874, 0
        %1886 = vmatpush.msra.mxu0 0.0
        %1887 = vmatpush.msra.mxu0 0.0
        %1888 = vmatpush.msra.mxu0 0.0
        %1889 = vmatpush.msra.mxu0 0.0
        %1890 = vmatpush.msra.mxu0 0.0
        %1891 = vmatpush.msra.mxu0 0.0
        %1892 = vmatpush.msra.mxu0 0.0
        %1893 = vmatpush.msra.mxu0 0.0
        %1894 = vmatpush.msra.mxu0 0.0
        %1895 = vmatpush.msra.mxu0 0.0
        %1896 = vmatpush.msra.mxu0 0.0
        %1897 = vmatpush.msra.mxu0 0.0
        %1898 = vmatpush.msra.mxu0 %v1879
        %1899 = vmatpush.msra.mxu0 %v1878
        %1900 = vmatpush.msra.mxu0 %v1877
        %1901 = vmatpush.msra.mxu0 %v1876
        %1902 = vmatmul.f32.gmra.mxu0 %v1881
        %v1903 = vpop.f32.mrf.mxu0
        %v1904 = vadd.f32 0.0, %v1903
        %1905 = vmatmul.f32.gmra.mxu0 %v1884
        %v1906 = vpop.f32.mrf.mxu0
        %v1907 = vadd.f32 0.0, %v1906
        %1908 = vdwg.mxu0
        %v1909 = vadd.f32 %v1871, %v1904
        %v1910 = vadd.f32 %v1872, %v1907
        %v1911 = vld [vmem:[%s11] sm:$0x1]
        %v1913 = vperm.slane %v1911, 0
        %v1915 = vadd.f32 %v1909, %v1913
        %v1916 = vadd.f32 %v1910, %v1913
        %v1917 = vmul.f32 %v1915, 0.5
        %v1918 = vmul.f32 %v1916, 0.5
        %v1919 = vmul.f32 %v1915, 0.044715
        %v1920 = vmul.f32 %v1916, 0.044715
        %v1921 = vmul.f32 %v1919, %v1915
        %v1922 = vmul.f32 %v1920, %v1916
        %v1923 = vmul.f32 %v1921, %v1915
        %v1924 = vmul.f32 %v1922, %v1916
        %v1925 = vadd.f32 %v1915, %v1923
        %v1926 = vadd.f32 %v1916, %v1924
        %v1927 = vmul.f32 %v1925, 0.7978846
        %v1928 = vmul.f32 %v1926, 0.7978846
        %v1929 = vtanh.pop %v1927
        %v1930 = vtanh.pop %v1928
        %v1931 = vadd.f32 %v1929, 1.0
        %v1932 = vadd.f32 %v1930, 1.0
        %v1933 = vmul.f32 %v1917, %v1931
        %v1934 = vmul.f32 %v1918, %v1932
        %v1935 = vadd.f32 %v1750, %v1933
        %v1936 = vadd.f32 %v1753, %v1934
        %v1937 = vld [vmem:[#allocation12] sm:$0x1]
        %v1938 = vld [vmem:[#allocation13] sm:$0x1]
        %v1939 = vsel %vm1755, %v1935, 0.0
        %1940 = vadd.xlane.f32.xlu0 %v1939
        %v1941 = vpop.xlane.xlu0 %1940
        %v1942 = vsel %vm1762, %v1936, 0.0
        %1943 = vadd.xlane.f32.xlu0 %v1942
        %v1944 = vpop.xlane.xlu0 %1943
        %v1945 = vrcp.pop 32.0
        %v1946 = vmul.f32 32.0, %v1945
        %v1947 = vsub.f32 1.0, %v1946
        %v1948 = vmul.f32 %v1945, %v1947
        %v1949 = vadd.f32 %v1945, %v1948
        %vm1950 = vweird.f32 %v1945
        %v1951 = vsel %vm1950, %v1945, %v1949
        %v1952 = vmul.f32 %v1941, %v1951
        %v1953 = vmul.f32 %v1944, %v1951
        %v1954 = vsub.f32 %v1935, %v1952
        %v1955 = vsub.f32 %v1936, %v1953
        %v1956 = vmul.f32 %v1954, %v1954
        %v1957 = vmul.f32 %v1955, %v1955
        %v1958 = vsel %vm1755, %v1956, 0.0
        %1959 = vadd.xlane.f32.xlu0 %v1958
        %v1960 = vpop.xlane.xlu0 %1959
        %v1961 = vsel %vm1762, %v1957, 0.0
        %1962 = vadd.xlane.f32.xlu0 %v1961
        %v1963 = vpop.xlane.xlu0 %1962
        %v1964 = vmul.f32 %v1960, %v1951
        %v1965 = vmul.f32 %v1963, %v1951
        %v1966 = vadd.f32 %v1964, 1e-05
        %v1967 = vadd.f32 %v1965, 1e-05
        %v1968 = vrsqrt.pop %v1966
        %v1969 = vmul.f32 %v1968, %v1966
        %v1970 = vmul.f32 %v1969, %v1968
        %v1971 = vmul.f32 0.5, %v1970
        %v1972 = vsub.f32 1.5, %v1971
        %v1973 = vmul.f32 %v1968, %v1972
        %vm1974 = vweird.f32 %v1966
        %vm1975 = vweird.f32 %v1968
        %vm1976 = vmor %vm1974, %vm1975
        %v1977 = vsel %vm1976, %v1968, %v1973
        %v1978 = vrsqrt.pop %v1967
        %v1979 = vmul.f32 %v1978, %v1967
        %v1980 = vmul.f32 %v1979, %v1978
        %v1981 = vmul.f32 0.5, %v1980
        %v1982 = vsub.f32 1.5, %v1981
        %v1983 = vmul.f32 %v1978, %v1982
        %vm1984 = vweird.f32 %v1967
        %vm1985 = vweird.f32 %v1978
        %vm1986 = vmor %vm1984, %vm1985
        %v1987 = vsel %vm1986, %v1978, %v1983
        %v1988 = vmul.f32 %v1954, %v1977
        %v1989 = vmul.f32 %v1955, %v1987
        %v1991 = vperm.slane %v1937, 0
        %v1993 = vmul.f32 %v1988, %v1991
        %v1994 = vmul.f32 %v1989, %v1991
        %v1996 = vperm.slane %v1938, 0
        %v1998 = vadd.f32 %v1993, %v1996
        %v1999 = vadd.f32 %v1994, %v1996
        %v2000 = vld [vmem:[%s14] sm:$0xff]
        %v2001 = vld [vmem:[%s14 + $0x8] sm:$0xff]
        %v2002 = vld [vmem:[%s14 + $0x10] sm:$0xff]
        %v2003 = vld [vmem:[%s14 + $0x18] sm:$0xff]
        %v2004 = vld [vmem:[%s15] sm:$0x1]
        %v2006 = vperm.slane %v2004, 0
        %v2009 = vsel %vm1755, %v1998, 0
        %v2012 = vsel %vm1755, %v1999, 0
        %2014 = vmatpush.msra.mxu0 0.0
        %2015 = vmatpush.msra.mxu0 0.0
        %2016 = vmatpush.msra.mxu0 0.0
        %2017 = vmatpush.msra.mxu0 0.0
        %2018 = vmatpush.msra.mxu0 0.0
        %2019 = vmatpush.msra.mxu0 0.0
        %2020 = vmatpush.msra.mxu0 0.0
        %2021 = vmatpush.msra.mxu0 0.0
        %2022 = vmatpush.msra.mxu0 0.0
        %2023 = vmatpush.msra.mxu0 0.0
        %2024 = vmatpush.msra.mxu0 0.0
        %2025 = vmatpush.msra.mxu0 0.0
        %2026 = vmatpush.msra.mxu0 %v2003
        %2027 = vmatpush.msra.mxu0 %v2002
        %2028 = vmatpush.msra.mxu0 %v2001
        %2029 = vmatpush.msra.mxu0 %v2000
        %2030 = vmatmul.f32.gmra.mxu0 %v2009
        %v2031 = vpop.f32.mrf.mxu0
        %v2032 = vadd.f32 %v2006, %v2031
        %2033 = vmatmul.f32.gmra.mxu0 %v2012
        %v2034 = vpop.f32.mrf.mxu0
        %v2035 = vadd.f32 %v2006, %v2034
        %2036 = vdwg.mxu0
        %v2037 = vmul.f32 %v2032, 0.25
        %v2038 = vmul.f32 %v2035, 0.25
        %2041 = vrot.lane.b32.xlu0 %v2032, 112
        %v2042 = vpop.permute.xlu0 %2041
        %2043 = vrot.lane.b32.xlu0 %v2035, 112
        %v2044 = vpop.permute.xlu0 %2043
        %v2046 = vsel %vm1179, %v2037, 0
        %v2049 = vsel %vm1179, %v2038, 0
        %v2051 = vsel %vm1179, %v2042, 0
        %v2053 = vsel %vm1179, %v2044, 0
        %2055 = vmatpush.xpose.msra.mxu0 0.0
        %2056 = vmatpush.xpose.msra.mxu0 0.0
        %2057 = vmatpush.xpose.msra.mxu0 0.0
        %2058 = vmatpush.xpose.msra.mxu0 0.0
        %2059 = vmatpush.xpose.msra.mxu0 0.0
        %2060 = vmatpush.xpose.msra.mxu0 0.0
        %2061 = vmatpush.xpose.msra.mxu0 0.0
        %2062 = vmatpush.xpose.msra.mxu0 0.0
        %2063 = vmatpush.xpose.msra.mxu0 0.0
        %2064 = vmatpush.xpose.msra.mxu0 0.0
        %2065 = vmatpush.xpose.msra.mxu0 0.0
        %2066 = vmatpush.xpose.msra.mxu0 0.0
        %2067 = vmatpush.xpose.msra.mxu0 0.0
        %2068 = vmatpush.xpose.msra.mxu0 0.0
        %2069 = vmatpush.xpose.msra.mxu0 %v2053
        %2070 = vmatpush.xpose.msra.mxu0 %v2051
        %2071 = vmatmul.f32.gmra.mxu0 %v2046
        %v2072 = vpop.f32.mrf.mxu0
        %v2073 = vadd.f32 0.0, %v2072
        %2074 = vmatmul.f32.gmra.mxu0 %v2049
        %v2075 = vpop.f32.mrf.mxu0
        %v2076 = vadd.f32 0.0, %v2075
        %2077 = vdwg.mxu0
        %vm2078 = vcmask 121856
        %v2079 = vsel %vm2078, %v2073, -inf
        %2080 = vmax.xlane.f32.xlu0 %v2079
        %v2081 = vpop.xlane.xlu0 %2080
        %vm2082 = vcmask 120832
        %v2083 = vsel %vm2082, %v2076, -inf
        %2084 = vmax.xlane.f32.xlu0 %v2083
        %v2085 = vpop.xlane.xlu0 %2084
        %v2086 = vsub.f32 %v2073, %v2081
        %v2087 = vsub.f32 %v2076, %v2085
        %v2088 = vmul.f32 %v2086, 1.442695
        %v2089 = vpow.pop %v2088
        %v2090 = vmul.f32 %v2087, 1.442695
        %v2091 = vpow.pop %v2090
        %v2092 = vsel %vm2078, %v2089, 0.0
        %2093 = vadd.xlane.f32.xlu0 %v2092
        %v2094 = vpop.xlane.xlu0 %2093
        %v2095 = vsel %vm2082, %v2091, 0.0
        %2096 = vadd.xlane.f32.xlu0 %v2095
        %v2097 = vpop.xlane.xlu0 %2096
        %v2098 = vrcp.pop %v2094
        %v2099 = vmul.f32 %v2094, %v2098
        %v2100 = vsub.f32 1.0, %v2099
        %v2101 = vmul.f32 %v2098, %v2100
        %v2102 = vadd.f32 %v2098, %v2101
        %vm2103 = vweird.f32 %v2094
        %vm2104 = vweird.f32 %v2098
        %vm2105 = vmor %vm2103, %vm2104
        %v2106 = vsel %vm2105, %v2098, %v2102
        %v2107 = vand.u32 2147483647, %v2094
        %vm2108 = vcmp.eq.f32.partialorder %v2107, 8.507059e+37
        %v2109 = vand.u32 %v2094, 2147483648
        %v2110 = vor.u32 1.1754944e-38, %v2109
        %v2111 = vsel %vm2108, %v2110, %v2106
        %v2112 = vmul.f32 %v2089, %v2111
        %v2113 = vrcp.pop %v2097
        %v2114 = vmul.f32 %v2097, %v2113
        %v2115 = vsub.f32 1.0, %v2114
        %v2116 = vmul.f32 %v2113, %v2115
        %v2117 = vadd.f32 %v2113, %v2116
        %vm2118 = vweird.f32 %v2097
        %vm2119 = vweird.f32 %v2113
        %vm2120 = vmor %vm2118, %vm2119
        %v2121 = vsel %vm2120, %v2113, %v2117
        %v2122 = vand.u32 2147483647, %v2097
        %vm2123 = vcmp.eq.f32.partialorder %v2122, 8.507059e+37
        %v2124 = vand.u32 %v2097, 2147483648
        %v2125 = vor.u32 1.1754944e-38, %v2124
        %v2126 = vsel %vm2123, %v2125, %v2121
        %v2127 = vmul.f32 %v2091, %v2126
        %2128 = vrot.lane.b32.xlu0 %v2032, 96
        %v2129 = vpop.permute.xlu0 %2128
        %2130 = vrot.lane.b32.xlu0 %v2035, 96
        %v2131 = vpop.permute.xlu0 %2130
        %v2134 = vsel %vm2078, %v2112, 0
        %v2137 = vsel %vm2078, %v2127, 0
        %v2139 = vsel %vm1042, %v2131, 0
        %2141 = vmatpush.msra.mxu0 0.0
        %2142 = vmatpush.msra.mxu0 0.0
        %2143 = vmatpush.msra.mxu0 0.0
        %2144 = vmatpush.msra.mxu0 0.0
        %2145 = vmatpush.msra.mxu0 0.0
        %2146 = vmatpush.msra.mxu0 0.0
        %2147 = vmatpush.msra.mxu0 0.0
        %2148 = vmatpush.msra.mxu0 0.0
        %2149 = vmatpush.msra.mxu0 0.0
        %2150 = vmatpush.msra.mxu0 0.0
        %2151 = vmatpush.msra.mxu0 0.0
        %2152 = vmatpush.msra.mxu0 0.0
        %2153 = vmatpush.msra.mxu0 0.0
        %2154 = vmatpush.msra.mxu0 0.0
        %2155 = vmatpush.msra.mxu0 %v2139
        %2156 = vmatpush.msra.mxu0 %v2129
        %2157 = vmatmul.f32.gmra.mxu0 %v2134
        %v2158 = vpop.f32.mrf.mxu0
        %v2159 = vadd.f32 0.0, %v2158
        %2160 = vmatmul.f32.gmra.mxu0 %v2137
        %v2161 = vpop.f32.mrf.mxu0
        %v2162 = vadd.f32 0.0, %v2161
        %2163 = vdwg.mxu0
        %2164 = vrot.lane.b32.xlu0 %v2037, 80
        %v2165 = vpop.permute.xlu0 %2164
        %2166 = vrot.lane.b32.xlu0 %v2038, 80
        %v2167 = vpop.permute.xlu0 %2166
        %2168 = vrot.lane.b32.xlu0 %v2032, 64
        %v2169 = vpop.permute.xlu0 %2168
        %2170 = vrot.lane.b32.xlu0 %v2035, 64
        %v2171 = vpop.permute.xlu0 %2170
        %v2172 = vsel %vm1179, %v2165, 0
        %v2174 = vsel %vm1179, %v2167, 0
        %v2176 = vsel %vm1179, %v2169, 0
        %v2178 = vsel %vm1179, %v2171, 0
        %2180 = vmatpush.xpose.msra.mxu0 0.0
        %2181 = vmatpush.xpose.msra.mxu0 0.0
        %2182 = vmatpush.xpose.msra.mxu0 0.0
        %2183 = vmatpush.xpose.msra.mxu0 0.0
        %2184 = vmatpush.xpose.msra.mxu0 0.0
        %2185 = vmatpush.xpose.msra.mxu0 0.0
        %2186 = vmatpush.xpose.msra.mxu0 0.0
        %2187 = vmatpush.xpose.msra.mxu0 0.0
        %2188 = vmatpush.xpose.msra.mxu0 0.0
        %2189 = vmatpush.xpose.msra.mxu0 0.0
        %2190 = vmatpush.xpose.msra.mxu0 0.0
        %2191 = vmatpush.xpose.msra.mxu0 0.0
        %2192 = vmatpush.xpose.msra.mxu0 0.0
        %2193 = vmatpush.xpose.msra.mxu0 0.0
        %2194 = vmatpush.xpose.msra.mxu0 %v2178
        %2195 = vmatpush.xpose.msra.mxu0 %v2176
        %2196 = vmatmul.f32.gmra.mxu0 %v2172
        %v2197 = vpop.f32.mrf.mxu0
        %v2198 = vadd.f32 0.0, %v2197
        %2199 = vmatmul.f32.gmra.mxu0 %v2174
        %v2200 = vpop.f32.mrf.mxu0
        %v2201 = vadd.f32 0.0, %v2200
        %2202 = vdwg.mxu0
        %v2203 = vsel %vm2078, %v2198, -inf
        %2204 = vmax.xlane.f32.xlu0 %v2203
        %v2205 = vpop.xlane.xlu0 %2204
        %v2206 = vsel %vm2082, %v2201, -inf
        %2207 = vmax.xlane.f32.xlu0 %v2206
        %v2208 = vpop.xlane.xlu0 %2207
        %v2209 = vsub.f32 %v2198, %v2205
        %v2210 = vsub.f32 %v2201, %v2208
        %v2211 = vmul.f32 %v2209, 1.442695
        %v2212 = vpow.pop %v2211
        %v2213 = vmul.f32 %v2210, 1.442695
        %v2214 = vpow.pop %v2213
        %v2215 = vsel %vm2078, %v2212, 0.0
        %2216 = vadd.xlane.f32.xlu0 %v2215
        %v2217 = vpop.xlane.xlu0 %2216
        %v2218 = vsel %vm2082, %v2214, 0.0
        %2219 = vadd.xlane.f32.xlu0 %v2218
        %v2220 = vpop.xlane.xlu0 %2219
        %v2221 = vrcp.pop %v2217
        %v2222 = vmul.f32 %v2217, %v2221
        %v2223 = vsub.f32 1.0, %v2222
        %v2224 = vmul.f32 %v2221, %v2223
        %v2225 = vadd.f32 %v2221, %v2224
        %vm2226 = vweird.f32 %v2217
        %vm2227 = vweird.f32 %v2221
        %vm2228 = vmor %vm2226, %vm2227
        %v2229 = vsel %vm2228, %v2221, %v2225
        %v2230 = vand.u32 2147483647, %v2217
        %vm2231 = vcmp.eq.f32.partialorder %v2230, 8.507059e+37
        %v2232 = vand.u32 %v2217, 2147483648
        %v2233 = vor.u32 1.1754944e-38, %v2232
        %v2234 = vsel %vm2231, %v2233, %v2229
        %v2235 = vmul.f32 %v2212, %v2234
        %v2236 = vrcp.pop %v2220
        %v2237 = vmul.f32 %v2220, %v2236
        %v2238 = vsub.f32 1.0, %v2237
        %v2239 = vmul.f32 %v2236, %v2238
        %v2240 = vadd.f32 %v2236, %v2239
        %vm2241 = vweird.f32 %v2220
        %vm2242 = vweird.f32 %v2236
        %vm2243 = vmor %vm2241, %vm2242
        %v2244 = vsel %vm2243, %v2236, %v2240
        %v2245 = vand.u32 2147483647, %v2220
        %vm2246 = vcmp.eq.f32.partialorder %v2245, 8.507059e+37
        %v2247 = vand.u32 %v2220, 2147483648
        %v2248 = vor.u32 1.1754944e-38, %v2247
        %v2249 = vsel %vm2246, %v2248, %v2244
        %v2250 = vmul.f32 %v2214, %v2249
        %2251 = vrot.lane.b32.xlu0 %v2032, 48
        %v2252 = vpop.permute.xlu0 %2251
        %2253 = vrot.lane.b32.xlu0 %v2035, 48
        %v2254 = vpop.permute.xlu0 %2253
        %v2257 = vsel %vm2078, %v2235, 0
        %v2260 = vsel %vm2078, %v2250, 0
        %v2262 = vsel %vm1042, %v2254, 0
        %2264 = vmatpush.msra.mxu0 0.0
        %2265 = vmatpush.msra.mxu0 0.0
        %2266 = vmatpush.msra.mxu0 0.0
        %2267 = vmatpush.msra.mxu0 0.0
        %2268 = vmatpush.msra.mxu0 0.0
        %2269 = vmatpush.msra.mxu0 0.0
        %2270 = vmatpush.msra.mxu0 0.0
        %2271 = vmatpush.msra.mxu0 0.0
        %2272 = vmatpush.msra.mxu0 0.0
        %2273 = vmatpush.msra.mxu0 0.0
        %2274 = vmatpush.msra.mxu0 0.0
        %2275 = vmatpush.msra.mxu0 0.0
        %2276 = vmatpush.msra.mxu0 0.0
        %2277 = vmatpush.msra.mxu0 0.0
        %2278 = vmatpush.msra.mxu0 %v2262
        %2279 = vmatpush.msra.mxu0 %v2252
        %2280 = vmatmul.f32.gmra.mxu0 %v2257
        %v2281 = vpop.f32.mrf.mxu0
        %v2282 = vadd.f32 0.0, %v2281
        %2283 = vmatmul.f32.gmra.mxu0 %v2260
        %v2284 = vpop.f32.mrf.mxu0
        %v2285 = vadd.f32 0.0, %v2284
        %2286 = vdwg.mxu0
        %2289 = vrot.lane.b32.xlu0 %v2282, 16
        %v2290 = vpop.permute.xlu0 %2289
        %2291 = vrot.lane.b32.xlu0 %v2285, 16
        %v2292 = vpop.permute.xlu0 %2291
        %v2295 = vsel %vm1179, %v2159, %v2290
        %v2296 = vsel %vm1179, %v2162, %v2292
        %v2297 = vld [vmem:[%s16] sm:$0xff]
        %v2298 = vld [vmem:[%s16 + $0x8] sm:$0xff]
        %v2299 = vld [vmem:[%s16 + $0x10] sm:$0xff]
        %v2300 = vld [vmem:[%s16 + $0x18] sm:$0xff]
        %v2301 = vld [vmem:[%s17] sm:$0x1]
        %v2303 = vperm.slane %v2301, 0
        %v2306 = vsel %vm1755, %v2295, 0
        %v2309 = vsel %vm1755, %v2296, 0
        %2311 = vmatpush.msra.mxu0 0.0
        %2312 = vmatpush.msra.mxu0 0.0
        %2313 = vmatpush.msra.mxu0 0.0
        %2314 = vmatpush.msra.mxu0 0.0
        %2315 = vmatpush.msra.mxu0 0.0
        %2316 = vmatpush.msra.mxu0 0.0
        %2317 = vmatpush.msra.mxu0 0.0
        %2318 = vmatpush.msra.mxu0 0.0
        %2319 = vmatpush.msra.mxu0 0.0
        %2320 = vmatpush.msra.mxu0 0.0
        %2321 = vmatpush.msra.mxu0 0.0
        %2322 = vmatpush.msra.mxu0 0.0
        %2323 = vmatpush.msra.mxu0 %v2300
        %2324 = vmatpush.msra.mxu0 %v2299
        %2325 = vmatpush.msra.mxu0 %v2298
        %2326 = vmatpush.msra.mxu0 %v2297
        %2327 = vmatmul.f32.gmra.mxu0 %v2306
        %v2328 = vpop.f32.mrf.mxu0
        %v2329 = vadd.f32 %v2303, %v2328
        %2330 = vmatmul.f32.gmra.mxu0 %v2309
        %v2331 = vpop.f32.mrf.mxu0
        %v2332 = vadd.f32 %v2303, %v2331
        %2333 = vdwg.mxu0
        %v2334 = vadd.f32 %v1998, %v2329
        %v2335 = vadd.f32 %v1999, %v2332
        %v2336 = vld [vmem:[%s18] sm:$0x1]
        %v2337 = vld [vmem:[%s19] sm:$0x1]
        %v2338 = vsel %vm1755, %v2334, 0.0
        %2339 = vadd.xlane.f32.xlu0 %v2338
        %v2340 = vpop.xlane.xlu0 %2339
        %v2341 = vsel %vm1762, %v2335, 0.0
        %2342 = vadd.xlane.f32.xlu0 %v2341
        %v2343 = vpop.xlane.xlu0 %2342
        %v2344 = vmul.f32 %v2340, %v1951
        %v2345 = vmul.f32 %v2343, %v1951
        %v2346 = vsub.f32 %v2334, %v2344
        %v2347 = vsub.f32 %v2335, %v2345
        %v2348 = vmul.f32 %v2346, %v2346
        %v2349 = vmul.f32 %v2347, %v2347
        %v2350 = vsel %vm1755, %v2348, 0.0
        %2351 = vadd.xlane.f32.xlu0 %v2350
        %v2352 = vpop.xlane.xlu0 %2351
        %v2353 = vsel %vm1762, %v2349, 0.0
        %2354 = vadd.xlane.f32.xlu0 %v2353
        %v2355 = vpop.xlane.xlu0 %2354
        %v2356 = vmul.f32 %v2352, %v1951
        %v2357 = vmul.f32 %v2355, %v1951
        %v2358 = vadd.f32 %v2356, 1e-05
        %v2359 = vadd.f32 %v2357, 1e-05
        %v2360 = vrsqrt.pop %v2358
        %v2361 = vmul.f32 %v2360, %v2358
        %v2362 = vmul.f32 %v2361, %v2360
        %v2363 = vmul.f32 0.5, %v2362
        %v2364 = vsub.f32 1.5, %v2363
        %v2365 = vmul.f32 %v2360, %v2364
        %vm2366 = vweird.f32 %v2358
        %vm2367 = vweird.f32 %v2360
        %vm2368 = vmor %vm2366, %vm2367
        %v2369 = vsel %vm2368, %v2360, %v2365
        %v2370 = vrsqrt.pop %v2359
        %v2371 = vmul.f32 %v2370, %v2359
        %v2372 = vmul.f32 %v2371, %v2370
        %v2373 = vmul.f32 0.5, %v2372
        %v2374 = vsub.f32 1.5, %v2373
        %v2375 = vmul.f32 %v2370, %v2374
        %vm2376 = vweird.f32 %v2359
        %vm2377 = vweird.f32 %v2370
        %vm2378 = vmor %vm2376, %vm2377
        %v2379 = vsel %vm2378, %v2370, %v2375
        %v2380 = vmul.f32 %v2346, %v2369
        %v2381 = vmul.f32 %v2347, %v2379
        %v2383 = vperm.slane %v2336, 0
        %v2385 = vmul.f32 %v2380, %v2383
        %v2386 = vmul.f32 %v2381, %v2383
        %v2388 = vperm.slane %v2337, 0
        %v2390 = vadd.f32 %v2385, %v2388
        %v2391 = vadd.f32 %v2386, %v2388
        %v2392 = vld [vmem:[#allocation15] sm:$0xff]
        %v2393 = vld [vmem:[#allocation15 + $0x8] sm:$0xff]
        %v2394 = vld [vmem:[#allocation15 + $0x10] sm:$0xff]
        %v2395 = vld [vmem:[#allocation15 + $0x18] sm:$0xff]
        %v2396 = vld [vmem:[%s21] sm:$0x1]
        %v2398 = vperm.slane %v2396, 0
        %v2401 = vsel %vm1755, %v2390, 0
        %v2404 = vsel %vm1755, %v2391, 0
        %2406 = vmatpush.msra.mxu0 0.0
        %2407 = vmatpush.msra.mxu0 0.0
        %2408 = vmatpush.msra.mxu0 0.0
        %2409 = vmatpush.msra.mxu0 0.0
        %2410 = vmatpush.msra.mxu0 0.0
        %2411 = vmatpush.msra.mxu0 0.0
        %2412 = vmatpush.msra.mxu0 0.0
        %2413 = vmatpush.msra.mxu0 0.0
        %2414 = vmatpush.msra.mxu0 0.0
        %2415 = vmatpush.msra.mxu0 0.0
        %2416 = vmatpush.msra.mxu0 0.0
        %2417 = vmatpush.msra.mxu0 0.0
        %2418 = vmatpush.msra.mxu0 %v2395
        %2419 = vmatpush.msra.mxu0 %v2394
        %2420 = vmatpush.msra.mxu0 %v2393
        %2421 = vmatpush.msra.mxu0 %v2392
        %2422 = vmatmul.f32.gmra.mxu0 %v2401
        %v2423 = vpop.f32.mrf.mxu0
        %v2424 = vadd.f32 %v2398, %v2423
        %2425 = vmatmul.f32.gmra.mxu0 %v2404
        %v2426 = vpop.f32.mrf.mxu0
        %v2427 = vadd.f32 %v2398, %v2426
        %2428 = vdwg.mxu0
        %v2429 = vmul.f32 %v2424, 0.5
        %v2430 = vmul.f32 %v2427, 0.5
        %v2431 = vmul.f32 %v2424, 0.044715
        %v2432 = vmul.f32 %v2427, 0.044715
        %v2433 = vmul.f32 %v2431, %v2424
        %v2434 = vmul.f32 %v2432, %v2427
        %v2435 = vmul.f32 %v2433, %v2424
        %v2436 = vmul.f32 %v2434, %v2427
        %v2437 = vadd.f32 %v2424, %v2435
        %v2438 = vadd.f32 %v2427, %v2436
        %v2439 = vmul.f32 %v2437, 0.7978846
        %v2440 = vmul.f32 %v2438, 0.7978846
        %v2441 = vtanh.pop %v2439
        %v2442 = vtanh.pop %v2440
        %v2443 = vadd.f32 %v2441, 1.0
        %v2444 = vadd.f32 %v2442, 1.0
        %v2445 = vmul.f32 %v2429, %v2443
        %v2446 = vmul.f32 %v2430, %v2444
        %v2447 = vld [vmem:[%s22] sm:$0xff]
        %v2448 = vld [vmem:[%s22 + $0x8] sm:$0xff]
        %v2449 = vld [vmem:[%s22 + $0x10] sm:$0xff]
        %v2450 = vld [vmem:[%s22 + $0x18] sm:$0xff]
        %v2451 = vld [vmem:[%s22 + $0x20] sm:$0xff]
        %v2452 = vld [vmem:[%s22 + $0x28] sm:$0xff]
        %v2453 = vld [vmem:[%s22 + $0x30] sm:$0xff]
        %v2454 = vld [vmem:[%s22 + $0x38] sm:$0xff]
        %v2455 = vld [vmem:[#allocation16] sm:$0x1]
        %v2457 = vperm.slane %v2455, 0
        %vm2459 = vcmask 523264
        %v2461 = vsel %vm2459, %v2445, 0
        %v2464 = vsel %vm2459, %v2446, 0
        %2466 = vmatpush.msra.mxu0 0.0
        %2467 = vmatpush.msra.mxu0 0.0
        %2468 = vmatpush.msra.mxu0 0.0
        %2469 = vmatpush.msra.mxu0 0.0
        %2470 = vmatpush.msra.mxu0 0.0
        %2471 = vmatpush.msra.mxu0 0.0
        %2472 = vmatpush.msra.mxu0 0.0
        %2473 = vmatpush.msra.mxu0 0.0
        %2474 = vmatpush.msra.mxu0 %v2454
        %2475 = vmatpush.msra.mxu0 %v2453
        %2476 = vmatpush.msra.mxu0 %v2452
        %2477 = vmatpush.msra.mxu0 %v2451
        %2478 = vmatpush.msra.mxu0 %v2450
        %2479 = vmatpush.msra.mxu0 %v2449
        %2480 = vmatpush.msra.mxu0 %v2448
        %2481 = vmatpush.msra.mxu0 %v2447
        %2482 = vmatmul.f32.gmra.mxu0 %v2461
        %v2483 = vpop.f32.mrf.mxu0
        %v2484 = vadd.f32 %v2457, %v2483
        %2485 = vmatmul.f32.gmra.mxu0 %v2464
        %v2486 = vpop.f32.mrf.mxu0
        %v2487 = vadd.f32 %v2457, %v2486
        %2488 = vdwg.mxu0
        %v2489 = vadd.f32 %v2390, %v2484
        %v2490 = vadd.f32 %v2391, %v2487
        %v2491 = vld [vmem:[%s24] sm:$0x1]
        %v2492 = vld [vmem:[%s25] sm:$0x1]
        %v2493 = vsel %vm1755, %v2489, 0.0
        %2494 = vadd.xlane.f32.xlu0 %v2493
        %v2495 = vpop.xlane.xlu0 %2494
        %v2496 = vsel %vm1762, %v2490, 0.0
        %2497 = vadd.xlane.f32.xlu0 %v2496
        %v2498 = vpop.xlane.xlu0 %2497
        %v2499 = vmul.f32 %v2495, %v1951
        %v2500 = vmul.f32 %v2498, %v1951
        %v2501 = vsub.f32 %v2489, %v2499
        %v2502 = vsub.f32 %v2490, %v2500
        %v2503 = vmul.f32 %v2501, %v2501
        %v2504 = vmul.f32 %v2502, %v2502
        %v2505 = vsel %vm1755, %v2503, 0.0
        %2506 = vadd.xlane.f32.xlu0 %v2505
        %v2507 = vpop.xlane.xlu0 %2506
        %v2508 = vsel %vm1762, %v2504, 0.0
        %2509 = vadd.xlane.f32.xlu0 %v2508
        %v2510 = vpop.xlane.xlu0 %2509
        %v2511 = vmul.f32 %v2507, %v1951
        %v2512 = vmul.f32 %v2510, %v1951
        %v2513 = vadd.f32 %v2511, 1e-05
        %v2514 = vadd.f32 %v2512, 1e-05
        %v2515 = vrsqrt.pop %v2513
        %v2516 = vmul.f32 %v2515, %v2513
        %v2517 = vmul.f32 %v2516, %v2515
        %v2518 = vmul.f32 0.5, %v2517
        %v2519 = vsub.f32 1.5, %v2518
        %v2520 = vmul.f32 %v2515, %v2519
        %vm2521 = vweird.f32 %v2513
        %vm2522 = vweird.f32 %v2515
        %vm2523 = vmor %vm2521, %vm2522
        %v2524 = vsel %vm2523, %v2515, %v2520
        %v2525 = vrsqrt.pop %v2514
        %v2526 = vmul.f32 %v2525, %v2514
        %v2527 = vmul.f32 %v2526, %v2525
        %v2528 = vmul.f32 0.5, %v2527
        %v2529 = vsub.f32 1.5, %v2528
        %v2530 = vmul.f32 %v2525, %v2529
        %vm2531 = vweird.f32 %v2514
        %vm2532 = vweird.f32 %v2525
        %vm2533 = vmor %vm2531, %vm2532
        %v2534 = vsel %vm2533, %v2525, %v2530
        %v2535 = vmul.f32 %v2501, %v2524
        %v2536 = vmul.f32 %v2502, %v2534
        %v2538 = vperm.slane %v2491, 0
        %v2540 = vmul.f32 %v2535, %v2538
        %v2541 = vmul.f32 %v2536, %v2538
        %v2543 = vperm.slane %v2492, 0
        %v2545 = vadd.f32 %v2540, %v2543
        %v2546 = vadd.f32 %v2541, %v2543
        %s2547 = scalar_lea.vmem %s14, 32
        %v2548 = vld [vmem:[%s2547] sm:$0xff]
        %v2549 = vld [vmem:[%s2547 + $0x8] sm:$0xff]
        %v2550 = vld [vmem:[%s2547 + $0x10] sm:$0xff]
        %v2551 = vld [vmem:[%s2547 + $0x18] sm:$0xff]
        %s2552 = scalar_lea.vmem %s15, 1
        %v2553 = vld [vmem:[%s2552] sm:$0x1]
        %v2555 = vperm.slane %v2553, 0
        %v2558 = vsel %vm1755, %v2545, 0
        %v2561 = vsel %vm1755, %v2546, 0
        %2563 = vmatpush.msra.mxu0 0.0
        %2564 = vmatpush.msra.mxu0 0.0
        %2565 = vmatpush.msra.mxu0 0.0
        %2566 = vmatpush.msra.mxu0 0.0
        %2567 = vmatpush.msra.mxu0 0.0
        %2568 = vmatpush.msra.mxu0 0.0
        %2569 = vmatpush.msra.mxu0 0.0
        %2570 = vmatpush.msra.mxu0 0.0
        %2571 = vmatpush.msra.mxu0 0.0
        %2572 = vmatpush.msra.mxu0 0.0
        %2573 = vmatpush.msra.mxu0 0.0
        %2574 = vmatpush.msra.mxu0 0.0
        %2575 = vmatpush.msra.mxu0 %v2551
        %2576 = vmatpush.msra.mxu0 %v2550
        %2577 = vmatpush.msra.mxu0 %v2549
        %2578 = vmatpush.msra.mxu0 %v2548
        %2579 = vmatmul.f32.gmra.mxu0 %v2558
        %v2580 = vpop.f32.mrf.mxu0
        %v2581 = vadd.f32 %v2555, %v2580
        %2582 = vmatmul.f32.gmra.mxu0 %v2561
        %v2583 = vpop.f32.mrf.mxu0
        %v2584 = vadd.f32 %v2555, %v2583
        %2585 = vdwg.mxu0
        %v2586 = vmul.f32 %v2581, 0.25
        %v2587 = vmul.f32 %v2584, 0.25
        %2590 = vrot.lane.b32.xlu0 %v2581, 112
        %v2591 = vpop.permute.xlu0 %2590
        %2592 = vrot.lane.b32.xlu0 %v2584, 112
        %v2593 = vpop.permute.xlu0 %2592
        %v2595 = vsel %vm1179, %v2586, 0
        %v2598 = vsel %vm1179, %v2587, 0
        %v2600 = vsel %vm1179, %v2591, 0
        %v2602 = vsel %vm1179, %v2593, 0
        %2604 = vmatpush.xpose.msra.mxu0 0.0
        %2605 = vmatpush.xpose.msra.mxu0 0.0
        %2606 = vmatpush.xpose.msra.mxu0 0.0
        %2607 = vmatpush.xpose.msra.mxu0 0.0
        %2608 = vmatpush.xpose.msra.mxu0 0.0
        %2609 = vmatpush.xpose.msra.mxu0 0.0
        %2610 = vmatpush.xpose.msra.mxu0 0.0
        %2611 = vmatpush.xpose.msra.mxu0 0.0
        %2612 = vmatpush.xpose.msra.mxu0 0.0
        %2613 = vmatpush.xpose.msra.mxu0 0.0
        %2614 = vmatpush.xpose.msra.mxu0 0.0
        %2615 = vmatpush.xpose.msra.mxu0 0.0
        %2616 = vmatpush.xpose.msra.mxu0 0.0
        %2617 = vmatpush.xpose.msra.mxu0 0.0
        %2618 = vmatpush.xpose.msra.mxu0 %v2602
        %2619 = vmatpush.xpose.msra.mxu0 %v2600
        %2620 = vmatmul.f32.gmra.mxu0 %v2595
        %v2621 = vpop.f32.mrf.mxu0
        %v2622 = vadd.f32 0.0, %v2621
        %2623 = vmatmul.f32.gmra.mxu0 %v2598
        %v2624 = vpop.f32.mrf.mxu0
        %v2625 = vadd.f32 0.0, %v2624
        %2626 = vdwg.mxu0
        %v2627 = vsel %vm2078, %v2622, -inf
        %2628 = vmax.xlane.f32.xlu0 %v2627
        %v2629 = vpop.xlane.xlu0 %2628
        %v2630 = vsel %vm2082, %v2625, -inf
        %2631 = vmax.xlane.f32.xlu0 %v2630
        %v2632 = vpop.xlane.xlu0 %2631
        %v2633 = vsub.f32 %v2622, %v2629
        %v2634 = vsub.f32 %v2625, %v2632
        %v2635 = vmul.f32 %v2633, 1.442695
        %v2636 = vpow.pop %v2635
        %v2637 = vmul.f32 %v2634, 1.442695
        %v2638 = vpow.pop %v2637
        %v2639 = vsel %vm2078, %v2636, 0.0
        %2640 = vadd.xlane.f32.xlu0 %v2639
        %v2641 = vpop.xlane.xlu0 %2640
        %v2642 = vsel %vm2082, %v2638, 0.0
        %2643 = vadd.xlane.f32.xlu0 %v2642
        %v2644 = vpop.xlane.xlu0 %2643
        %v2645 = vrcp.pop %v2641
        %v2646 = vmul.f32 %v2641, %v2645
        %v2647 = vsub.f32 1.0, %v2646
        %v2648 = vmul.f32 %v2645, %v2647
        %v2649 = vadd.f32 %v2645, %v2648
        %vm2650 = vweird.f32 %v2641
        %vm2651 = vweird.f32 %v2645
        %vm2652 = vmor %vm2650, %vm2651
        %v2653 = vsel %vm2652, %v2645, %v2649
        %v2654 = vand.u32 2147483647, %v2641
        %vm2655 = vcmp.eq.f32.partialorder %v2654, 8.507059e+37
        %v2656 = vand.u32 %v2641, 2147483648
        %v2657 = vor.u32 1.1754944e-38, %v2656
        %v2658 = vsel %vm2655, %v2657, %v2653
        %v2659 = vmul.f32 %v2636, %v2658
        %v2660 = vrcp.pop %v2644
        %v2661 = vmul.f32 %v2644, %v2660
        %v2662 = vsub.f32 1.0, %v2661
        %v2663 = vmul.f32 %v2660, %v2662
        %v2664 = vadd.f32 %v2660, %v2663
        %vm2665 = vweird.f32 %v2644
        %vm2666 = vweird.f32 %v2660
        %vm2667 = vmor %vm2665, %vm2666
        %v2668 = vsel %vm2667, %v2660, %v2664
        %v2669 = vand.u32 2147483647, %v2644
        %vm2670 = vcmp.eq.f32.partialorder %v2669, 8.507059e+37
        %v2671 = vand.u32 %v2644, 2147483648
        %v2672 = vor.u32 1.1754944e-38, %v2671
        %v2673 = vsel %vm2670, %v2672, %v2668
        %v2674 = vmul.f32 %v2638, %v2673
        %2675 = vrot.lane.b32.xlu0 %v2581, 96
        %v2676 = vpop.permute.xlu0 %2675
        %2677 = vrot.lane.b32.xlu0 %v2584, 96
        %v2678 = vpop.permute.xlu0 %2677
        %v2681 = vsel %vm2078, %v2659, 0
        %v2684 = vsel %vm2078, %v2674, 0
        %v2686 = vsel %vm1042, %v2678, 0
        %2688 = vmatpush.msra.mxu0 0.0
        %2689 = vmatpush.msra.mxu0 0.0
        %2690 = vmatpush.msra.mxu0 0.0
        %2691 = vmatpush.msra.mxu0 0.0
        %2692 = vmatpush.msra.mxu0 0.0
        %2693 = vmatpush.msra.mxu0 0.0
        %2694 = vmatpush.msra.mxu0 0.0
        %2695 = vmatpush.msra.mxu0 0.0
        %2696 = vmatpush.msra.mxu0 0.0
        %2697 = vmatpush.msra.mxu0 0.0
        %2698 = vmatpush.msra.mxu0 0.0
        %2699 = vmatpush.msra.mxu0 0.0
        %2700 = vmatpush.msra.mxu0 0.0
        %2701 = vmatpush.msra.mxu0 0.0
        %2702 = vmatpush.msra.mxu0 %v2686
        %2703 = vmatpush.msra.mxu0 %v2676
        %2704 = vmatmul.f32.gmra.mxu0 %v2681
        %v2705 = vpop.f32.mrf.mxu0
        %v2706 = vadd.f32 0.0, %v2705
        %2707 = vmatmul.f32.gmra.mxu0 %v2684
        %v2708 = vpop.f32.mrf.mxu0
        %v2709 = vadd.f32 0.0, %v2708
        %2710 = vdwg.mxu0
        %2711 = vrot.lane.b32.xlu0 %v2586, 80
        %v2712 = vpop.permute.xlu0 %2711
        %2713 = vrot.lane.b32.xlu0 %v2587, 80
        %v2714 = vpop.permute.xlu0 %2713
        %2715 = vrot.lane.b32.xlu0 %v2581, 64
        %v2716 = vpop.permute.xlu0 %2715
        %2717 = vrot.lane.b32.xlu0 %v2584, 64
        %v2718 = vpop.permute.xlu0 %2717
        %v2719 = vsel %vm1179, %v2712, 0
        %v2721 = vsel %vm1179, %v2714, 0
        %v2723 = vsel %vm1179, %v2716, 0
        %v2725 = vsel %vm1179, %v2718, 0
        %2727 = vmatpush.xpose.msra.mxu0 0.0
        %2728 = vmatpush.xpose.msra.mxu0 0.0
        %2729 = vmatpush.xpose.msra.mxu0 0.0
        %2730 = vmatpush.xpose.msra.mxu0 0.0
        %2731 = vmatpush.xpose.msra.mxu0 0.0
        %2732 = vmatpush.xpose.msra.mxu0 0.0
        %2733 = vmatpush.xpose.msra.mxu0 0.0
        %2734 = vmatpush.xpose.msra.mxu0 0.0
        %2735 = vmatpush.xpose.msra.mxu0 0.0
        %2736 = vmatpush.xpose.msra.mxu0 0.0
        %2737 = vmatpush.xpose.msra.mxu0 0.0
        %2738 = vmatpush.xpose.msra.mxu0 0.0
        %2739 = vmatpush.xpose.msra.mxu0 0.0
        %2740 = vmatpush.xpose.msra.mxu0 0.0
        %2741 = vmatpush.xpose.msra.mxu0 %v2725
        %2742 = vmatpush.xpose.msra.mxu0 %v2723
        %2743 = vmatmul.f32.gmra.mxu0 %v2719
        %v2744 = vpop.f32.mrf.mxu0
        %v2745 = vadd.f32 0.0, %v2744
        %2746 = vmatmul.f32.gmra.mxu0 %v2721
        %v2747 = vpop.f32.mrf.mxu0
        %v2748 = vadd.f32 0.0, %v2747
        %2749 = vdwg.mxu0
        %v2750 = vsel %vm2078, %v2745, -inf
        %2751 = vmax.xlane.f32.xlu0 %v2750
        %v2752 = vpop.xlane.xlu0 %2751
        %v2753 = vsel %vm2082, %v2748, -inf
        %2754 = vmax.xlane.f32.xlu0 %v2753
        %v2755 = vpop.xlane.xlu0 %2754
        %v2756 = vsub.f32 %v2745, %v2752
        %v2757 = vsub.f32 %v2748, %v2755
        %v2758 = vmul.f32 %v2756, 1.442695
        %v2759 = vpow.pop %v2758
        %v2760 = vmul.f32 %v2757, 1.442695
        %v2761 = vpow.pop %v2760
        %v2762 = vsel %vm2078, %v2759, 0.0
        %2763 = vadd.xlane.f32.xlu0 %v2762
        %v2764 = vpop.xlane.xlu0 %2763
        %v2765 = vsel %vm2082, %v2761, 0.0
        %2766 = vadd.xlane.f32.xlu0 %v2765
        %v2767 = vpop.xlane.xlu0 %2766
        %v2768 = vrcp.pop %v2764
        %v2769 = vmul.f32 %v2764, %v2768
        %v2770 = vsub.f32 1.0, %v2769
        %v2771 = vmul.f32 %v2768, %v2770
        %v2772 = vadd.f32 %v2768, %v2771
        %vm2773 = vweird.f32 %v2764
        %vm2774 = vweird.f32 %v2768
        %vm2775 = vmor %vm2773, %vm2774
        %v2776 = vsel %vm2775, %v2768, %v2772
        %v2777 = vand.u32 2147483647, %v2764
        %vm2778 = vcmp.eq.f32.partialorder %v2777, 8.507059e+37
        %v2779 = vand.u32 %v2764, 2147483648
        %v2780 = vor.u32 1.1754944e-38, %v2779
        %v2781 = vsel %vm2778, %v2780, %v2776
        %v2782 = vmul.f32 %v2759, %v2781
        %v2783 = vrcp.pop %v2767
        %v2784 = vmul.f32 %v2767, %v2783
        %v2785 = vsub.f32 1.0, %v2784
        %v2786 = vmul.f32 %v2783, %v2785
        %v2787 = vadd.f32 %v2783, %v2786
        %vm2788 = vweird.f32 %v2767
        %vm2789 = vweird.f32 %v2783
        %vm2790 = vmor %vm2788, %vm2789
        %v2791 = vsel %vm2790, %v2783, %v2787
        %v2792 = vand.u32 2147483647, %v2767
        %vm2793 = vcmp.eq.f32.partialorder %v2792, 8.507059e+37
        %v2794 = vand.u32 %v2767, 2147483648
        %v2795 = vor.u32 1.1754944e-38, %v2794
        %v2796 = vsel %vm2793, %v2795, %v2791
        %v2797 = vmul.f32 %v2761, %v2796
        %2798 = vrot.lane.b32.xlu0 %v2581, 48
        %v2799 = vpop.permute.xlu0 %2798
        %2800 = vrot.lane.b32.xlu0 %v2584, 48
        %v2801 = vpop.permute.xlu0 %2800
        %v2804 = vsel %vm2078, %v2782, 0
        %v2807 = vsel %vm2078, %v2797, 0
        %v2809 = vsel %vm1042, %v2801, 0
        %2811 = vmatpush.msra.mxu0 0.0
        %2812 = vmatpush.msra.mxu0 0.0
        %2813 = vmatpush.msra.mxu0 0.0
        %2814 = vmatpush.msra.mxu0 0.0
        %2815 = vmatpush.msra.mxu0 0.0
        %2816 = vmatpush.msra.mxu0 0.0
        %2817 = vmatpush.msra.mxu0 0.0
        %2818 = vmatpush.msra.mxu0 0.0
        %2819 = vmatpush.msra.mxu0 0.0
        %2820 = vmatpush.msra.mxu0 0.0
        %2821 = vmatpush.msra.mxu0 0.0
        %2822 = vmatpush.msra.mxu0 0.0
        %2823 = vmatpush.msra.mxu0 0.0
        %2824 = vmatpush.msra.mxu0 0.0
        %2825 = vmatpush.msra.mxu0 %v2809
        %2826 = vmatpush.msra.mxu0 %v2799
        %2827 = vmatmul.f32.gmra.mxu0 %v2804
        %v2828 = vpop.f32.mrf.mxu0
        %v2829 = vadd.f32 0.0, %v2828
        %2830 = vmatmul.f32.gmra.mxu0 %v2807
        %v2831 = vpop.f32.mrf.mxu0
        %v2832 = vadd.f32 0.0, %v2831
        %2833 = vdwg.mxu0
        %2836 = vrot.lane.b32.xlu0 %v2829, 16
        %v2837 = vpop.permute.xlu0 %2836
        %2838 = vrot.lane.b32.xlu0 %v2832, 16
        %v2839 = vpop.permute.xlu0 %2838
        %v2842 = vsel %vm1179, %v2706, %v2837
        %v2843 = vsel %vm1179, %v2709, %v2839
        %s2844 = scalar_lea.vmem %s16, 32
        %v2845 = vld [vmem:[%s2844] sm:$0xff]
        %v2846 = vld [vmem:[%s2844 + $0x8] sm:$0xff]
        %v2847 = vld [vmem:[%s2844 + $0x10] sm:$0xff]
        %v2848 = vld [vmem:[%s2844 + $0x18] sm:$0xff]
        %s2849 = scalar_lea.vmem %s17, 1
        %v2850 = vld [vmem:[%s2849] sm:$0x1]
        %v2852 = vperm.slane %v2850, 0
        %v2855 = vsel %vm1755, %v2842, 0
        %v2858 = vsel %vm1755, %v2843, 0
        %2860 = vmatpush.msra.mxu0 0.0
        %2861 = vmatpush.msra.mxu0 0.0
        %2862 = vmatpush.msra.mxu0 0.0
        %2863 = vmatpush.msra.mxu0 0.0
        %2864 = vmatpush.msra.mxu0 0.0
        %2865 = vmatpush.msra.mxu0 0.0
        %2866 = vmatpush.msra.mxu0 0.0
        %2867 = vmatpush.msra.mxu0 0.0
        %2868 = vmatpush.msra.mxu0 0.0
        %2869 = vmatpush.msra.mxu0 0.0
        %2870 = vmatpush.msra.mxu0 0.0
        %2871 = vmatpush.msra.mxu0 0.0
        %2872 = vmatpush.msra.mxu0 %v2848
        %2873 = vmatpush.msra.mxu0 %v2847
        %2874 = vmatpush.msra.mxu0 %v2846
        %2875 = vmatpush.msra.mxu0 %v2845
        %2876 = vmatmul.f32.gmra.mxu0 %v2855
        %v2877 = vpop.f32.mrf.mxu0
        %v2878 = vadd.f32 %v2852, %v2877
        %2879 = vmatmul.f32.gmra.mxu0 %v2858
        %v2880 = vpop.f32.mrf.mxu0
        %v2881 = vadd.f32 %v2852, %v2880
        %2882 = vdwg.mxu0
        %v2883 = vadd.f32 %v2545, %v2878
        %v2884 = vadd.f32 %v2546, %v2881
        %s2885 = scalar_lea.vmem %s18, 1
        %v2886 = vld [vmem:[%s2885] sm:$0x1]
        %s2887 = scalar_lea.vmem %s19, 1
        %v2888 = vld [vmem:[%s2887] sm:$0x1]
        %v2889 = vsel %vm1755, %v2883, 0.0
        %2890 = vadd.xlane.f32.xlu0 %v2889
        %v2891 = vpop.xlane.xlu0 %2890
        %v2892 = vsel %vm1762, %v2884, 0.0
        %2893 = vadd.xlane.f32.xlu0 %v2892
        %v2894 = vpop.xlane.xlu0 %2893
        %v2895 = vmul.f32 %v2891, %v1951
        %v2896 = vmul.f32 %v2894, %v1951
        %v2897 = vsub.f32 %v2883, %v2895
        %v2898 = vsub.f32 %v2884, %v2896
        %v2899 = vmul.f32 %v2897, %v2897
        %v2900 = vmul.f32 %v2898, %v2898
        %v2901 = vsel %vm1755, %v2899, 0.0
        %2902 = vadd.xlane.f32.xlu0 %v2901
        %v2903 = vpop.xlane.xlu0 %2902
        %v2904 = vsel %vm1762, %v2900, 0.0
        %2905 = vadd.xlane.f32.xlu0 %v2904
        %v2906 = vpop.xlane.xlu0 %2905
        %v2907 = vmul.f32 %v2903, %v1951
        %v2908 = vmul.f32 %v2906, %v1951
        %v2909 = vadd.f32 %v2907, 1e-05
        %v2910 = vadd.f32 %v2908, 1e-05
        %v2911 = vrsqrt.pop %v2909
        %v2912 = vmul.f32 %v2911, %v2909
        %v2913 = vmul.f32 %v2912, %v2911
        %v2914 = vmul.f32 0.5, %v2913
        %v2915 = vsub.f32 1.5, %v2914
        %v2916 = vmul.f32 %v2911, %v2915
        %vm2917 = vweird.f32 %v2909
        %vm2918 = vweird.f32 %v2911
        %vm2919 = vmor %vm2917, %vm2918
        %v2920 = vsel %vm2919, %v2911, %v2916
        %v2921 = vrsqrt.pop %v2910
        %v2922 = vmul.f32 %v2921, %v2910
        %v2923 = vmul.f32 %v2922, %v2921
        %v2924 = vmul.f32 0.5, %v2923
        %v2925 = vsub.f32 1.5, %v2924
        %v2926 = vmul.f32 %v2921, %v2925
        %vm2927 = vweird.f32 %v2910
        %vm2928 = vweird.f32 %v2921
        %vm2929 = vmor %vm2927, %vm2928
        %v2930 = vsel %vm2929, %v2921, %v2926
        %v2931 = vmul.f32 %v2897, %v2920
        %v2932 = vmul.f32 %v2898, %v2930
        %v2934 = vperm.slane %v2886, 0
        %v2936 = vmul.f32 %v2931, %v2934
        %v2937 = vmul.f32 %v2932, %v2934
        %v2939 = vperm.slane %v2888, 0
        %v2941 = vadd.f32 %v2936, %v2939
        %v2942 = vadd.f32 %v2937, %v2939
        %s2943 = scalar_lea.vmem [#allocation15], 32
        %v2944 = vld [vmem:[%s2943] sm:$0xff]
        %v2945 = vld [vmem:[%s2943 + $0x8] sm:$0xff]
        %v2946 = vld [vmem:[%s2943 + $0x10] sm:$0xff]
        %v2947 = vld [vmem:[%s2943 + $0x18] sm:$0xff]
        %s2948 = scalar_lea.vmem %s21, 1
        %v2949 = vld [vmem:[%s2948] sm:$0x1]
        %v2951 = vperm.slane %v2949, 0
        %v2954 = vsel %vm1755, %v2941, 0
        %v2957 = vsel %vm1755, %v2942, 0
        %2959 = vmatpush.msra.mxu0 0.0
        %2960 = vmatpush.msra.mxu0 0.0
        %2961 = vmatpush.msra.mxu0 0.0
        %2962 = vmatpush.msra.mxu0 0.0
        %2963 = vmatpush.msra.mxu0 0.0
        %2964 = vmatpush.msra.mxu0 0.0
        %2965 = vmatpush.msra.mxu0 0.0
        %2966 = vmatpush.msra.mxu0 0.0
        %2967 = vmatpush.msra.mxu0 0.0
        %2968 = vmatpush.msra.mxu0 0.0
        %2969 = vmatpush.msra.mxu0 0.0
        %2970 = vmatpush.msra.mxu0 0.0
        %2971 = vmatpush.msra.mxu0 %v2947
        %2972 = vmatpush.msra.mxu0 %v2946
        %2973 = vmatpush.msra.mxu0 %v2945
        %2974 = vmatpush.msra.mxu0 %v2944
        %2975 = vmatmul.f32.gmra.mxu0 %v2954
        %v2976 = vpop.f32.mrf.mxu0
        %v2977 = vadd.f32 %v2951, %v2976
        %2978 = vmatmul.f32.gmra.mxu0 %v2957
        %v2979 = vpop.f32.mrf.mxu0
        %v2980 = vadd.f32 %v2951, %v2979
        %2981 = vdwg.mxu0
        %v2982 = vmul.f32 %v2977, 0.5
        %v2983 = vmul.f32 %v2980, 0.5
        %v2984 = vmul.f32 %v2977, 0.044715
        %v2985 = vmul.f32 %v2980, 0.044715
        %v2986 = vmul.f32 %v2984, %v2977
        %v2987 = vmul.f32 %v2985, %v2980
        %v2988 = vmul.f32 %v2986, %v2977
        %v2989 = vmul.f32 %v2987, %v2980
        %v2990 = vadd.f32 %v2977, %v2988
        %v2991 = vadd.f32 %v2980, %v2989
        %v2992 = vmul.f32 %v2990, 0.7978846
        %v2993 = vmul.f32 %v2991, 0.7978846
        %v2994 = vtanh.pop %v2992
        %v2995 = vtanh.pop %v2993
        %v2996 = vadd.f32 %v2994, 1.0
        %v2997 = vadd.f32 %v2995, 1.0
        %v2998 = vmul.f32 %v2982, %v2996
        %v2999 = vmul.f32 %v2983, %v2997
        %s3000 = scalar_lea.vmem %s22, 64
        %v3001 = vld [vmem:[%s3000] sm:$0xff]
        %v3002 = vld [vmem:[%s3000 + $0x8] sm:$0xff]
        %v3003 = vld [vmem:[%s3000 + $0x10] sm:$0xff]
        %v3004 = vld [vmem:[%s3000 + $0x18] sm:$0xff]
        %v3005 = vld [vmem:[%s3000 + $0x20] sm:$0xff]
        %v3006 = vld [vmem:[%s3000 + $0x28] sm:$0xff]
        %v3007 = vld [vmem:[%s3000 + $0x30] sm:$0xff]
        %v3008 = vld [vmem:[%s3000 + $0x38] sm:$0xff]
        %s3009 = scalar_lea.vmem [#allocation16], 1
        %v3010 = vld [vmem:[%s3009] sm:$0x1]
        %v3012 = vperm.slane %v3010, 0
        %v3015 = vsel %vm2459, %v2998, 0
        %v3018 = vsel %vm2459, %v2999, 0
        %3020 = vmatpush.msra.mxu0 0.0
        %3021 = vmatpush.msra.mxu0 0.0
        %3022 = vmatpush.msra.mxu0 0.0
        %3023 = vmatpush.msra.mxu0 0.0
        %3024 = vmatpush.msra.mxu0 0.0
        %3025 = vmatpush.msra.mxu0 0.0
        %3026 = vmatpush.msra.mxu0 0.0
        %3027 = vmatpush.msra.mxu0 0.0
        %3028 = vmatpush.msra.mxu0 %v3008
        %3029 = vmatpush.msra.mxu0 %v3007
        %3030 = vmatpush.msra.mxu0 %v3006
        %3031 = vmatpush.msra.mxu0 %v3005
        %3032 = vmatpush.msra.mxu0 %v3004
        %3033 = vmatpush.msra.mxu0 %v3003
        %3034 = vmatpush.msra.mxu0 %v3002
        %3035 = vmatpush.msra.mxu0 %v3001
        %3036 = vmatmul.f32.gmra.mxu0 %v3015
        %v3037 = vpop.f32.mrf.mxu0
        %v3038 = vadd.f32 %v3012, %v3037
        %3039 = vmatmul.f32.gmra.mxu0 %v3018
        %v3040 = vpop.f32.mrf.mxu0
        %v3041 = vadd.f32 %v3012, %v3040
        %3042 = vdwg.mxu0
        %v3043 = vadd.f32 %v2941, %v3038
        %v3044 = vadd.f32 %v2942, %v3041
        %s3045 = scalar_lea.vmem %s24, 1
        %v3046 = vld [vmem:[%s3045] sm:$0x1]
        %s3047 = scalar_lea.vmem %s25, 1
        %v3048 = vld [vmem:[%s3047] sm:$0x1]
        %v3049 = vsel %vm1755, %v3043, 0.0
        %3050 = vadd.xlane.f32.xlu0 %v3049
        %v3051 = vpop.xlane.xlu0 %3050
        %v3052 = vsel %vm1762, %v3044, 0.0
        %3053 = vadd.xlane.f32.xlu0 %v3052
        %v3054 = vpop.xlane.xlu0 %3053
        %v3055 = vmul.f32 %v3051, %v1951
        %v3056 = vmul.f32 %v3054, %v1951
        %v3057 = vsub.f32 %v3043, %v3055
        %v3058 = vsub.f32 %v3044, %v3056
        %v3059 = vmul.f32 %v3057, %v3057
        %v3060 = vmul.f32 %v3058, %v3058
        %v3061 = vsel %vm1755, %v3059, 0.0
        %3062 = vadd.xlane.f32.xlu0 %v3061
        %v3063 = vpop.xlane.xlu0 %3062
        %v3064 = vsel %vm1762, %v3060, 0.0
        %3065 = vadd.xlane.f32.xlu0 %v3064
        %v3066 = vpop.xlane.xlu0 %3065
        %v3067 = vmul.f32 %v3063, %v1951
        %v3068 = vmul.f32 %v3066, %v1951
        %v3069 = vadd.f32 %v3067, 1e-05
        %v3070 = vadd.f32 %v3068, 1e-05
        %v3071 = vrsqrt.pop %v3069
        %v3072 = vmul.f32 %v3071, %v3069
        %v3073 = vmul.f32 %v3072, %v3071
        %v3074 = vmul.f32 0.5, %v3073
        %v3075 = vsub.f32 1.5, %v3074
        %v3076 = vmul.f32 %v3071, %v3075
        %vm3077 = vweird.f32 %v3069
        %vm3078 = vweird.f32 %v3071
        %vm3079 = vmor %vm3077, %vm3078
        %v3080 = vsel %vm3079, %v3071, %v3076
        %v3081 = vrsqrt.pop %v3070
        %v3082 = vmul.f32 %v3081, %v3070
        %v3083 = vmul.f32 %v3082, %v3081
        %v3084 = vmul.f32 0.5, %v3083
        %v3085 = vsub.f32 1.5, %v3084
        %v3086 = vmul.f32 %v3081, %v3085
        %vm3087 = vweird.f32 %v3070
        %vm3088 = vweird.f32 %v3081
        %vm3089 = vmor %vm3087, %vm3088
        %v3090 = vsel %vm3089, %v3081, %v3086
        %v3091 = vmul.f32 %v3057, %v3080
        %v3092 = vmul.f32 %v3058, %v3090
        %v3094 = vperm.slane %v3046, 0
        %v3096 = vmul.f32 %v3091, %v3094
        %v3097 = vmul.f32 %v3092, %v3094
        %v3099 = vperm.slane %v3048, 0
        %v3101 = vadd.f32 %v3096, %v3099
        %v3102 = vadd.f32 %v3097, %v3099
        %3103 = vst.msk [vmem:[%s916] sm:$0xff] %vm1755, %v3101
        %3104 = vst.msk [vmem:[%s916 + $0x8] sm:$0x7f] %vm1762, %v3102
        %p3105 = scmp.lt.s32.totalorder %s42, 1
        %s3106 = scalar_select %p3105, %s42, 1
        %s3107 = smul.addr %s3106, 2
        %s3108 = smul.addr %s3107, 8
        %s3109 = scalar_lea.vmem %s26, %s3108
        // Predicated region
        $region157: #{cnhubert_forward.1} parent=123 // pred_check
          %p3110 = pneg %p611
        $region158: #{cnhubert_forward.1} parent=123 // pred_check_branch
          %3112 = sbr.rel (%p3110) target = $region160
        $region159: #{cnhubert_forward.1} parent=123 // pred_region
          _
        $region160: #{cnhubert_forward.1} parent=123 // pred_fallthru
          _
      $region124: #{cnhubert_forward.1} parent=5 // pred_fallthru
        _
      %p3113 = scmp.le.s32.totalorder 2, %s37
      // Predicated region
      $region161: #{cnhubert_forward.1} parent=5 // pred_check
        %p3114 = pneg %p3113
      $region162: #{cnhubert_forward.1} parent=5 // pred_check_branch
        %3116 = sbr.rel (%p3114) target = $region164
      $region163: #{cnhubert_forward.1} parent=5 // pred_region
        %s3117 = ssub.s32 %s37, 2
        // Predicated region
        $region165: #{cnhubert_forward.1} parent=163 // pred_check
          %p3118 = pneg %p617
        $region166: #{cnhubert_forward.1} parent=163 // pred_check_branch
          %3120 = sbr.rel (%p3118) target = $region168
        $region167: #{cnhubert_forward.1} parent=163 // pred_region
          %p3121 = scmp.lt.s32.totalorder %s43, 1
          %s3122 = scalar_select %p3121, %s43, 1
          %s3123 = smul.addr %s3122, 2
          %s3124 = smul.addr %s3123, 8
          %s3125 = scalar_lea.vmem %s26, %s3124
        $region168: #{cnhubert_forward.1} parent=163 // pred_fallthru
          _
      $region164: #{cnhubert_forward.1} parent=5 // pred_fallthru
        _
    $region6: #{cnhubert_forward.1} parent=1 // loop_footer
      %s41 = sadd.s32 1, %s37
    $region7: #{cnhubert_forward.1} parent=1 // loop_footer_branch
      %36 = sbr.rel target = $region3
    $region8: #{cnhubert_forward.1} parent=1 // loop_exit
      _
    %3126 = vsyncpa [#allocation6], 1
    %s3127 = scalar_lea.sflag [#allocation6], 1
    %3128 = vsyncpa %s3127, 1
    %3129 = vsyncpa [#allocation8], 1
    %3130 = vsyncpa [#allocation11], 1
    %3131 = vsyncpa [#allocation14], 1
    %3132 = vsyncpa [#allocation17], 1

</llo_original>
